<compile_context>
chip_gen: v5e
topology: v5e:2x2
jax: 0.10.0
libtpu: 0.0.40
codegen_flags: <defaults>
</compile_context>

<pallas_src>
import math

import jax
import jax.numpy as jnp
from jax.experimental import pallas as pl
from jax.experimental.pallas import tpu as pltpu

W_DIM = 32      # latent (w) dimensionality
CH = 32         # feature channels
NUM_WS = 5      # number of per-layer w vectors consumed by this synthesis net
IMG_CH = 3
K = 3           # conv kernel size
H0 = W0 = 4     # base resolution
H1 = W1 = 8     # output resolution
SQRT2 = math.sqrt(2.0)   # Python float -> jaxpr literal (no captured const)


# --------------------------------------------------------------------------
# Fused synthesis kernel (one batch element per grid step):
#   conv0 -> up2x -> toRGB0 -> conv1 -> conv2 -> toRGB1 -> skip add
# --------------------------------------------------------------------------
def _synthesis_kernel(w_ref, const_ref, aw_ref, ab_ref,
                      cwt_ref, cb_ref, wsq_ref, rwt_ref, rb_ref,
                      o_ref, xp4_ref, xp8_ref):
    """Whole synthesis forward for one sample; intermediates stay in VMEM.

    Modulated conv uses the fused_modconv=False formulation (equivalent math):
      y = conv2d(x * s, w) * d + b,   d = rsqrt((s*s) @ sum_taps(w^2) + 1e-8)
    followed by leaky_relu(0.2) * sqrt(2).  toRGB: 1x1, no demod, no act.
    """
    # TODO(synk): per-layer noise injection of the reference synthesis is omitted.
    f32 = jnp.float32

    # Zero padded scratches ONCE: interiors are fully overwritten every conv,
    # halos never become nonzero.
    xp4_ref[...] = jnp.zeros_like(xp4_ref)
    xp8_ref[...] = jnp.zeros_like(xp8_ref)

    # ---- all 5 per-layer styles with ONE matmul (block-diagonal affine) ----
    w_b = w_ref[0]                                                  # (1, 5*W_DIM)
    styles = jnp.dot(w_b, aw_ref[...], preferred_element_type=f32) + ab_ref[...]

    def style(l):
        return styles[:, l * CH:(l + 1) * CH]                       # (1, CH)

    def mod_conv3(x, H, W, xp_ref, st, layer):
        # x: (H, W, CH) layer input; st: (1, CH) style.
        xp_ref[1:1 + H, 1:1 + W, :] = x * st                        # modulate + pad
        # 9 per-tap (H*W, CH) x (CH, CH) matmuls accumulated in f32 (no 288-lane
        # im2col concat, small live set).
        acc = jnp.zeros((H * W, CH), f32)
        for t in range(K * K):
            kh, kw = t // K, t % K
            tap = xp_ref[kh:kh + H, kw:kw + W, :].reshape(H * W, CH)
            acc = acc + jnp.dot(tap, cwt_ref[layer, t],
                                preferred_element_type=f32)
        # demodulation with precomputed wsq = sum_taps(w^2): (1,CH)@(CH,CH)
        d = jax.lax.rsqrt(jnp.dot(st * st, wsq_ref[layer],
                                  preferred_element_type=f32) + 1e-8)
        y = acc * d + cb_ref[layer]                                 # (H*W, CH)
        y = jnp.maximum(y, 0.2 * y) * SQRT2                         # lrelu(0.2)*sqrt(2)
        return y.reshape(H, W, CH)

    def to_rgb(x_flat, st, layer):
        # 1x1 modulated conv, no demod, no act; lane-dense (3, n) result.
        xm = x_flat * st                                            # (n, CH)
        return jnp.dot(rwt_ref[layer], xm.T,
                       preferred_element_type=f32) + rb_ref[layer]  # (3, n)

    # ---- 4x4 block ---------------------------------------------------------
    x0 = mod_conv3(const_ref[...], H0, W0, xp4_ref, style(0), 0)    # (4,4,CH)

    # ---- nearest 2x upsample via static slice concatenation (no MXU) -------
    # TODO(synk): StyleGAN2 uses an FIR (upfirdn2d) resample filter; nearest here.
    cols = [x0[:, j // 2:j // 2 + 1, :] for j in range(W1)]
    xw = jnp.concatenate(cols, axis=1)                              # (4, 8, CH)
    rows = [xw[i // 2:i // 2 + 1, :, :] for i in range(H1)]
    x8 = jnp.concatenate(rows, axis=0)                              # (8, 8, CH)

    # toRGB commutes with nearest upsample: upsample(toRGB(x)) == toRGB(upsample(x))
    rgb = to_rgb(x8.reshape(H1 * W1, CH), style(1), 0)              # (3, 64)

    # ---- 8x8 block ----------------------------------------------------------
    x = mod_conv3(x8, H1, W1, xp8_ref, style(2), 1)
    x = mod_conv3(x, H1, W1, xp8_ref, style(3), 2)
    rgb = rgb + to_rgb(x.reshape(H1 * W1, CH), style(4), 1)

    # single lane-dense output store (last dim = H1*W1 = 64)
    o_ref[0] = rgb                                                  # (3, H1*W1)


# --------------------------------------------------------------------------
# Wrapper
# --------------------------------------------------------------------------
def rewrite_model_forward(params, w_latents):
    """== RewriteModel.forward: self.netG.synthesis(w_latents, force_fp32=True)."""
    w = w_latents.astype(jnp.float32)                    # force_fp32=True
    B = w.shape[0]
    w_flat = w.reshape(B, 1, NUM_WS * W_DIM)             # lanes: [w0|w1|w2|w3|w4]

    out = pl.pallas_call(
        _synthesis_kernel,
        out_shape=jax.ShapeDtypeStruct((B, IMG_CH, H1 * W1), jnp.float32),
        grid=(B,),
        in_specs=[
            pl.BlockSpec((1, 1, NUM_WS * W_DIM), lambda b: (b, 0, 0)),
            pl.BlockSpec((H0, W0, CH), lambda b: (0, 0, 0)),
            pl.BlockSpec((NUM_WS * W_DIM, NUM_WS * CH), lambda b: (0, 0)),
            pl.BlockSpec((1, NUM_WS * CH), lambda b: (0, 0)),
            pl.BlockSpec((3, K * K, CH, CH), lambda b: (0, 0, 0, 0)),
            pl.BlockSpec((3, 1, CH), lambda b: (0, 0, 0)),
            pl.BlockSpec((3, CH, CH), lambda b: (0, 0, 0)),
            pl.BlockSpec((2, IMG_CH, CH), lambda b: (0, 0, 0)),
            pl.BlockSpec((2, IMG_CH, 1), lambda b: (0, 0, 0)),
        ],
        out_specs=pl.BlockSpec((1, IMG_CH, H1 * W1), lambda b: (b, 0, 0)),
        scratch_shapes=[
            pltpu.VMEM((H0 + 2, W0 + 2, CH), jnp.float32),   # padded 4x4 act
            pltpu.VMEM((H1 + 2, W1 + 2, CH), jnp.float32),   # padded 8x8 act
        ],
        compiler_params=pltpu.CompilerParams(
            dimension_semantics=("parallel",)),
    )(w_flat, params["const"], params["aff_w_blk"], params["aff_b"],
      params["conv_w_taps"], params["conv_b"], params["conv_wsq"],
      params["rgb_w_t"], params["rgb_b"])

    # (B, 3, H*W) -> NCHW (B, 3, H, W) like the PyTorch generator
    return out.reshape(B, IMG_CH, H1, W1)


# --------------------------------------------------------------------------
# Parameter init (deterministic, synthetic — no checkpoint load).
# All weight-derived constants are precomputed here (done once, outside kernel).
# --------------------------------------------------------------------------
def init_params(key):
    # TODO(synk): network.define_G / checkpoint weights are unavailable here;
    # a compact synthetic synthesis net with the same layer structure is used.
    ks = jax.random.split(key, 11)

    def aff(k, cin):
        return (jax.random.normal(k, (W_DIM, cin), jnp.float32) / math.sqrt(W_DIM),
                jnp.ones((cin,), jnp.float32))

    def conv_weight(k, cin, cout, ksz):
        fan = cin * ksz * ksz
        return jax.random.normal(k, (ksz, ksz, cin, cout), jnp.float32) / math.sqrt(fan)

    # layer order must match w index order: conv0, torgb0, conv1, conv2, torgb1
    aff_keys = [ks[1], ks[3], ks[5], ks[7], ks[9]]
    aff_ws, aff_bs = zip(*[aff(k, CH) for k in aff_keys])

    # block-diagonal affine weight & concatenated bias (one matmul for 5 styles)
    blk = jnp.zeros((NUM_WS, W_DIM, NUM_WS, CH), jnp.float32)
    for l, a in enumerate(aff_ws):
        blk = blk.at[l, :, l, :].set(a)
    aff_w_blk = blk.reshape(NUM_WS * W_DIM, NUM_WS * CH)
    aff_b = jnp.concatenate(aff_bs).reshape(1, NUM_WS * CH)

    conv_keys = [ks[2], ks[6], ks[8]]                   # conv0 / conv1 / conv2
    cwt, cb, wsq = [], [], []
    for k in conv_keys:
        w = conv_weight(k, CH, CH, K)                   # (K,K,CH_in,CH_out)
        cwt.append(w.reshape(K * K, CH, CH))            # per-tap slices
        cb.append(jnp.zeros((1, CH), jnp.float32))
        wsq.append(jnp.sum(w * w, axis=(0, 1)))         # demod reduction (CH,CH)

    rgb_keys = [ks[4], ks[10]]                          # torgb0 / torgb1
    rwt, rb = [], []
    for k in rgb_keys:
        w = conv_weight(k, CH, IMG_CH, 1).reshape(CH, IMG_CH)
        rwt.append(w.T)                                 # transposed: (IMG_CH, CH)
        rb.append(jnp.zeros((IMG_CH, 1), jnp.float32))  # column bias

    return dict(
        const=jax.random.normal(ks[0], (H0, W0, CH), jnp.float32),
        aff_w_blk=aff_w_blk, aff_b=aff_b,
        conv_w_taps=jnp.stack(cwt), conv_b=jnp.stack(cb), conv_wsq=jnp.stack(wsq),
        rgb_w_t=jnp.stack(rwt), rgb_b=jnp.stack(rb),
    )


if __name__ == "__main__":
    params = init_params(jax.random.PRNGKey(42))

    B = 2
    w_latents = jax.random.normal(jax.random.PRNGKey(0), (B, NUM_WS, W_DIM),
                                  jnp.float32)

    img = jax.jit(rewrite_model_forward)(params, w_latents)
    img = jax.block_until_ready(img)

    assert img.shape == (B, IMG_CH, H1, W1), img.shape
    assert img.dtype == jnp.float32
    assert bool(jnp.all(jnp.isfinite(img)))
    print("KERNEL_OK")
</pallas_src>

<mosaic_0001>
module attributes {stable_mosaic.version = 11 : i64} {
  func.func @_synthesis_kernel(%arg0: i32, %arg1: memref<1x1x160xf32, #tpu.memory_space<vmem>>, %arg2: memref<4x4x32xf32, #tpu.memory_space<vmem>>, %arg3: memref<160x160xf32, #tpu.memory_space<vmem>>, %arg4: memref<1x160xf32, #tpu.memory_space<vmem>>, %arg5: memref<3x9x32x32xf32, #tpu.memory_space<vmem>>, %arg6: memref<3x1x32xf32, #tpu.memory_space<vmem>>, %arg7: memref<3x32x32xf32, #tpu.memory_space<vmem>>, %arg8: memref<2x3x32xf32, #tpu.memory_space<vmem>>, %arg9: memref<2x3x1xf32, #tpu.memory_space<vmem>>, %arg10: memref<1x3x64xf32, #tpu.memory_space<vmem>>, %arg11: memref<6x6x32xf32, #tpu.memory_space<vmem>>, %arg12: memref<10x10x32xf32, #tpu.memory_space<vmem>>) attributes {dimension_semantics = [#tpu.dimension_semantics<parallel>], iteration_bounds = array<i64: 2>, scalar_prefetch = 0 : i64, scratch_operands = 2 : i64, tpu.core_type = #tpu.core_type<tc>, window_params = [{transform_indices = @transform_0, window_bounds = array<i64: 1, 1, 160>}, {pipeline_mode = #tpu.pipeline_mode<synchronous>, transform_indices = @transform_1, window_bounds = array<i64: 4, 4, 32>}, {pipeline_mode = #tpu.pipeline_mode<synchronous>, transform_indices = @transform_2, window_bounds = array<i64: 160, 160>}, {pipeline_mode = #tpu.pipeline_mode<synchronous>, transform_indices = @transform_3, window_bounds = array<i64: 1, 160>}, {pipeline_mode = #tpu.pipeline_mode<synchronous>, transform_indices = @transform_4, window_bounds = array<i64: 3, 9, 32, 32>}, {pipeline_mode = #tpu.pipeline_mode<synchronous>, transform_indices = @transform_5, window_bounds = array<i64: 3, 1, 32>}, {pipeline_mode = #tpu.pipeline_mode<synchronous>, transform_indices = @transform_6, window_bounds = array<i64: 3, 32, 32>}, {pipeline_mode = #tpu.pipeline_mode<synchronous>, transform_indices = @transform_7, window_bounds = array<i64: 2, 3, 32>}, {pipeline_mode = #tpu.pipeline_mode<synchronous>, transform_indices = @transform_8, window_bounds = array<i64: 2, 3, 1>}, {transform_indices = @transform_9, window_bounds = array<i64: 1, 3, 64>}]} {
    %cst = arith.constant 0.000000e+00 : f32
    %0 = vector.broadcast %cst : f32 to vector<6x6x32xf32>
    %c0 = arith.constant 0 : index
    %c0_0 = arith.constant 0 : index
    %c0_1 = arith.constant 0 : index
    %1 = vector.load %arg11[%c0, %c0_0, %c0_1] : memref<6x6x32xf32, #tpu.memory_space<vmem>>, vector<6x6x32xf32>
    tpu.vector_store %arg11[%c0, %c0_0, %c0_1], %0 {strides = array<i32>} : memref<6x6x32xf32, #tpu.memory_space<vmem>>, vector<6x6x32xf32>,
    %cst_2 = arith.constant 0.000000e+00 : f32
    %2 = vector.broadcast %cst_2 : f32 to vector<10x10x32xf32>
    %c0_3 = arith.constant 0 : index
    %c0_4 = arith.constant 0 : index
    %c0_5 = arith.constant 0 : index
    %3 = vector.load %arg12[%c0_3, %c0_4, %c0_5] : memref<10x10x32xf32, #tpu.memory_space<vmem>>, vector<10x10x32xf32>
    tpu.vector_store %arg12[%c0_3, %c0_4, %c0_5], %2 {strides = array<i32>} : memref<10x10x32xf32, #tpu.memory_space<vmem>>, vector<10x10x32xf32>,
    %c0_6 = arith.constant 0 : index
    %c0_7 = arith.constant 0 : index
    %c0_8 = arith.constant 0 : index
    %4 = vector.load %arg1[%c0_6, %c0_7, %c0_8] : memref<1x1x160xf32, #tpu.memory_space<vmem>>, vector<1x1x160xf32>
    %5 = vector.shape_cast %4 : vector<1x1x160xf32> to vector<1x160xf32>
    %c0_9 = arith.constant 0 : index
    %c0_10 = arith.constant 0 : index
    %6 = vector.load %arg3[%c0_9, %c0_10] : memref<160x160xf32, #tpu.memory_space<vmem>>, vector<160x160xf32>
    %cst_11 = arith.constant dense<0.000000e+00> : vector<1x160xf32>
    %7 = tpu.matmul %5, %6, %cst_11 {dimension_numbers = #tpu.dot_dimension_numbers<[1], [0], [0], [1], [0, 0, 1, 1], [], []>} : vector<1x160xf32>, vector<160x160xf32>, vector<1x160xf32> -> vector<1x160xf32>
    %c0_12 = arith.constant 0 : index
    %c0_13 = arith.constant 0 : index
    %8 = vector.load %arg4[%c0_12, %c0_13] : memref<1x160xf32, #tpu.memory_space<vmem>>, vector<1x160xf32>
    %9 = arith.addf %7, %8 : vector<1x160xf32>
    %c0_14 = arith.constant 0 : index
    %c0_15 = arith.constant 0 : index
    %c0_16 = arith.constant 0 : index
    %10 = vector.load %arg2[%c0_14, %c0_15, %c0_16] : memref<4x4x32xf32, #tpu.memory_space<vmem>>, vector<4x4x32xf32>
    %11 = vector.extract_strided_slice %9 {offsets = [0, 0], sizes = [1, 32], strides = [1, 1]} : vector<1x160xf32> to vector<1x32xf32>
    %12 = vector.shape_cast %11 : vector<1x32xf32> to vector<1x1x32xf32>
    %13 = vector.broadcast %12 : vector<1x1x32xf32> to vector<4x4x32xf32>
    %14 = arith.mulf %10, %13 : vector<4x4x32xf32>
    %c1 = arith.constant 1 : index
    %c1_17 = arith.constant 1 : index
    %c0_18 = arith.constant 0 : index
    %15 = vector.load %arg11[%c1, %c1_17, %c0_18] : memref<6x6x32xf32, #tpu.memory_space<vmem>>, vector<4x4x32xf32>
    tpu.vector_store %arg11[%c1, %c1_17, %c0_18], %14 {strides = array<i32>} : memref<6x6x32xf32, #tpu.memory_space<vmem>>, vector<4x4x32xf32>,
    %cst_19 = arith.constant 0.000000e+00 : f32
    %16 = vector.broadcast %cst_19 : f32 to vector<16x32xf32>
    %c0_20 = arith.constant 0 : index
    %c0_21 = arith.constant 0 : index
    %c0_22 = arith.constant 0 : index
    %17 = vector.load %arg11[%c0_20, %c0_21, %c0_22] : memref<6x6x32xf32, #tpu.memory_space<vmem>>, vector<4x4x32xf32>
    %18 = vector.shape_cast %17 : vector<4x4x32xf32> to vector<16x32xf32>
    %c0_23 = arith.constant 0 : index
    %c0_24 = arith.constant 0 : index
    %c0_25 = arith.constant 0 : index
    %c0_26 = arith.constant 0 : index
    %19 = vector.load %arg5[%c0_23, %c0_24, %c0_25, %c0_26] : memref<3x9x32x32xf32, #tpu.memory_space<vmem>>, vector<1x1x32x32xf32>
    %20 = vector.shape_cast %19 : vector<1x1x32x32xf32> to vector<32x32xf32>
    %cst_27 = arith.constant dense<0.000000e+00> : vector<16x32xf32>
    %21 = tpu.matmul %18, %20, %cst_27 {dimension_numbers = #tpu.dot_dimension_numbers<[1], [0], [0], [1], [0, 0, 1, 1], [], []>} : vector<16x32xf32>, vector<32x32xf32>, vector<16x32xf32> -> vector<16x32xf32>
    %22 = arith.addf %16, %21 : vector<16x32xf32>
    %c0_28 = arith.constant 0 : index
    %c1_29 = arith.constant 1 : index
    %c0_30 = arith.constant 0 : index
    %23 = vector.load %arg11[%c0_28, %c1_29, %c0_30] : memref<6x6x32xf32, #tpu.memory_space<vmem>>, vector<4x4x32xf32>
    %24 = vector.shape_cast %23 : vector<4x4x32xf32> to vector<16x32xf32>
    %c0_31 = arith.constant 0 : index
    %c1_32 = arith.constant 1 : index
    %c0_33 = arith.constant 0 : index
    %c0_34 = arith.constant 0 : index
    %25 = vector.load %arg5[%c0_31, %c1_32, %c0_33, %c0_34] : memref<3x9x32x32xf32, #tpu.memory_space<vmem>>, vector<1x1x32x32xf32>
    %26 = vector.shape_cast %25 : vector<1x1x32x32xf32> to vector<32x32xf32>
    %cst_35 = arith.constant dense<0.000000e+00> : vector<16x32xf32>
    %27 = tpu.matmul %24, %26, %cst_35 {dimension_numbers = #tpu.dot_dimension_numbers<[1], [0], [0], [1], [0, 0, 1, 1], [], []>} : vector<16x32xf32>, vector<32x32xf32>, vector<16x32xf32> -> vector<16x32xf32>
    %28 = arith.addf %22, %27 : vector<16x32xf32>
    %c0_36 = arith.constant 0 : index
    %c2 = arith.constant 2 : index
    %c0_37 = arith.constant 0 : index
    %29 = vector.load %arg11[%c0_36, %c2, %c0_37] : memref<6x6x32xf32, #tpu.memory_space<vmem>>, vector<4x4x32xf32>
    %30 = vector.shape_cast %29 : vector<4x4x32xf32> to vector<16x32xf32>
    %c0_38 = arith.constant 0 : index
    %c2_39 = arith.constant 2 : index
    %c0_40 = arith.constant 0 : index
    %c0_41 = arith.constant 0 : index
    %31 = vector.load %arg5[%c0_38, %c2_39, %c0_40, %c0_41] : memref<3x9x32x32xf32, #tpu.memory_space<vmem>>, vector<1x1x32x32xf32>
    %32 = vector.shape_cast %31 : vector<1x1x32x32xf32> to vector<32x32xf32>
    %cst_42 = arith.constant dense<0.000000e+00> : vector<16x32xf32>
    %33 = tpu.matmul %30, %32, %cst_42 {dimension_numbers = #tpu.dot_dimension_numbers<[1], [0], [0], [1], [0, 0, 1, 1], [], []>} : vector<16x32xf32>, vector<32x32xf32>, vector<16x32xf32> -> vector<16x32xf32>
    %34 = arith.addf %28, %33 : vector<16x32xf32>
    %c1_43 = arith.constant 1 : index
    %c0_44 = arith.constant 0 : index
    %c0_45 = arith.constant 0 : index
    %35 = vector.load %arg11[%c1_43, %c0_44, %c0_45] : memref<6x6x32xf32, #tpu.memory_space<vmem>>, vector<4x4x32xf32>
    %36 = vector.shape_cast %35 : vector<4x4x32xf32> to vector<16x32xf32>
    %c0_46 = arith.constant 0 : index
    %c3 = arith.constant 3 : index
    %c0_47 = arith.constant 0 : index
    %c0_48 = arith.constant 0 : index
    %37 = vector.load %arg5[%c0_46, %c3, %c0_47, %c0_48] : memref<3x9x32x32xf32, #tpu.memory_space<vmem>>, vector<1x1x32x32xf32>
    %38 = vector.shape_cast %37 : vector<1x1x32x32xf32> to vector<32x32xf32>
    %cst_49 = arith.constant dense<0.000000e+00> : vector<16x32xf32>
    %39 = tpu.matmul %36, %38, %cst_49 {dimension_numbers = #tpu.dot_dimension_numbers<[1], [0], [0], [1], [0, 0, 1, 1], [], []>} : vector<16x32xf32>, vector<32x32xf32>, vector<16x32xf32> -> vector<16x32xf32>
    %40 = arith.addf %34, %39 : vector<16x32xf32>
    %c1_50 = arith.constant 1 : index
    %c1_51 = arith.constant 1 : index
    %c0_52 = arith.constant 0 : index
    %41 = vector.load %arg11[%c1_50, %c1_51, %c0_52] : memref<6x6x32xf32, #tpu.memory_space<vmem>>, vector<4x4x32xf32>
    %42 = vector.shape_cast %41 : vector<4x4x32xf32> to vector<16x32xf32>
    %c0_53 = arith.constant 0 : index
    %c4 = arith.constant 4 : index
    %c0_54 = arith.constant 0 : index
    %c0_55 = arith.constant 0 : index
    %43 = vector.load %arg5[%c0_53, %c4, %c0_54, %c0_55] : memref<3x9x32x32xf32, #tpu.memory_space<vmem>>, vector<1x1x32x32xf32>
    %44 = vector.shape_cast %43 : vector<1x1x32x32xf32> to vector<32x32xf32>
    %cst_56 = arith.constant dense<0.000000e+00> : vector<16x32xf32>
    %45 = tpu.matmul %42, %44, %cst_56 {dimension_numbers = #tpu.dot_dimension_numbers<[1], [0], [0], [1], [0, 0, 1, 1], [], []>} : vector<16x32xf32>, vector<32x32xf32>, vector<16x32xf32> -> vector<16x32xf32>
    %46 = arith.addf %40, %45 : vector<16x32xf32>
    %c1_57 = arith.constant 1 : index
    %c2_58 = arith.constant 2 : index
    %c0_59 = arith.constant 0 : index
    %47 = vector.load %arg11[%c1_57, %c2_58, %c0_59] : memref<6x6x32xf32, #tpu.memory_space<vmem>>, vector<4x4x32xf32>
    %48 = vector.shape_cast %47 : vector<4x4x32xf32> to vector<16x32xf32>
    %c0_60 = arith.constant 0 : index
    %c5 = arith.constant 5 : index
    %c0_61 = arith.constant 0 : index
    %c0_62 = arith.constant 0 : index
    %49 = vector.load %arg5[%c0_60, %c5, %c0_61, %c0_62] : memref<3x9x32x32xf32, #tpu.memory_space<vmem>>, vector<1x1x32x32xf32>
    %50 = vector.shape_cast %49 : vector<1x1x32x32xf32> to vector<32x32xf32>
    %cst_63 = arith.constant dense<0.000000e+00> : vector<16x32xf32>
    %51 = tpu.matmul %48, %50, %cst_63 {dimension_numbers = #tpu.dot_dimension_numbers<[1], [0], [0], [1], [0, 0, 1, 1], [], []>} : vector<16x32xf32>, vector<32x32xf32>, vector<16x32xf32> -> vector<16x32xf32>
    %52 = arith.addf %46, %51 : vector<16x32xf32>
    %c2_64 = arith.constant 2 : index
    %c0_65 = arith.constant 0 : index
    %c0_66 = arith.constant 0 : index
    %53 = vector.load %arg11[%c2_64, %c0_65, %c0_66] : memref<6x6x32xf32, #tpu.memory_space<vmem>>, vector<4x4x32xf32>
    %54 = vector.shape_cast %53 : vector<4x4x32xf32> to vector<16x32xf32>
    %c0_67 = arith.constant 0 : index
    %c6 = arith.constant 6 : index
    %c0_68 = arith.constant 0 : index
    %c0_69 = arith.constant 0 : index
    %55 = vector.load %arg5[%c0_67, %c6, %c0_68, %c0_69] : memref<3x9x32x32xf32, #tpu.memory_space<vmem>>, vector<1x1x32x32xf32>
    %56 = vector.shape_cast %55 : vector<1x1x32x32xf32> to vector<32x32xf32>
    %cst_70 = arith.constant dense<0.000000e+00> : vector<16x32xf32>
    %57 = tpu.matmul %54, %56, %cst_70 {dimension_numbers = #tpu.dot_dimension_numbers<[1], [0], [0], [1], [0, 0, 1, 1], [], []>} : vector<16x32xf32>, vector<32x32xf32>, vector<16x32xf32> -> vector<16x32xf32>
    %58 = arith.addf %52, %57 : vector<16x32xf32>
    %c2_71 = arith.constant 2 : index
    %c1_72 = arith.constant 1 : index
    %c0_73 = arith.constant 0 : index
    %59 = vector.load %arg11[%c2_71, %c1_72, %c0_73] : memref<6x6x32xf32, #tpu.memory_space<vmem>>, vector<4x4x32xf32>
    %60 = vector.shape_cast %59 : vector<4x4x32xf32> to vector<16x32xf32>
    %c0_74 = arith.constant 0 : index
    %c7 = arith.constant 7 : index
    %c0_75 = arith.constant 0 : index
    %c0_76 = arith.constant 0 : index
    %61 = vector.load %arg5[%c0_74, %c7, %c0_75, %c0_76] : memref<3x9x32x32xf32, #tpu.memory_space<vmem>>, vector<1x1x32x32xf32>
    %62 = vector.shape_cast %61 : vector<1x1x32x32xf32> to vector<32x32xf32>
    %cst_77 = arith.constant dense<0.000000e+00> : vector<16x32xf32>
    %63 = tpu.matmul %60, %62, %cst_77 {dimension_numbers = #tpu.dot_dimension_numbers<[1], [0], [0], [1], [0, 0, 1, 1], [], []>} : vector<16x32xf32>, vector<32x32xf32>, vector<16x32xf32> -> vector<16x32xf32>
    %64 = arith.addf %58, %63 : vector<16x32xf32>
    %c2_78 = arith.constant 2 : index
    %c2_79 = arith.constant 2 : index
    %c0_80 = arith.constant 0 : index
    %65 = vector.load %arg11[%c2_78, %c2_79, %c0_80] : memref<6x6x32xf32, #tpu.memory_space<vmem>>, vector<4x4x32xf32>
    %66 = vector.shape_cast %65 : vector<4x4x32xf32> to vector<16x32xf32>
    %c0_81 = arith.constant 0 : index
    %c8 = arith.constant 8 : index
    %c0_82 = arith.constant 0 : index
    %c0_83 = arith.constant 0 : index
    %67 = vector.load %arg5[%c0_81, %c8, %c0_82, %c0_83] : memref<3x9x32x32xf32, #tpu.memory_space<vmem>>, vector<1x1x32x32xf32>
    %68 = vector.shape_cast %67 : vector<1x1x32x32xf32> to vector<32x32xf32>
    %cst_84 = arith.constant dense<0.000000e+00> : vector<16x32xf32>
    %69 = tpu.matmul %66, %68, %cst_84 {dimension_numbers = #tpu.dot_dimension_numbers<[1], [0], [0], [1], [0, 0, 1, 1], [], []>} : vector<16x32xf32>, vector<32x32xf32>, vector<16x32xf32> -> vector<16x32xf32>
    %70 = arith.addf %64, %69 : vector<16x32xf32>
    %71 = arith.mulf %11, %11 : vector<1x32xf32>
    %c0_85 = arith.constant 0 : index
    %c0_86 = arith.constant 0 : index
    %c0_87 = arith.constant 0 : index
    %72 = vector.load %arg7[%c0_85, %c0_86, %c0_87] : memref<3x32x32xf32, #tpu.memory_space<vmem>>, vector<1x32x32xf32>
    %73 = vector.shape_cast %72 : vector<1x32x32xf32> to vector<32x32xf32>
    %cst_88 = arith.constant dense<0.000000e+00> : vector<1x32xf32>
    %74 = tpu.matmul %71, %73, %cst_88 {dimension_numbers = #tpu.dot_dimension_numbers<[1], [0], [0], [1], [0, 0, 1, 1], [], []>} : vector<1x32xf32>, vector<32x32xf32>, vector<1x32xf32> -> vector<1x32xf32>
    %cst_89 = arith.constant 9.99999993E-9 : f32
    %75 = vector.broadcast %cst_89 : f32 to vector<1x32xf32>
    %76 = arith.addf %74, %75 : vector<1x32xf32>
    %77 = math.rsqrt %76 : vector<1x32xf32>
    %78 = vector.broadcast %77 : vector<1x32xf32> to vector<16x32xf32>
    %79 = arith.mulf %70, %78 : vector<16x32xf32>
    %c0_90 = arith.constant 0 : index
    %c0_91 = arith.constant 0 : index
    %c0_92 = arith.constant 0 : index
    %80 = vector.load %arg6[%c0_90, %c0_91, %c0_92] : memref<3x1x32xf32, #tpu.memory_space<vmem>>, vector<1x1x32xf32>
    %81 = vector.shape_cast %80 : vector<1x1x32xf32> to vector<1x32xf32>
    %82 = vector.broadcast %81 : vector<1x32xf32> to vector<16x32xf32>
    %83 = arith.addf %79, %82 : vector<16x32xf32>
    %cst_93 = arith.constant 2.000000e-01 : f32
    %84 = vector.broadcast %cst_93 : f32 to vector<16x32xf32>
    %85 = arith.mulf %84, %83 : vector<16x32xf32>
    %86 = arith.maximumf %83, %85 : vector<16x32xf32>
    %cst_94 = arith.constant 1.41421354 : f32
    %87 = vector.broadcast %cst_94 : f32 to vector<16x32xf32>
    %88 = arith.mulf %86, %87 : vector<16x32xf32>
    %89 = vector.shape_cast %88 : vector<16x32xf32> to vector<4x4x32xf32>
    %90 = vector.extract_strided_slice %89 {offsets = [0, 0, 0], sizes = [4, 1, 32], strides = [1, 1, 1]} : vector<4x4x32xf32> to vector<4x1x32xf32>
    %91 = vector.extract_strided_slice %89 {offsets = [0, 0, 0], sizes = [4, 1, 32], strides = [1, 1, 1]} : vector<4x4x32xf32> to vector<4x1x32xf32>
    %92 = vector.extract_strided_slice %89 {offsets = [0, 1, 0], sizes = [4, 1, 32], strides = [1, 1, 1]} : vector<4x4x32xf32> to vector<4x1x32xf32>
    %93 = vector.extract_strided_slice %89 {offsets = [0, 1, 0], sizes = [4, 1, 32], strides = [1, 1, 1]} : vector<4x4x32xf32> to vector<4x1x32xf32>
    %94 = vector.extract_strided_slice %89 {offsets = [0, 2, 0], sizes = [4, 1, 32], strides = [1, 1, 1]} : vector<4x4x32xf32> to vector<4x1x32xf32>
    %95 = vector.extract_strided_slice %89 {offsets = [0, 2, 0], sizes = [4, 1, 32], strides = [1, 1, 1]} : vector<4x4x32xf32> to vector<4x1x32xf32>
    %96 = vector.extract_strided_slice %89 {offsets = [0, 3, 0], sizes = [4, 1, 32], strides = [1, 1, 1]} : vector<4x4x32xf32> to vector<4x1x32xf32>
    %97 = vector.extract_strided_slice %89 {offsets = [0, 3, 0], sizes = [4, 1, 32], strides = [1, 1, 1]} : vector<4x4x32xf32> to vector<4x1x32xf32>
    %98 = tpu.concatenate %90, %91, %92, %93, %94, %95, %96, %97 in 1 : vector<4x1x32xf32>, vector<4x1x32xf32>, vector<4x1x32xf32>, vector<4x1x32xf32>, vector<4x1x32xf32>, vector<4x1x32xf32>, vector<4x1x32xf32>, vector<4x1x32xf32> -> vector<4x8x32xf32>
    %99 = vector.extract_strided_slice %98 {offsets = [0, 0, 0], sizes = [1, 8, 32], strides = [1, 1, 1]} : vector<4x8x32xf32> to vector<1x8x32xf32>
    %100 = vector.extract_strided_slice %98 {offsets = [0, 0, 0], sizes = [1, 8, 32], strides = [1, 1, 1]} : vector<4x8x32xf32> to vector<1x8x32xf32>
    %101 = vector.extract_strided_slice %98 {offsets = [1, 0, 0], sizes = [1, 8, 32], strides = [1, 1, 1]} : vector<4x8x32xf32> to vector<1x8x32xf32>
    %102 = vector.extract_strided_slice %98 {offsets = [1, 0, 0], sizes = [1, 8, 32], strides = [1, 1, 1]} : vector<4x8x32xf32> to vector<1x8x32xf32>
    %103 = vector.extract_strided_slice %98 {offsets = [2, 0, 0], sizes = [1, 8, 32], strides = [1, 1, 1]} : vector<4x8x32xf32> to vector<1x8x32xf32>
    %104 = vector.extract_strided_slice %98 {offsets = [2, 0, 0], sizes = [1, 8, 32], strides = [1, 1, 1]} : vector<4x8x32xf32> to vector<1x8x32xf32>
    %105 = vector.extract_strided_slice %98 {offsets = [3, 0, 0], sizes = [1, 8, 32], strides = [1, 1, 1]} : vector<4x8x32xf32> to vector<1x8x32xf32>
    %106 = vector.extract_strided_slice %98 {offsets = [3, 0, 0], sizes = [1, 8, 32], strides = [1, 1, 1]} : vector<4x8x32xf32> to vector<1x8x32xf32>
    %107 = tpu.concatenate %99, %100, %101, %102, %103, %104, %105, %106 in 0 : vector<1x8x32xf32>, vector<1x8x32xf32>, vector<1x8x32xf32>, vector<1x8x32xf32>, vector<1x8x32xf32>, vector<1x8x32xf32>, vector<1x8x32xf32>, vector<1x8x32xf32> -> vector<8x8x32xf32>
    %108 = vector.shape_cast %107 : vector<8x8x32xf32> to vector<64x32xf32>
    %109 = vector.extract_strided_slice %9 {offsets = [0, 32], sizes = [1, 32], strides = [1, 1]} : vector<1x160xf32> to vector<1x32xf32>
    %110 = vector.broadcast %109 : vector<1x32xf32> to vector<64x32xf32>
    %111 = arith.mulf %108, %110 : vector<64x32xf32>
    %c0_95 = arith.constant 0 : index
    %c0_96 = arith.constant 0 : index
    %c0_97 = arith.constant 0 : index
    %112 = vector.load %arg8[%c0_95, %c0_96, %c0_97] : memref<2x3x32xf32, #tpu.memory_space<vmem>>, vector<1x3x32xf32>
    %113 = vector.shape_cast %112 : vector<1x3x32xf32> to vector<3x32xf32>
    %114 = tpu.transpose %111, [1, 0] : vector<64x32xf32> -> vector<32x64xf32>
    %cst_98 = arith.constant dense<0.000000e+00> : vector<3x64xf32>
    %115 = tpu.matmul %113, %114, %cst_98 {dimension_numbers = #tpu.dot_dimension_numbers<[1], [0], [0], [1], [0, 0, 1, 1], [], []>} : vector<3x32xf32>, vector<32x64xf32>, vector<3x64xf32> -> vector<3x64xf32>
    %c0_99 = arith.constant 0 : index
    %c0_100 = arith.constant 0 : index
    %c0_101 = arith.constant 0 : index
    %116 = vector.load %arg9[%c0_99, %c0_100, %c0_101] : memref<2x3x1xf32, #tpu.memory_space<vmem>>, vector<1x3x1xf32>
    %117 = vector.shape_cast %116 : vector<1x3x1xf32> to vector<3x1xf32>
    %118 = vector.broadcast %117 : vector<3x1xf32> to vector<3x64xf32>
    %119 = arith.addf %115, %118 : vector<3x64xf32>
    %120 = vector.extract_strided_slice %9 {offsets = [0, 64], sizes = [1, 32], strides = [1, 1]} : vector<1x160xf32> to vector<1x32xf32>
    %121 = vector.shape_cast %120 : vector<1x32xf32> to vector<1x1x32xf32>
    %122 = vector.broadcast %121 : vector<1x1x32xf32> to vector<8x8x32xf32>
    %123 = arith.mulf %107, %122 : vector<8x8x32xf32>
    %c1_102 = arith.constant 1 : index
    %c1_103 = arith.constant 1 : index
    %c0_104 = arith.constant 0 : index
    %124 = vector.load %arg12[%c1_102, %c1_103, %c0_104] : memref<10x10x32xf32, #tpu.memory_space<vmem>>, vector<8x8x32xf32>
    tpu.vector_store %arg12[%c1_102, %c1_103, %c0_104], %123 {strides = array<i32>} : memref<10x10x32xf32, #tpu.memory_space<vmem>>, vector<8x8x32xf32>,
    %cst_105 = arith.constant 0.000000e+00 : f32
    %125 = vector.broadcast %cst_105 : f32 to vector<64x32xf32>
    %c0_106 = arith.constant 0 : index
    %c0_107 = arith.constant 0 : index
    %c0_108 = arith.constant 0 : index
    %126 = vector.load %arg12[%c0_106, %c0_107, %c0_108] : memref<10x10x32xf32, #tpu.memory_space<vmem>>, vector<8x8x32xf32>
    %127 = vector.shape_cast %126 : vector<8x8x32xf32> to vector<64x32xf32>
    %c1_109 = arith.constant 1 : index
    %c0_110 = arith.constant 0 : index
    %c0_111 = arith.constant 0 : index
    %c0_112 = arith.constant 0 : index
    %128 = vector.load %arg5[%c1_109, %c0_110, %c0_111, %c0_112] : memref<3x9x32x32xf32, #tpu.memory_space<vmem>>, vector<1x1x32x32xf32>
    %129 = vector.shape_cast %128 : vector<1x1x32x32xf32> to vector<32x32xf32>
    %cst_113 = arith.constant dense<0.000000e+00> : vector<64x32xf32>
    %130 = tpu.matmul %127, %129, %cst_113 {dimension_numbers = #tpu.dot_dimension_numbers<[1], [0], [0], [1], [0, 0, 1, 1], [], []>} : vector<64x32xf32>, vector<32x32xf32>, vector<64x32xf32> -> vector<64x32xf32>
    %131 = arith.addf %125, %130 : vector<64x32xf32>
    %c0_114 = arith.constant 0 : index
    %c1_115 = arith.constant 1 : index
    %c0_116 = arith.constant 0 : index
    %132 = vector.load %arg12[%c0_114, %c1_115, %c0_116] : memref<10x10x32xf32, #tpu.memory_space<vmem>>, vector<8x8x32xf32>
    %133 = vector.shape_cast %132 : vector<8x8x32xf32> to vector<64x32xf32>
    %c1_117 = arith.constant 1 : index
    %c1_118 = arith.constant 1 : index
    %c0_119 = arith.constant 0 : index
    %c0_120 = arith.constant 0 : index
    %134 = vector.load %arg5[%c1_117, %c1_118, %c0_119, %c0_120] : memref<3x9x32x32xf32, #tpu.memory_space<vmem>>, vector<1x1x32x32xf32>
    %135 = vector.shape_cast %134 : vector<1x1x32x32xf32> to vector<32x32xf32>
    %cst_121 = arith.constant dense<0.000000e+00> : vector<64x32xf32>
    %136 = tpu.matmul %133, %135, %cst_121 {dimension_numbers = #tpu.dot_dimension_numbers<[1], [0], [0], [1], [0, 0, 1, 1], [], []>} : vector<64x32xf32>, vector<32x32xf32>, vector<64x32xf32> -> vector<64x32xf32>
    %137 = arith.addf %131, %136 : vector<64x32xf32>
    %c0_122 = arith.constant 0 : index
    %c2_123 = arith.constant 2 : index
    %c0_124 = arith.constant 0 : index
    %138 = vector.load %arg12[%c0_122, %c2_123, %c0_124] : memref<10x10x32xf32, #tpu.memory_space<vmem>>, vector<8x8x32xf32>
    %139 = vector.shape_cast %138 : vector<8x8x32xf32> to vector<64x32xf32>
    %c1_125 = arith.constant 1 : index
    %c2_126 = arith.constant 2 : index
    %c0_127 = arith.constant 0 : index
    %c0_128 = arith.constant 0 : index
    %140 = vector.load %arg5[%c1_125, %c2_126, %c0_127, %c0_128] : memref<3x9x32x32xf32, #tpu.memory_space<vmem>>, vector<1x1x32x32xf32>
    %141 = vector.shape_cast %140 : vector<1x1x32x32xf32> to vector<32x32xf32>
    %cst_129 = arith.constant dense<0.000000e+00> : vector<64x32xf32>
    %142 = tpu.matmul %139, %141, %cst_129 {dimension_numbers = #tpu.dot_dimension_numbers<[1], [0], [0], [1], [0, 0, 1, 1], [], []>} : vector<64x32xf32>, vector<32x32xf32>, vector<64x32xf32> -> vector<64x32xf32>
    %143 = arith.addf %137, %142 : vector<64x32xf32>
    %c1_130 = arith.constant 1 : index
    %c0_131 = arith.constant 0 : index
    %c0_132 = arith.constant 0 : index
    %144 = vector.load %arg12[%c1_130, %c0_131, %c0_132] : memref<10x10x32xf32, #tpu.memory_space<vmem>>, vector<8x8x32xf32>
    %145 = vector.shape_cast %144 : vector<8x8x32xf32> to vector<64x32xf32>
    %c1_133 = arith.constant 1 : index
    %c3_134 = arith.constant 3 : index
    %c0_135 = arith.constant 0 : index
    %c0_136 = arith.constant 0 : index
    %146 = vector.load %arg5[%c1_133, %c3_134, %c0_135, %c0_136] : memref<3x9x32x32xf32, #tpu.memory_space<vmem>>, vector<1x1x32x32xf32>
    %147 = vector.shape_cast %146 : vector<1x1x32x32xf32> to vector<32x32xf32>
    %cst_137 = arith.constant dense<0.000000e+00> : vector<64x32xf32>
    %148 = tpu.matmul %145, %147, %cst_137 {dimension_numbers = #tpu.dot_dimension_numbers<[1], [0], [0], [1], [0, 0, 1, 1], [], []>} : vector<64x32xf32>, vector<32x32xf32>, vector<64x32xf32> -> vector<64x32xf32>
    %149 = arith.addf %143, %148 : vector<64x32xf32>
    %c1_138 = arith.constant 1 : index
    %c1_139 = arith.constant 1 : index
    %c0_140 = arith.constant 0 : index
    %150 = vector.load %arg12[%c1_138, %c1_139, %c0_140] : memref<10x10x32xf32, #tpu.memory_space<vmem>>, vector<8x8x32xf32>
    %151 = vector.shape_cast %150 : vector<8x8x32xf32> to vector<64x32xf32>
    %c1_141 = arith.constant 1 : index
    %c4_142 = arith.constant 4 : index
    %c0_143 = arith.constant 0 : index
    %c0_144 = arith.constant 0 : index
    %152 = vector.load %arg5[%c1_141, %c4_142, %c0_143, %c0_144] : memref<3x9x32x32xf32, #tpu.memory_space<vmem>>, vector<1x1x32x32xf32>
    %153 = vector.shape_cast %152 : vector<1x1x32x32xf32> to vector<32x32xf32>
    %cst_145 = arith.constant dense<0.000000e+00> : vector<64x32xf32>
    %154 = tpu.matmul %151, %153, %cst_145 {dimension_numbers = #tpu.dot_dimension_numbers<[1], [0], [0], [1], [0, 0, 1, 1], [], []>} : vector<64x32xf32>, vector<32x32xf32>, vector<64x32xf32> -> vector<64x32xf32>
    %155 = arith.addf %149, %154 : vector<64x32xf32>
    %c1_146 = arith.constant 1 : index
    %c2_147 = arith.constant 2 : index
    %c0_148 = arith.constant 0 : index
    %156 = vector.load %arg12[%c1_146, %c2_147, %c0_148] : memref<10x10x32xf32, #tpu.memory_space<vmem>>, vector<8x8x32xf32>
    %157 = vector.shape_cast %156 : vector<8x8x32xf32> to vector<64x32xf32>
    %c1_149 = arith.constant 1 : index
    %c5_150 = arith.constant 5 : index
    %c0_151 = arith.constant 0 : index
    %c0_152 = arith.constant 0 : index
    %158 = vector.load %arg5[%c1_149, %c5_150, %c0_151, %c0_152] : memref<3x9x32x32xf32, #tpu.memory_space<vmem>>, vector<1x1x32x32xf32>
    %159 = vector.shape_cast %158 : vector<1x1x32x32xf32> to vector<32x32xf32>
    %cst_153 = arith.constant dense<0.000000e+00> : vector<64x32xf32>
    %160 = tpu.matmul %157, %159, %cst_153 {dimension_numbers = #tpu.dot_dimension_numbers<[1], [0], [0], [1], [0, 0, 1, 1], [], []>} : vector<64x32xf32>, vector<32x32xf32>, vector<64x32xf32> -> vector<64x32xf32>
    %161 = arith.addf %155, %160 : vector<64x32xf32>
    %c2_154 = arith.constant 2 : index
    %c0_155 = arith.constant 0 : index
    %c0_156 = arith.constant 0 : index
    %162 = vector.load %arg12[%c2_154, %c0_155, %c0_156] : memref<10x10x32xf32, #tpu.memory_space<vmem>>, vector<8x8x32xf32>
    %163 = vector.shape_cast %162 : vector<8x8x32xf32> to vector<64x32xf32>
    %c1_157 = arith.constant 1 : index
    %c6_158 = arith.constant 6 : index
    %c0_159 = arith.constant 0 : index
    %c0_160 = arith.constant 0 : index
    %164 = vector.load %arg5[%c1_157, %c6_158, %c0_159, %c0_160] : memref<3x9x32x32xf32, #tpu.memory_space<vmem>>, vector<1x1x32x32xf32>
    %165 = vector.shape_cast %164 : vector<1x1x32x32xf32> to vector<32x32xf32>
    %cst_161 = arith.constant dense<0.000000e+00> : vector<64x32xf32>
    %166 = tpu.matmul %163, %165, %cst_161 {dimension_numbers = #tpu.dot_dimension_numbers<[1], [0], [0], [1], [0, 0, 1, 1], [], []>} : vector<64x32xf32>, vector<32x32xf32>, vector<64x32xf32> -> vector<64x32xf32>
    %167 = arith.addf %161, %166 : vector<64x32xf32>
    %c2_162 = arith.constant 2 : index
    %c1_163 = arith.constant 1 : index
    %c0_164 = arith.constant 0 : index
    %168 = vector.load %arg12[%c2_162, %c1_163, %c0_164] : memref<10x10x32xf32, #tpu.memory_space<vmem>>, vector<8x8x32xf32>
    %169 = vector.shape_cast %168 : vector<8x8x32xf32> to vector<64x32xf32>
    %c1_165 = arith.constant 1 : index
    %c7_166 = arith.constant 7 : index
    %c0_167 = arith.constant 0 : index
    %c0_168 = arith.constant 0 : index
    %170 = vector.load %arg5[%c1_165, %c7_166, %c0_167, %c0_168] : memref<3x9x32x32xf32, #tpu.memory_space<vmem>>, vector<1x1x32x32xf32>
    %171 = vector.shape_cast %170 : vector<1x1x32x32xf32> to vector<32x32xf32>
    %cst_169 = arith.constant dense<0.000000e+00> : vector<64x32xf32>
    %172 = tpu.matmul %169, %171, %cst_169 {dimension_numbers = #tpu.dot_dimension_numbers<[1], [0], [0], [1], [0, 0, 1, 1], [], []>} : vector<64x32xf32>, vector<32x32xf32>, vector<64x32xf32> -> vector<64x32xf32>
    %173 = arith.addf %167, %172 : vector<64x32xf32>
    %c2_170 = arith.constant 2 : index
    %c2_171 = arith.constant 2 : index
    %c0_172 = arith.constant 0 : index
    %174 = vector.load %arg12[%c2_170, %c2_171, %c0_172] : memref<10x10x32xf32, #tpu.memory_space<vmem>>, vector<8x8x32xf32>
    %175 = vector.shape_cast %174 : vector<8x8x32xf32> to vector<64x32xf32>
    %c1_173 = arith.constant 1 : index
    %c8_174 = arith.constant 8 : index
    %c0_175 = arith.constant 0 : index
    %c0_176 = arith.constant 0 : index
    %176 = vector.load %arg5[%c1_173, %c8_174, %c0_175, %c0_176] : memref<3x9x32x32xf32, #tpu.memory_space<vmem>>, vector<1x1x32x32xf32>
    %177 = vector.shape_cast %176 : vector<1x1x32x32xf32> to vector<32x32xf32>
    %cst_177 = arith.constant dense<0.000000e+00> : vector<64x32xf32>
    %178 = tpu.matmul %175, %177, %cst_177 {dimension_numbers = #tpu.dot_dimension_numbers<[1], [0], [0], [1], [0, 0, 1, 1], [], []>} : vector<64x32xf32>, vector<32x32xf32>, vector<64x32xf32> -> vector<64x32xf32>
    %179 = arith.addf %173, %178 : vector<64x32xf32>
    %180 = arith.mulf %120, %120 : vector<1x32xf32>
    %c1_178 = arith.constant 1 : index
    %c0_179 = arith.constant 0 : index
    %c0_180 = arith.constant 0 : index
    %181 = vector.load %arg7[%c1_178, %c0_179, %c0_180] : memref<3x32x32xf32, #tpu.memory_space<vmem>>, vector<1x32x32xf32>
    %182 = vector.shape_cast %181 : vector<1x32x32xf32> to vector<32x32xf32>
    %cst_181 = arith.constant dense<0.000000e+00> : vector<1x32xf32>
    %183 = tpu.matmul %180, %182, %cst_181 {dimension_numbers = #tpu.dot_dimension_numbers<[1], [0], [0], [1], [0, 0, 1, 1], [], []>} : vector<1x32xf32>, vector<32x32xf32>, vector<1x32xf32> -> vector<1x32xf32>
    %cst_182 = arith.constant 9.99999993E-9 : f32
    %184 = vector.broadcast %cst_182 : f32 to vector<1x32xf32>
    %185 = arith.addf %183, %184 : vector<1x32xf32>
    %186 = math.rsqrt %185 : vector<1x32xf32>
    %187 = vector.broadcast %186 : vector<1x32xf32> to vector<64x32xf32>
    %188 = arith.mulf %179, %187 : vector<64x32xf32>
    %c1_183 = arith.constant 1 : index
    %c0_184 = arith.constant 0 : index
    %c0_185 = arith.constant 0 : index
    %189 = vector.load %arg6[%c1_183, %c0_184, %c0_185] : memref<3x1x32xf32, #tpu.memory_space<vmem>>, vector<1x1x32xf32>
    %190 = vector.shape_cast %189 : vector<1x1x32xf32> to vector<1x32xf32>
    %191 = vector.broadcast %190 : vector<1x32xf32> to vector<64x32xf32>
    %192 = arith.addf %188, %191 : vector<64x32xf32>
    %cst_186 = arith.constant 2.000000e-01 : f32
    %193 = vector.broadcast %cst_186 : f32 to vector<64x32xf32>
    %194 = arith.mulf %193, %192 : vector<64x32xf32>
    %195 = arith.maximumf %192, %194 : vector<64x32xf32>
    %cst_187 = arith.constant 1.41421354 : f32
    %196 = vector.broadcast %cst_187 : f32 to vector<64x32xf32>
    %197 = arith.mulf %195, %196 : vector<64x32xf32>
    %198 = vector.shape_cast %197 : vector<64x32xf32> to vector<8x8x32xf32>
    %199 = vector.extract_strided_slice %9 {offsets = [0, 96], sizes = [1, 32], strides = [1, 1]} : vector<1x160xf32> to vector<1x32xf32>
    %200 = vector.shape_cast %199 : vector<1x32xf32> to vector<1x1x32xf32>
    %201 = vector.broadcast %200 : vector<1x1x32xf32> to vector<8x8x32xf32>
    %202 = arith.mulf %198, %201 : vector<8x8x32xf32>
    %c1_188 = arith.constant 1 : index
    %c1_189 = arith.constant 1 : index
    %c0_190 = arith.constant 0 : index
    %203 = vector.load %arg12[%c1_188, %c1_189, %c0_190] : memref<10x10x32xf32, #tpu.memory_space<vmem>>, vector<8x8x32xf32>
    tpu.vector_store %arg12[%c1_188, %c1_189, %c0_190], %202 {strides = array<i32>} : memref<10x10x32xf32, #tpu.memory_space<vmem>>, vector<8x8x32xf32>,
    %cst_191 = arith.constant 0.000000e+00 : f32
    %204 = vector.broadcast %cst_191 : f32 to vector<64x32xf32>
    %c0_192 = arith.constant 0 : index
    %c0_193 = arith.constant 0 : index
    %c0_194 = arith.constant 0 : index
    %205 = vector.load %arg12[%c0_192, %c0_193, %c0_194] : memref<10x10x32xf32, #tpu.memory_space<vmem>>, vector<8x8x32xf32>
    %206 = vector.shape_cast %205 : vector<8x8x32xf32> to vector<64x32xf32>
    %c2_195 = arith.constant 2 : index
    %c0_196 = arith.constant 0 : index
    %c0_197 = arith.constant 0 : index
    %c0_198 = arith.constant 0 : index
    %207 = vector.load %arg5[%c2_195, %c0_196, %c0_197, %c0_198] : memref<3x9x32x32xf32, #tpu.memory_space<vmem>>, vector<1x1x32x32xf32>
    %208 = vector.shape_cast %207 : vector<1x1x32x32xf32> to vector<32x32xf32>
    %cst_199 = arith.constant dense<0.000000e+00> : vector<64x32xf32>
    %209 = tpu.matmul %206, %208, %cst_199 {dimension_numbers = #tpu.dot_dimension_numbers<[1], [0], [0], [1], [0, 0, 1, 1], [], []>} : vector<64x32xf32>, vector<32x32xf32>, vector<64x32xf32> -> vector<64x32xf32>
    %210 = arith.addf %204, %209 : vector<64x32xf32>
    %c0_200 = arith.constant 0 : index
    %c1_201 = arith.constant 1 : index
    %c0_202 = arith.constant 0 : index
    %211 = vector.load %arg12[%c0_200, %c1_201, %c0_202] : memref<10x10x32xf32, #tpu.memory_space<vmem>>, vector<8x8x32xf32>
    %212 = vector.shape_cast %211 : vector<8x8x32xf32> to vector<64x32xf32>
    %c2_203 = arith.constant 2 : index
    %c1_204 = arith.constant 1 : index
    %c0_205 = arith.constant 0 : index
    %c0_206 = arith.constant 0 : index
    %213 = vector.load %arg5[%c2_203, %c1_204, %c0_205, %c0_206] : memref<3x9x32x32xf32, #tpu.memory_space<vmem>>, vector<1x1x32x32xf32>
    %214 = vector.shape_cast %213 : vector<1x1x32x32xf32> to vector<32x32xf32>
    %cst_207 = arith.constant dense<0.000000e+00> : vector<64x32xf32>
    %215 = tpu.matmul %212, %214, %cst_207 {dimension_numbers = #tpu.dot_dimension_numbers<[1], [0], [0], [1], [0, 0, 1, 1], [], []>} : vector<64x32xf32>, vector<32x32xf32>, vector<64x32xf32> -> vector<64x32xf32>
    %216 = arith.addf %210, %215 : vector<64x32xf32>
    %c0_208 = arith.constant 0 : index
    %c2_209 = arith.constant 2 : index
    %c0_210 = arith.constant 0 : index
    %217 = vector.load %arg12[%c0_208, %c2_209, %c0_210] : memref<10x10x32xf32, #tpu.memory_space<vmem>>, vector<8x8x32xf32>
    %218 = vector.shape_cast %217 : vector<8x8x32xf32> to vector<64x32xf32>
    %c2_211 = arith.constant 2 : index
    %c2_212 = arith.constant 2 : index
    %c0_213 = arith.constant 0 : index
    %c0_214 = arith.constant 0 : index
    %219 = vector.load %arg5[%c2_211, %c2_212, %c0_213, %c0_214] : memref<3x9x32x32xf32, #tpu.memory_space<vmem>>, vector<1x1x32x32xf32>
    %220 = vector.shape_cast %219 : vector<1x1x32x32xf32> to vector<32x32xf32>
    %cst_215 = arith.constant dense<0.000000e+00> : vector<64x32xf32>
    %221 = tpu.matmul %218, %220, %cst_215 {dimension_numbers = #tpu.dot_dimension_numbers<[1], [0], [0], [1], [0, 0, 1, 1], [], []>} : vector<64x32xf32>, vector<32x32xf32>, vector<64x32xf32> -> vector<64x32xf32>
    %222 = arith.addf %216, %221 : vector<64x32xf32>
    %c1_216 = arith.constant 1 : index
    %c0_217 = arith.constant 0 : index
    %c0_218 = arith.constant 0 : index
    %223 = vector.load %arg12[%c1_216, %c0_217, %c0_218] : memref<10x10x32xf32, #tpu.memory_space<vmem>>, vector<8x8x32xf32>
    %224 = vector.shape_cast %223 : vector<8x8x32xf32> to vector<64x32xf32>
    %c2_219 = arith.constant 2 : index
    %c3_220 = arith.constant 3 : index
    %c0_221 = arith.constant 0 : index
    %c0_222 = arith.constant 0 : index
    %225 = vector.load %arg5[%c2_219, %c3_220, %c0_221, %c0_222] : memref<3x9x32x32xf32, #tpu.memory_space<vmem>>, vector<1x1x32x32xf32>
    %226 = vector.shape_cast %225 : vector<1x1x32x32xf32> to vector<32x32xf32>
    %cst_223 = arith.constant dense<0.000000e+00> : vector<64x32xf32>
    %227 = tpu.matmul %224, %226, %cst_223 {dimension_numbers = #tpu.dot_dimension_numbers<[1], [0], [0], [1], [0, 0, 1, 1], [], []>} : vector<64x32xf32>, vector<32x32xf32>, vector<64x32xf32> -> vector<64x32xf32>
    %228 = arith.addf %222, %227 : vector<64x32xf32>
    %c1_224 = arith.constant 1 : index
    %c1_225 = arith.constant 1 : index
    %c0_226 = arith.constant 0 : index
    %229 = vector.load %arg12[%c1_224, %c1_225, %c0_226] : memref<10x10x32xf32, #tpu.memory_space<vmem>>, vector<8x8x32xf32>
    %230 = vector.shape_cast %229 : vector<8x8x32xf32> to vector<64x32xf32>
    %c2_227 = arith.constant 2 : index
    %c4_228 = arith.constant 4 : index
    %c0_229 = arith.constant 0 : index
    %c0_230 = arith.constant 0 : index
    %231 = vector.load %arg5[%c2_227, %c4_228, %c0_229, %c0_230] : memref<3x9x32x32xf32, #tpu.memory_space<vmem>>, vector<1x1x32x32xf32>
    %232 = vector.shape_cast %231 : vector<1x1x32x32xf32> to vector<32x32xf32>
    %cst_231 = arith.constant dense<0.000000e+00> : vector<64x32xf32>
    %233 = tpu.matmul %230, %232, %cst_231 {dimension_numbers = #tpu.dot_dimension_numbers<[1], [0], [0], [1], [0, 0, 1, 1], [], []>} : vector<64x32xf32>, vector<32x32xf32>, vector<64x32xf32> -> vector<64x32xf32>
    %234 = arith.addf %228, %233 : vector<64x32xf32>
    %c1_232 = arith.constant 1 : index
    %c2_233 = arith.constant 2 : index
    %c0_234 = arith.constant 0 : index
    %235 = vector.load %arg12[%c1_232, %c2_233, %c0_234] : memref<10x10x32xf32, #tpu.memory_space<vmem>>, vector<8x8x32xf32>
    %236 = vector.shape_cast %235 : vector<8x8x32xf32> to vector<64x32xf32>
    %c2_235 = arith.constant 2 : index
    %c5_236 = arith.constant 5 : index
    %c0_237 = arith.constant 0 : index
    %c0_238 = arith.constant 0 : index
    %237 = vector.load %arg5[%c2_235, %c5_236, %c0_237, %c0_238] : memref<3x9x32x32xf32, #tpu.memory_space<vmem>>, vector<1x1x32x32xf32>
    %238 = vector.shape_cast %237 : vector<1x1x32x32xf32> to vector<32x32xf32>
    %cst_239 = arith.constant dense<0.000000e+00> : vector<64x32xf32>
    %239 = tpu.matmul %236, %238, %cst_239 {dimension_numbers = #tpu.dot_dimension_numbers<[1], [0], [0], [1], [0, 0, 1, 1], [], []>} : vector<64x32xf32>, vector<32x32xf32>, vector<64x32xf32> -> vector<64x32xf32>
    %240 = arith.addf %234, %239 : vector<64x32xf32>
    %c2_240 = arith.constant 2 : index
    %c0_241 = arith.constant 0 : index
    %c0_242 = arith.constant 0 : index
    %241 = vector.load %arg12[%c2_240, %c0_241, %c0_242] : memref<10x10x32xf32, #tpu.memory_space<vmem>>, vector<8x8x32xf32>
    %242 = vector.shape_cast %241 : vector<8x8x32xf32> to vector<64x32xf32>
    %c2_243 = arith.constant 2 : index
    %c6_244 = arith.constant 6 : index
    %c0_245 = arith.constant 0 : index
    %c0_246 = arith.constant 0 : index
    %243 = vector.load %arg5[%c2_243, %c6_244, %c0_245, %c0_246] : memref<3x9x32x32xf32, #tpu.memory_space<vmem>>, vector<1x1x32x32xf32>
    %244 = vector.shape_cast %243 : vector<1x1x32x32xf32> to vector<32x32xf32>
    %cst_247 = arith.constant dense<0.000000e+00> : vector<64x32xf32>
    %245 = tpu.matmul %242, %244, %cst_247 {dimension_numbers = #tpu.dot_dimension_numbers<[1], [0], [0], [1], [0, 0, 1, 1], [], []>} : vector<64x32xf32>, vector<32x32xf32>, vector<64x32xf32> -> vector<64x32xf32>
    %246 = arith.addf %240, %245 : vector<64x32xf32>
    %c2_248 = arith.constant 2 : index
    %c1_249 = arith.constant 1 : index
    %c0_250 = arith.constant 0 : index
    %247 = vector.load %arg12[%c2_248, %c1_249, %c0_250] : memref<10x10x32xf32, #tpu.memory_space<vmem>>, vector<8x8x32xf32>
    %248 = vector.shape_cast %247 : vector<8x8x32xf32> to vector<64x32xf32>
    %c2_251 = arith.constant 2 : index
    %c7_252 = arith.constant 7 : index
    %c0_253 = arith.constant 0 : index
    %c0_254 = arith.constant 0 : index
    %249 = vector.load %arg5[%c2_251, %c7_252, %c0_253, %c0_254] : memref<3x9x32x32xf32, #tpu.memory_space<vmem>>, vector<1x1x32x32xf32>
    %250 = vector.shape_cast %249 : vector<1x1x32x32xf32> to vector<32x32xf32>
    %cst_255 = arith.constant dense<0.000000e+00> : vector<64x32xf32>
    %251 = tpu.matmul %248, %250, %cst_255 {dimension_numbers = #tpu.dot_dimension_numbers<[1], [0], [0], [1], [0, 0, 1, 1], [], []>} : vector<64x32xf32>, vector<32x32xf32>, vector<64x32xf32> -> vector<64x32xf32>
    %252 = arith.addf %246, %251 : vector<64x32xf32>
    %c2_256 = arith.constant 2 : index
    %c2_257 = arith.constant 2 : index
    %c0_258 = arith.constant 0 : index
    %253 = vector.load %arg12[%c2_256, %c2_257, %c0_258] : memref<10x10x32xf32, #tpu.memory_space<vmem>>, vector<8x8x32xf32>
    %254 = vector.shape_cast %253 : vector<8x8x32xf32> to vector<64x32xf32>
    %c2_259 = arith.constant 2 : index
    %c8_260 = arith.constant 8 : index
    %c0_261 = arith.constant 0 : index
    %c0_262 = arith.constant 0 : index
    %255 = vector.load %arg5[%c2_259, %c8_260, %c0_261, %c0_262] : memref<3x9x32x32xf32, #tpu.memory_space<vmem>>, vector<1x1x32x32xf32>
    %256 = vector.shape_cast %255 : vector<1x1x32x32xf32> to vector<32x32xf32>
    %cst_263 = arith.constant dense<0.000000e+00> : vector<64x32xf32>
    %257 = tpu.matmul %254, %256, %cst_263 {dimension_numbers = #tpu.dot_dimension_numbers<[1], [0], [0], [1], [0, 0, 1, 1], [], []>} : vector<64x32xf32>, vector<32x32xf32>, vector<64x32xf32> -> vector<64x32xf32>
    %258 = arith.addf %252, %257 : vector<64x32xf32>
    %259 = arith.mulf %199, %199 : vector<1x32xf32>
    %c2_264 = arith.constant 2 : index
    %c0_265 = arith.constant 0 : index
    %c0_266 = arith.constant 0 : index
    %260 = vector.load %arg7[%c2_264, %c0_265, %c0_266] : memref<3x32x32xf32, #tpu.memory_space<vmem>>, vector<1x32x32xf32>
    %261 = vector.shape_cast %260 : vector<1x32x32xf32> to vector<32x32xf32>
    %cst_267 = arith.constant dense<0.000000e+00> : vector<1x32xf32>
    %262 = tpu.matmul %259, %261, %cst_267 {dimension_numbers = #tpu.dot_dimension_numbers<[1], [0], [0], [1], [0, 0, 1, 1], [], []>} : vector<1x32xf32>, vector<32x32xf32>, vector<1x32xf32> -> vector<1x32xf32>
    %cst_268 = arith.constant 9.99999993E-9 : f32
    %263 = vector.broadcast %cst_268 : f32 to vector<1x32xf32>
    %264 = arith.addf %262, %263 : vector<1x32xf32>
    %265 = math.rsqrt %264 : vector<1x32xf32>
    %266 = vector.broadcast %265 : vector<1x32xf32> to vector<64x32xf32>
    %267 = arith.mulf %258, %266 : vector<64x32xf32>
    %c2_269 = arith.constant 2 : index
    %c0_270 = arith.constant 0 : index
    %c0_271 = arith.constant 0 : index
    %268 = vector.load %arg6[%c2_269, %c0_270, %c0_271] : memref<3x1x32xf32, #tpu.memory_space<vmem>>, vector<1x1x32xf32>
    %269 = vector.shape_cast %268 : vector<1x1x32xf32> to vector<1x32xf32>
    %270 = vector.broadcast %269 : vector<1x32xf32> to vector<64x32xf32>
    %271 = arith.addf %267, %270 : vector<64x32xf32>
    %cst_272 = arith.constant 2.000000e-01 : f32
    %272 = vector.broadcast %cst_272 : f32 to vector<64x32xf32>
    %273 = arith.mulf %272, %271 : vector<64x32xf32>
    %274 = arith.maximumf %271, %273 : vector<64x32xf32>
    %cst_273 = arith.constant 1.41421354 : f32
    %275 = vector.broadcast %cst_273 : f32 to vector<64x32xf32>
    %276 = arith.mulf %274, %275 : vector<64x32xf32>
    %277 = vector.shape_cast %276 : vector<64x32xf32> to vector<8x8x32xf32>
    %278 = vector.shape_cast %277 : vector<8x8x32xf32> to vector<64x32xf32>
    %279 = vector.extract_strided_slice %9 {offsets = [0, 128], sizes = [1, 32], strides = [1, 1]} : vector<1x160xf32> to vector<1x32xf32>
    %280 = vector.broadcast %279 : vector<1x32xf32> to vector<64x32xf32>
    %281 = arith.mulf %278, %280 : vector<64x32xf32>
    %c1_274 = arith.constant 1 : index
    %c0_275 = arith.constant 0 : index
    %c0_276 = arith.constant 0 : index
    %282 = vector.load %arg8[%c1_274, %c0_275, %c0_276] : memref<2x3x32xf32, #tpu.memory_space<vmem>>, vector<1x3x32xf32>
    %283 = vector.shape_cast %282 : vector<1x3x32xf32> to vector<3x32xf32>
    %284 = tpu.transpose %281, [1, 0] : vector<64x32xf32> -> vector<32x64xf32>
    %cst_277 = arith.constant dense<0.000000e+00> : vector<3x64xf32>
    %285 = tpu.matmul %283, %284, %cst_277 {dimension_numbers = #tpu.dot_dimension_numbers<[1], [0], [0], [1], [0, 0, 1, 1], [], []>} : vector<3x32xf32>, vector<32x64xf32>, vector<3x64xf32> -> vector<3x64xf32>
    %c1_278 = arith.constant 1 : index
    %c0_279 = arith.constant 0 : index
    %c0_280 = arith.constant 0 : index
    %286 = vector.load %arg9[%c1_278, %c0_279, %c0_280] : memref<2x3x1xf32, #tpu.memory_space<vmem>>, vector<1x3x1xf32>
    %287 = vector.shape_cast %286 : vector<1x3x1xf32> to vector<3x1xf32>
    %288 = vector.broadcast %287 : vector<3x1xf32> to vector<3x64xf32>
    %289 = arith.addf %285, %288 : vector<3x64xf32>
    %290 = arith.addf %119, %289 : vector<3x64xf32>
    %c0_281 = arith.constant 0 : index
    %c0_282 = arith.constant 0 : index
    %c0_283 = arith.constant 0 : index
    %291 = vector.load %arg10[%c0_281, %c0_282, %c0_283] : memref<1x3x64xf32, #tpu.memory_space<vmem>>, vector<1x3x64xf32>
    %292 = vector.shape_cast %291 : vector<1x3x64xf32> to vector<3x64xf32>
    %293 = vector.shape_cast %290 : vector<3x64xf32> to vector<1x3x64xf32>
    tpu.vector_store %arg10[%c0_281, %c0_282, %c0_283], %293 {strides = array<i32>} : memref<1x3x64xf32, #tpu.memory_space<vmem>>, vector<1x3x64xf32>,
    return
  }
  func.func @transform_0(%arg0: i32) -> (i32, i32, i32) {
    %c0_i32 = arith.constant 0 : i32
    %c0_i32_0 = arith.constant 0 : i32
    %c0_i32_1 = arith.constant 0 : i32
    return %arg0, %c0_i32, %c0_i32_0 : i32, i32, i32
  }
  func.func @transform_1(%arg0: i32) -> (i32, i32, i32) {
    %c0_i32 = arith.constant 0 : i32
    %c0_i32_0 = arith.constant 0 : i32
    %c0_i32_1 = arith.constant 0 : i32
    %c0_i32_2 = arith.constant 0 : i32
    return %c0_i32, %c0_i32_0, %c0_i32_1 : i32, i32, i32
  }
  func.func @transform_2(%arg0: i32) -> (i32, i32) {
    %c0_i32 = arith.constant 0 : i32
    %c0_i32_0 = arith.constant 0 : i32
    %c0_i32_1 = arith.constant 0 : i32
    return %c0_i32, %c0_i32_0 : i32, i32
  }
  func.func @transform_3(%arg0: i32) -> (i32, i32) {
    %c0_i32 = arith.constant 0 : i32
    %c0_i32_0 = arith.constant 0 : i32
    %c0_i32_1 = arith.constant 0 : i32
    return %c0_i32, %c0_i32_0 : i32, i32
  }
  func.func @transform_4(%arg0: i32) -> (i32, i32, i32, i32) {
    %c0_i32 = arith.constant 0 : i32
    %c0_i32_0 = arith.constant 0 : i32
    %c0_i32_1 = arith.constant 0 : i32
    %c0_i32_2 = arith.constant 0 : i32
    %c0_i32_3 = arith.constant 0 : i32
    return %c0_i32, %c0_i32_0, %c0_i32_1, %c0_i32_2 : i32, i32, i32, i32
  }
  func.func @transform_5(%arg0: i32) -> (i32, i32, i32) {
    %c0_i32 = arith.constant 0 : i32
    %c0_i32_0 = arith.constant 0 : i32
    %c0_i32_1 = arith.constant 0 : i32
    %c0_i32_2 = arith.constant 0 : i32
    return %c0_i32, %c0_i32_0, %c0_i32_1 : i32, i32, i32
  }
  func.func @transform_6(%arg0: i32) -> (i32, i32, i32) {
    %c0_i32 = arith.constant 0 : i32
    %c0_i32_0 = arith.constant 0 : i32
    %c0_i32_1 = arith.constant 0 : i32
    %c0_i32_2 = arith.constant 0 : i32
    return %c0_i32, %c0_i32_0, %c0_i32_1 : i32, i32, i32
  }
  func.func @transform_7(%arg0: i32) -> (i32, i32, i32) {
    %c0_i32 = arith.constant 0 : i32
    %c0_i32_0 = arith.constant 0 : i32
    %c0_i32_1 = arith.constant 0 : i32
    %c0_i32_2 = arith.constant 0 : i32
    return %c0_i32, %c0_i32_0, %c0_i32_1 : i32, i32, i32
  }
  func.func @transform_8(%arg0: i32) -> (i32, i32, i32) {
    %c0_i32 = arith.constant 0 : i32
    %c0_i32_0 = arith.constant 0 : i32
    %c0_i32_1 = arith.constant 0 : i32
    %c0_i32_2 = arith.constant 0 : i32
    return %c0_i32, %c0_i32_0, %c0_i32_1 : i32, i32, i32
  }
  func.func @transform_9(%arg0: i32) -> (i32, i32, i32) {
    %c0_i32 = arith.constant 0 : i32
    %c0_i32_0 = arith.constant 0 : i32
    %c0_i32_1 = arith.constant 0 : i32
    return %arg0, %c0_i32, %c0_i32_0 : i32, i32, i32
  }
}

</mosaic_0001>

<llo_original>
// kernel: rewrite_model_forward.1
$region0: #{rewrite_model_forward.1}
  #allocation0 [shape = 'u32[]', space=smem, size = 0x4, offset = 0x4, fixed_abs, tag = 'smem constant byte address 0x4 - core index']
  #allocation1 [shape = 'u32[72,128]{1,0:T(1,128)}', space=vmem, size = 0x9000, scoped, tag = 'internal scratch']
  #allocation2 [shape = 'f32[6,6,32]{2,1,0:T(8,128)}', space=vmem, size = 0x6000, scoped, tag = 'scratch operand']
  #allocation3 [shape = 'f32[10,10,32]{2,1,0:T(8,128)}', space=vmem, size = 0x14000, scoped, tag = 'scratch operand']
  %s0 = inlined_call_operand.vmem [shape: f32[2,1,160], index: 0, kind: input, shape index: {}]
  %s1 = inlined_call_operand.vmem [shape: f32[4,4,32], index: 1, kind: input, shape index: {}]
  %s2 = inlined_call_operand.hbm [shape: f32[160,160], index: 2, kind: input, shape index: {}]
  %s3 = inlined_call_operand.vmem [shape: f32[1,160], index: 3, kind: input, shape index: {}]
  %s4 = inlined_call_operand.hbm [shape: f32[3,9,32,32], index: 4, kind: input, shape index: {}]
  %s5 = inlined_call_operand.vmem [shape: f32[3,1,32], index: 5, kind: input, shape index: {}]
  %s6 = inlined_call_operand.hbm [shape: f32[3,32,32], index: 6, kind: input, shape index: {}]
  %s7 = inlined_call_operand.vmem [shape: f32[2,3,32], index: 7, kind: input, shape index: {}]
  %s8 = inlined_call_operand.vmem [shape: f32[2,3,1], index: 8, kind: input, shape index: {}]
  %s9 = inlined_call_operand.vmem [shape: f32[2,3,64], index: 9, kind: output, shape index: {}]
  %s10 = sld [smem:[#allocation0]]
  $region81: #{rewrite_model_forward.1} parent=0
    _
  %s12 = ssub.s32 1, %s10
  %s13 = scalar_select 0, %s12, %s10
  $region1: #{rewrite_model_forward.1} parent=0
    #allocation4 [shape = 'u8[163840]{0}', space=vmem, size = 0x28000, scoped, tag = 'input window, operand 2, single buffered']
    #allocation5 [shape = 's32[2]{0}', space=sflag, size = 0x8, scoped, tag = 'scoped memory for rewrite_model_forward.1']
    #allocation6 [shape = 'u8[442368]{0}', space=vmem, size = 0x6c000, scoped, tag = 'input window, operand 4, single buffered']
    #allocation7 [shape = 's32[1]{0}', space=sflag, size = 0x4, scoped, tag = 'scoped memory for rewrite_model_forward.1']
    #allocation8 [shape = 'u8[49152]{0}', space=vmem, size = 0xc000, scoped, tag = 'input window, operand 6, single buffered']
    %14 = vsyncpa [#allocation5], 0
    %15 = vsyncpa [#allocation7], 0
    loop: start=0, step=1, limit=4
    $region2: #{rewrite_model_forward.1} parent=1 // loop_pre_header
      _
    $region3: #{rewrite_model_forward.1} parent=1 // loop_header
      %s17 = sphi 0, %s21
      %p18 = scmp.ge.s32.totalorder %s17, 4
      %s27 = sphi 0, %s29
      %s30 = sphi 0, %s27
      %s31 = sphi 0, %s30
      %s47 = sphi 0, %s31
      %s51 = sphi 0, %s51
      %s53 = sphi 0, %s51
      %s54 = sphi 0, %s53
      %s68 = sphi 0, %s54
      %s72 = sphi 0, %s72
      %s74 = sphi 0, %s72
      %s75 = sphi 0, %s74
      %s89 = sphi 0, %s75
      %s93 = sphi 0, %s93
      %s95 = sphi 0, %s93
      %s96 = sphi 0, %s95
      %s110 = sphi 0, %s96
      %s114 = sphi 0, %s114
      %s116 = sphi 0, %s114
      %s117 = sphi 0, %s116
      %s131 = sphi 0, %s117
      %s135 = sphi 0, %s135
      %s137 = sphi 0, %s135
      %s138 = sphi 0, %s137
      %s152 = sphi 0, %s138
      %s156 = sphi 0, %s156
      %s158 = sphi 0, %s156
      %s159 = sphi 0, %s158
      %s173 = sphi 0, %s159
      %s177 = sphi 0, %s177
      %s179 = sphi 0, %s177
      %s180 = sphi 0, %s179
      %s194 = sphi 0, %s180
      %s198 = sphi 0, %s198
      %s200 = sphi 0, %s198
      %s201 = sphi 0, %s200
      %s215 = sphi 0, %s201
      %s221 = sphi 0, %s223
      %s224 = sphi 0, %s221
      %s225 = sphi 0, %s224
      %s241 = sphi 0, %s225
    $region4: #{rewrite_model_forward.1} parent=1 // loop_header_branch
      %20 = sbr.rel (%p18) target = $region8
    $region5: #{rewrite_model_forward.1} parent=1 // loop_body
      %s22 = ssub.s32 %s17, 1
      %s23 = ssub.s32 %s17, 2
      %s24 = sadd.s32 %s17, 1
      %s25 = ssub.s32 %s17, %s24
      %p26 = scmp.eq.s32.totalorder %s25, 0
      %s28 = sadd.s32 %s27, 1
      %s29 = scalar_select %p26, %s27, %s28
      %p32 = pneg %p26
      %p33 = scmp.eq.s32.totalorder %s17, 1
      %p34 = por %p32, %p33
      %p35 = scmp.ne.s32.totalorder %s27, %s30
      %p36 = scmp.eq.s32.totalorder %s17, 0
      %p37 = por %p35, %p36
      %p38 = scmp.ne.s32.totalorder %s27, %s30
      %p39 = scmp.eq.s32.totalorder %s22, 1
      %p40 = por %p38, %p39
      %p41 = scmp.ne.s32.totalorder %s30, %s31
      %p42 = scmp.eq.s32.totalorder %s22, 0
      %p43 = por %p41, %p42
      %p44 = scmp.ne.s32.totalorder %s30, %s31
      %p45 = scmp.eq.s32.totalorder %s23, 1
      %p46 = por %p44, %p45
      %p48 = scmp.ne.s32.totalorder %s31, %s47
      %p49 = scmp.eq.s32.totalorder %s23, 0
      %p50 = por %p48, %p49
      %s52 = sadd.s32 %s51, 1
      %p55 = scmp.eq.s32.totalorder %s17, 1
      %p56 = scmp.ne.s32.totalorder %s51, %s53
      %p57 = scmp.eq.s32.totalorder %s17, 0
      %p58 = por %p56, %p57
      %p59 = scmp.ne.s32.totalorder %s51, %s53
      %p60 = scmp.eq.s32.totalorder %s22, 1
      %p61 = por %p59, %p60
      %p62 = scmp.ne.s32.totalorder %s53, %s54
      %p63 = scmp.eq.s32.totalorder %s22, 0
      %p64 = por %p62, %p63
      %p65 = scmp.ne.s32.totalorder %s53, %s54
      %p66 = scmp.eq.s32.totalorder %s23, 1
      %p67 = por %p65, %p66
      %p69 = scmp.ne.s32.totalorder %s54, %s68
      %p70 = scmp.eq.s32.totalorder %s23, 0
      %p71 = por %p69, %p70
      %s73 = sadd.s32 %s72, 1
      %p76 = scmp.eq.s32.totalorder %s17, 1
      %p77 = scmp.ne.s32.totalorder %s72, %s74
      %p78 = scmp.eq.s32.totalorder %s17, 0
      %p79 = por %p77, %p78
      %p80 = scmp.ne.s32.totalorder %s72, %s74
      %p81 = scmp.eq.s32.totalorder %s22, 1
      %p82 = por %p80, %p81
      %p83 = scmp.ne.s32.totalorder %s74, %s75
      %p84 = scmp.eq.s32.totalorder %s22, 0
      %p85 = por %p83, %p84
      %p86 = scmp.ne.s32.totalorder %s74, %s75
      %p87 = scmp.eq.s32.totalorder %s23, 1
      %p88 = por %p86, %p87
      %p90 = scmp.ne.s32.totalorder %s75, %s89
      %p91 = scmp.eq.s32.totalorder %s23, 0
      %p92 = por %p90, %p91
      %s94 = sadd.s32 %s93, 1
      %p97 = scmp.eq.s32.totalorder %s17, 1
      %p98 = scmp.ne.s32.totalorder %s93, %s95
      %p99 = scmp.eq.s32.totalorder %s17, 0
      %p100 = por %p98, %p99
      %p101 = scmp.ne.s32.totalorder %s93, %s95
      %p102 = scmp.eq.s32.totalorder %s22, 1
      %p103 = por %p101, %p102
      %p104 = scmp.ne.s32.totalorder %s95, %s96
      %p105 = scmp.eq.s32.totalorder %s22, 0
      %p106 = por %p104, %p105
      %p107 = scmp.ne.s32.totalorder %s95, %s96
      %p108 = scmp.eq.s32.totalorder %s23, 1
      %p109 = por %p107, %p108
      %p111 = scmp.ne.s32.totalorder %s96, %s110
      %p112 = scmp.eq.s32.totalorder %s23, 0
      %p113 = por %p111, %p112
      %s115 = sadd.s32 %s114, 1
      %p118 = scmp.eq.s32.totalorder %s17, 1
      %p119 = scmp.ne.s32.totalorder %s114, %s116
      %p120 = scmp.eq.s32.totalorder %s17, 0
      %p121 = por %p119, %p120
      %p122 = scmp.ne.s32.totalorder %s114, %s116
      %p123 = scmp.eq.s32.totalorder %s22, 1
      %p124 = por %p122, %p123
      %p125 = scmp.ne.s32.totalorder %s116, %s117
      %p126 = scmp.eq.s32.totalorder %s22, 0
      %p127 = por %p125, %p126
      %p128 = scmp.ne.s32.totalorder %s116, %s117
      %p129 = scmp.eq.s32.totalorder %s23, 1
      %p130 = por %p128, %p129
      %p132 = scmp.ne.s32.totalorder %s117, %s131
      %p133 = scmp.eq.s32.totalorder %s23, 0
      %p134 = por %p132, %p133
      %s136 = sadd.s32 %s135, 1
      %p139 = scmp.eq.s32.totalorder %s17, 1
      %p140 = scmp.ne.s32.totalorder %s135, %s137
      %p141 = scmp.eq.s32.totalorder %s17, 0
      %p142 = por %p140, %p141
      %p143 = scmp.ne.s32.totalorder %s135, %s137
      %p144 = scmp.eq.s32.totalorder %s22, 1
      %p145 = por %p143, %p144
      %p146 = scmp.ne.s32.totalorder %s137, %s138
      %p147 = scmp.eq.s32.totalorder %s22, 0
      %p148 = por %p146, %p147
      %p149 = scmp.ne.s32.totalorder %s137, %s138
      %p150 = scmp.eq.s32.totalorder %s23, 1
      %p151 = por %p149, %p150
      %p153 = scmp.ne.s32.totalorder %s138, %s152
      %p154 = scmp.eq.s32.totalorder %s23, 0
      %p155 = por %p153, %p154
      %s157 = sadd.s32 %s156, 1
      %p160 = scmp.eq.s32.totalorder %s17, 1
      %p161 = scmp.ne.s32.totalorder %s156, %s158
      %p162 = scmp.eq.s32.totalorder %s17, 0
      %p163 = por %p161, %p162
      %p164 = scmp.ne.s32.totalorder %s156, %s158
      %p165 = scmp.eq.s32.totalorder %s22, 1
      %p166 = por %p164, %p165
      %p167 = scmp.ne.s32.totalorder %s158, %s159
      %p168 = scmp.eq.s32.totalorder %s22, 0
      %p169 = por %p167, %p168
      %p170 = scmp.ne.s32.totalorder %s158, %s159
      %p171 = scmp.eq.s32.totalorder %s23, 1
      %p172 = por %p170, %p171
      %p174 = scmp.ne.s32.totalorder %s159, %s173
      %p175 = scmp.eq.s32.totalorder %s23, 0
      %p176 = por %p174, %p175
      %s178 = sadd.s32 %s177, 1
      %p181 = scmp.eq.s32.totalorder %s17, 1
      %p182 = scmp.ne.s32.totalorder %s177, %s179
      %p183 = scmp.eq.s32.totalorder %s17, 0
      %p184 = por %p182, %p183
      %p185 = scmp.ne.s32.totalorder %s177, %s179
      %p186 = scmp.eq.s32.totalorder %s22, 1
      %p187 = por %p185, %p186
      %p188 = scmp.ne.s32.totalorder %s179, %s180
      %p189 = scmp.eq.s32.totalorder %s22, 0
      %p190 = por %p188, %p189
      %p191 = scmp.ne.s32.totalorder %s179, %s180
      %p192 = scmp.eq.s32.totalorder %s23, 1
      %p193 = por %p191, %p192
      %p195 = scmp.ne.s32.totalorder %s180, %s194
      %p196 = scmp.eq.s32.totalorder %s23, 0
      %p197 = por %p195, %p196
      %s199 = sadd.s32 %s198, 1
      %p202 = scmp.eq.s32.totalorder %s17, 1
      %p203 = scmp.ne.s32.totalorder %s198, %s200
      %p204 = scmp.eq.s32.totalorder %s17, 0
      %p205 = por %p203, %p204
      %p206 = scmp.ne.s32.totalorder %s198, %s200
      %p207 = scmp.eq.s32.totalorder %s22, 1
      %p208 = por %p206, %p207
      %p209 = scmp.ne.s32.totalorder %s200, %s201
      %p210 = scmp.eq.s32.totalorder %s22, 0
      %p211 = por %p209, %p210
      %p212 = scmp.ne.s32.totalorder %s200, %s201
      %p213 = scmp.eq.s32.totalorder %s23, 1
      %p214 = por %p212, %p213
      %p216 = scmp.ne.s32.totalorder %s201, %s215
      %p217 = scmp.eq.s32.totalorder %s23, 0
      %p218 = por %p216, %p217
      %s219 = ssub.s32 %s17, %s24
      %p220 = scmp.eq.s32.totalorder %s219, 0
      %s222 = sadd.s32 %s221, 1
      %s223 = scalar_select %p220, %s221, %s222
      %p226 = pneg %p220
      %p227 = scmp.eq.s32.totalorder %s17, 1
      %p228 = por %p226, %p227
      %p229 = scmp.ne.s32.totalorder %s221, %s224
      %p230 = scmp.eq.s32.totalorder %s17, 0
      %p231 = por %p229, %p230
      %p232 = scmp.ne.s32.totalorder %s221, %s224
      %p233 = scmp.eq.s32.totalorder %s22, 1
      %p234 = por %p232, %p233
      %p235 = scmp.ne.s32.totalorder %s224, %s225
      %p236 = scmp.eq.s32.totalorder %s22, 0
      %p237 = por %p235, %p236
      %p238 = scmp.ne.s32.totalorder %s224, %s225
      %p239 = scmp.eq.s32.totalorder %s23, 1
      %p240 = por %p238, %p239
      %p242 = scmp.ne.s32.totalorder %s225, %s241
      %p243 = scmp.eq.s32.totalorder %s23, 0
      %p244 = por %p242, %p243
      %p245 = scmp.le.s32.totalorder 1, %s17
      %p246 = scmp.lt.s32.totalorder %s17, 3
      %p247 = pnand %p245, %p246
      %p248 = pneg %p247
      // Predicated region
      $region9: #{rewrite_model_forward.1} parent=5 // pred_check
        _
      $region10: #{rewrite_model_forward.1} parent=5 // pred_check_branch
        %250 = sbr.rel (%p247) target = $region12
      $region11: #{rewrite_model_forward.1} parent=5 // pred_region
        %s251 = ssub.s32 %s17, 1
        // Predicated region
        $region13: #{rewrite_model_forward.1} parent=11 // pred_check
          %p252 = pneg %p64
        $region14: #{rewrite_model_forward.1} parent=11 // pred_check_branch
          %254 = sbr.rel (%p252) target = $region16
        $region15: #{rewrite_model_forward.1} parent=11 // pred_region
          _
        $region16: #{rewrite_model_forward.1} parent=11 // pred_fallthru
          _
        // Predicated region
        $region17: #{rewrite_model_forward.1} parent=11 // pred_check
          %p255 = pneg %p85
        $region18: #{rewrite_model_forward.1} parent=11 // pred_check_branch
          %257 = sbr.rel (%p255) target = $region20
        $region19: #{rewrite_model_forward.1} parent=11 // pred_region
          %259 = vsyncadd [#allocation5], 0
          %s260 = sshll.u32 %s2, 4
          %s261 = int_to_ptr.hbm [resolvable:$true] %s260
          %s262 = sshll.u32 [#allocation4], 4
          %s263 = int_to_ptr.vmem [resolvable:$true] %s262
          %268 = dma.hbm_to_vmem [thread:$0]  %s261, 5120, %s263, [#allocation5], 256, 256, 16
        $region20: #{rewrite_model_forward.1} parent=11 // pred_fallthru
          _
        // Predicated region
        $region21: #{rewrite_model_forward.1} parent=11 // pred_check
          %p269 = pneg %p106
        $region22: #{rewrite_model_forward.1} parent=11 // pred_check_branch
          %271 = sbr.rel (%p269) target = $region24
        $region23: #{rewrite_model_forward.1} parent=11 // pred_region
          _
        $region24: #{rewrite_model_forward.1} parent=11 // pred_fallthru
          _
        // Predicated region
        $region25: #{rewrite_model_forward.1} parent=11 // pred_check
          %p272 = pneg %p127
        $region26: #{rewrite_model_forward.1} parent=11 // pred_check_branch
          %274 = sbr.rel (%p272) target = $region28
        $region27: #{rewrite_model_forward.1} parent=11 // pred_region
          %276 = vsyncadd [#allocation7], 0
          %s277 = sshll.u32 %s4, 4
          %s278 = int_to_ptr.hbm [resolvable:$true] %s277
          %s279 = sshll.u32 [#allocation6], 4
          %s280 = int_to_ptr.vmem [resolvable:$true] %s279
          %285 = dma.hbm_to_vmem [thread:$0]  %s278, 13824, %s280, [#allocation7], 128, 128, 8
        $region28: #{rewrite_model_forward.1} parent=11 // pred_fallthru
          _
        // Predicated region
        $region29: #{rewrite_model_forward.1} parent=11 // pred_check
          %p286 = pneg %p148
        $region30: #{rewrite_model_forward.1} parent=11 // pred_check_branch
          %288 = sbr.rel (%p286) target = $region32
        $region31: #{rewrite_model_forward.1} parent=11 // pred_region
          _
        $region32: #{rewrite_model_forward.1} parent=11 // pred_fallthru
          _
        // Predicated region
        $region33: #{rewrite_model_forward.1} parent=11 // pred_check
          %p289 = pneg %p169
        $region34: #{rewrite_model_forward.1} parent=11 // pred_check_branch
          %291 = sbr.rel (%p289) target = $region36
        $region35: #{rewrite_model_forward.1} parent=11 // pred_region
          %293 = vsyncadd [#allocation7], 0
          %s294 = sshll.u32 %s6, 4
          %s295 = int_to_ptr.hbm [resolvable:$true] %s294
          %s296 = sshll.u32 [#allocation8], 4
          %s297 = int_to_ptr.vmem [resolvable:$true] %s296
          %302 = dma.hbm_to_vmem [thread:$0]  %s295, 1536, %s297, [#allocation7], 128, 128, 8
        $region36: #{rewrite_model_forward.1} parent=11 // pred_fallthru
          _
        // Predicated region
        $region37: #{rewrite_model_forward.1} parent=11 // pred_check
          %p303 = pneg %p190
        $region38: #{rewrite_model_forward.1} parent=11 // pred_check_branch
          %305 = sbr.rel (%p303) target = $region40
        $region39: #{rewrite_model_forward.1} parent=11 // pred_region
          _
        $region40: #{rewrite_model_forward.1} parent=11 // pred_fallthru
          _
        // Predicated region
        $region41: #{rewrite_model_forward.1} parent=11 // pred_check
          %p306 = pneg %p211
        $region42: #{rewrite_model_forward.1} parent=11 // pred_check_branch
          %308 = sbr.rel (%p306) target = $region44
        $region43: #{rewrite_model_forward.1} parent=11 // pred_region
          _
        $region44: #{rewrite_model_forward.1} parent=11 // pred_fallthru
          _
      $region12: #{rewrite_model_forward.1} parent=5 // pred_fallthru
        _
      %p309 = scmp.lt.s32.totalorder %s17, 2
      // Predicated region
      $region45: #{rewrite_model_forward.1} parent=5 // pred_check
        %p310 = pneg %p309
      $region46: #{rewrite_model_forward.1} parent=5 // pred_check_branch
        %312 = sbr.rel (%p310) target = $region48
      $region47: #{rewrite_model_forward.1} parent=5 // pred_region
        // Predicated region
        $region49: #{rewrite_model_forward.1} parent=47 // pred_check
          %p313 = pneg %p37
        $region50: #{rewrite_model_forward.1} parent=47 // pred_check_branch
          %315 = sbr.rel (%p313) target = $region52
        $region51: #{rewrite_model_forward.1} parent=47 // pred_region
          %p316 = scmp.lt.s32.totalorder %s17, 1
          %s317 = scalar_select %p316, %s17, 1
          %s318 = smul.addr %s317, 2
          %s319 = scalar_lea.vmem %s0, %s318
        $region52: #{rewrite_model_forward.1} parent=47 // pred_fallthru
          _
      $region48: #{rewrite_model_forward.1} parent=5 // pred_fallthru
        _
      %p320 = scmp.le.s32.totalorder 1, %s17
      %p321 = scmp.lt.s32.totalorder %s17, 3
      %p322 = pnand %p320, %p321
      %p323 = pneg %p322
      // Predicated region
      $region53: #{rewrite_model_forward.1} parent=5 // pred_check
        _
      $region54: #{rewrite_model_forward.1} parent=5 // pred_check_branch
        %325 = sbr.rel (%p322) target = $region56
      $region55: #{rewrite_model_forward.1} parent=5 // pred_region
        %s326 = ssub.s32 %s17, 1
        // Predicated region
        $region57: #{rewrite_model_forward.1} parent=55 // pred_check
          %p327 = pneg %p85
        $region58: #{rewrite_model_forward.1} parent=55 // pred_check_branch
          %329 = sbr.rel (%p327) target = $region60
        $region59: #{rewrite_model_forward.1} parent=55 // pred_region
          %331 = dma.done [#allocation5], 5120
        $region60: #{rewrite_model_forward.1} parent=55 // pred_fallthru
          _
        // Predicated region
        $region61: #{rewrite_model_forward.1} parent=55 // pred_check
          %p332 = pneg %p127
        $region62: #{rewrite_model_forward.1} parent=55 // pred_check_branch
          %334 = sbr.rel (%p332) target = $region64
        $region63: #{rewrite_model_forward.1} parent=55 // pred_region
          %336 = dma.done [#allocation7], 13824
        $region64: #{rewrite_model_forward.1} parent=55 // pred_fallthru
          _
        // Predicated region
        $region65: #{rewrite_model_forward.1} parent=55 // pred_check
          %p337 = pneg %p169
        $region66: #{rewrite_model_forward.1} parent=55 // pred_check_branch
          %339 = sbr.rel (%p337) target = $region68
        $region67: #{rewrite_model_forward.1} parent=55 // pred_region
          %341 = dma.done [#allocation7], 1536
        $region68: #{rewrite_model_forward.1} parent=55 // pred_fallthru
          _
        %p342 = scmp.lt.s32.totalorder %s22, 1
        %s343 = scalar_select %p342, %s22, 1
        %s344 = smul.addr %s343, 2
        %s345 = scalar_lea.vmem %s0, %s344
        %p346 = pneg %p43
        %p347 = pneg %p40
        %p348 = pneg %p64
        %p349 = pneg %p61
        %p350 = pneg %p85
        %p351 = pneg %p82
        %p352 = pneg %p106
        %p353 = pneg %p103
        %p354 = pneg %p127
        %p355 = pneg %p124
        %p356 = pneg %p148
        %p357 = pneg %p145
        %p358 = pneg %p169
        %p359 = pneg %p166
        %p360 = pneg %p190
        %p361 = pneg %p187
        %p362 = pneg %p211
        %p363 = pneg %p208
        %p364 = pneg %p237
        %p365 = pneg %p234
        %p366 = scmp.lt.s32.totalorder %s22, 1
        %s367 = scalar_select %p366, %s22, 1
        %s368 = smul.addr %s367, 4
        %s369 = scalar_lea.vmem %s9, %s368
        %p370 = scmp.lt.s32.totalorder %s22, 1
        %s371 = scalar_select %p370, %s22, 1
        %s372 = smul.addr %s371, 2
        %s373 = scalar_lea.vmem %s0, %s372
        %p374 = scmp.lt.s32.totalorder %s22, 1
        %s375 = scalar_select %p374, %s22, 1
        %s376 = smul.addr %s375, 4
        %s377 = scalar_lea.vmem %s9, %s376
        %vm378 = vcmask 259072
        %379 = vst.msk [vmem:[#allocation2] sm:$0x3f] %vm378, 0.0
        %380 = vst.msk [vmem:[#allocation2 + $0x8] sm:$0x3f] %vm378, 0.0
        %381 = vst.msk [vmem:[#allocation2 + $0x10] sm:$0x3f] %vm378, 0.0
        %382 = vst.msk [vmem:[#allocation2 + $0x18] sm:$0x3f] %vm378, 0.0
        %383 = vst.msk [vmem:[#allocation2 + $0x20] sm:$0x3f] %vm378, 0.0
        %384 = vst.msk [vmem:[#allocation2 + $0x28] sm:$0x3f] %vm378, 0.0
        %vm385 = vcmask 261120
        %386 = vst.msk [vmem:[#allocation3] sm:$0xff] %vm385, 0.0
        %vm387 = vcmask 254976
        %388 = vst.msk [vmem:[#allocation3 + $0x8] sm:$0x3] %vm387, 0.0
        %389 = vst.msk [vmem:[#allocation3 + $0x10] sm:$0xff] %vm385, 0.0
        %390 = vst.msk [vmem:[#allocation3 + $0x18] sm:$0x3] %vm387, 0.0
        %391 = vst.msk [vmem:[#allocation3 + $0x20] sm:$0xff] %vm385, 0.0
        %392 = vst.msk [vmem:[#allocation3 + $0x28] sm:$0x3] %vm387, 0.0
        %393 = vst.msk [vmem:[#allocation3 + $0x30] sm:$0xff] %vm385, 0.0
        %394 = vst.msk [vmem:[#allocation3 + $0x38] sm:$0x3] %vm387, 0.0
        %395 = vst.msk [vmem:[#allocation3 + $0x40] sm:$0xff] %vm385, 0.0
        %396 = vst.msk [vmem:[#allocation3 + $0x48] sm:$0x3] %vm387, 0.0
        %397 = vst.msk [vmem:[#allocation3 + $0x50] sm:$0xff] %vm385, 0.0
        %398 = vst.msk [vmem:[#allocation3 + $0x58] sm:$0x3] %vm387, 0.0
        %399 = vst.msk [vmem:[#allocation3 + $0x60] sm:$0xff] %vm385, 0.0
        %400 = vst.msk [vmem:[#allocation3 + $0x68] sm:$0x3] %vm387, 0.0
        %401 = vst.msk [vmem:[#allocation3 + $0x70] sm:$0xff] %vm385, 0.0
        %402 = vst.msk [vmem:[#allocation3 + $0x78] sm:$0x3] %vm387, 0.0
        %403 = vst.msk [vmem:[#allocation3 + $0x80] sm:$0xff] %vm385, 0.0
        %404 = vst.msk [vmem:[#allocation3 + $0x88] sm:$0x3] %vm387, 0.0
        %405 = vst.msk [vmem:[#allocation3 + $0x90] sm:$0xff] %vm385, 0.0
        %406 = vst.msk [vmem:[#allocation3 + $0x98] sm:$0x3] %vm387, 0.0
        %v407 = vld [vmem:[%s373] sm:$0x3]
        %v408 = vld [vmem:[#allocation4] sm:$0xff]
        %v409 = vld [vmem:[#allocation4 + $0x8] sm:$0xff]
        %v410 = vld [vmem:[#allocation4 + $0x10] sm:$0xff]
        %v411 = vld [vmem:[#allocation4 + $0x18] sm:$0xff]
        %v412 = vld [vmem:[#allocation4 + $0x20] sm:$0xff]
        %v413 = vld [vmem:[#allocation4 + $0x28] sm:$0xff]
        %v414 = vld [vmem:[#allocation4 + $0x30] sm:$0xff]
        %v415 = vld [vmem:[#allocation4 + $0x38] sm:$0xff]
        %v416 = vld [vmem:[#allocation4 + $0x40] sm:$0xff]
        %v417 = vld [vmem:[#allocation4 + $0x48] sm:$0xff]
        %v418 = vld [vmem:[#allocation4 + $0x50] sm:$0xff]
        %v419 = vld [vmem:[#allocation4 + $0x58] sm:$0xff]
        %v420 = vld [vmem:[#allocation4 + $0x60] sm:$0xff]
        %v421 = vld [vmem:[#allocation4 + $0x68] sm:$0xff]
        %v422 = vld [vmem:[#allocation4 + $0x70] sm:$0xff]
        %v423 = vld [vmem:[#allocation4 + $0x78] sm:$0xff]
        %v424 = vld [vmem:[#allocation4 + $0x80] sm:$0xff]
        %v425 = vld [vmem:[#allocation4 + $0x88] sm:$0xff]
        %v426 = vld [vmem:[#allocation4 + $0x90] sm:$0xff]
        %v427 = vld [vmem:[#allocation4 + $0x98] sm:$0xff]
        %v428 = vld [vmem:[#allocation4 + $0xa0] sm:$0xff]
        %v429 = vld [vmem:[#allocation4 + $0xa8] sm:$0xff]
        %v430 = vld [vmem:[#allocation4 + $0xb0] sm:$0xff]
        %v431 = vld [vmem:[#allocation4 + $0xb8] sm:$0xff]
        %v432 = vld [vmem:[#allocation4 + $0xc0] sm:$0xff]
        %v433 = vld [vmem:[#allocation4 + $0xc8] sm:$0xff]
        %v434 = vld [vmem:[#allocation4 + $0xd0] sm:$0xff]
        %v435 = vld [vmem:[#allocation4 + $0xd8] sm:$0xff]
        %v436 = vld [vmem:[#allocation4 + $0xe0] sm:$0xff]
        %v437 = vld [vmem:[#allocation4 + $0xe8] sm:$0xff]
        %v438 = vld [vmem:[#allocation4 + $0xf0] sm:$0xff]
        %v439 = vld [vmem:[#allocation4 + $0xf8] sm:$0xff]
        %v440 = vld [vmem:[#allocation4 + $0x100] sm:$0xff]
        %v441 = vld [vmem:[#allocation4 + $0x108] sm:$0xff]
        %v442 = vld [vmem:[#allocation4 + $0x110] sm:$0xff]
        %v443 = vld [vmem:[#allocation4 + $0x118] sm:$0xff]
        %v444 = vld [vmem:[#allocation4 + $0x120] sm:$0xff]
        %v445 = vld [vmem:[#allocation4 + $0x128] sm:$0xff]
        %v446 = vld [vmem:[#allocation4 + $0x130] sm:$0xff]
        %v447 = vld [vmem:[#allocation4 + $0x138] sm:$0xff]
        %v448 = vld [vmem:[%s3] sm:$0x3]
        %v450 = vperm.slane %v407, 0
        %v451 = vperm.slane %v407, 1
        %v454 = vperm.slane %v448, 0
        %v455 = vperm.slane %v448, 1
        %v458 = vsel %vm385, %v451, 0
        %460 = vmatpush.msra.mxu0 %v438
        %461 = vmatpush.msra.mxu0 %v436
        %462 = vmatpush.msra.mxu0 %v434
        %463 = vmatpush.msra.mxu0 %v432
        %464 = vmatpush.msra.mxu0 %v430
        %465 = vmatpush.msra.mxu0 %v428
        %466 = vmatpush.msra.mxu0 %v426
        %467 = vmatpush.msra.mxu0 %v424
        %468 = vmatpush.msra.mxu0 %v422
        %469 = vmatpush.msra.mxu0 %v420
        %470 = vmatpush.msra.mxu0 %v418
        %471 = vmatpush.msra.mxu0 %v416
        %472 = vmatpush.msra.mxu0 %v414
        %473 = vmatpush.msra.mxu0 %v412
        %474 = vmatpush.msra.mxu0 %v410
        %475 = vmatpush.msra.mxu0 %v408
        %476 = vmatmul.f32.gmra.mxu0 %v450
        %v477 = vpop.f32.mrf.mxu0
        %v478 = vadd.f32 %v454, %v477
        %479 = vdwg.mxu0
        %480 = vmatpush.msra.mxu0 0.0
        %481 = vmatpush.msra.mxu0 0.0
        %482 = vmatpush.msra.mxu0 0.0
        %483 = vmatpush.msra.mxu0 0.0
        %484 = vmatpush.msra.mxu0 0.0
        %485 = vmatpush.msra.mxu0 0.0
        %486 = vmatpush.msra.mxu0 0.0
        %487 = vmatpush.msra.mxu0 0.0
        %488 = vmatpush.msra.mxu0 0.0
        %489 = vmatpush.msra.mxu0 0.0
        %490 = vmatpush.msra.mxu0 0.0
        %491 = vmatpush.msra.mxu0 0.0
        %492 = vmatpush.msra.mxu0 %v446
        %493 = vmatpush.msra.mxu0 %v444
        %494 = vmatpush.msra.mxu0 %v442
        %495 = vmatpush.msra.mxu0 %v440
        %496 = vmatmul.f32.gmra.mxu0 %v458
        %v497 = vpop.f32.mrf.mxu0
        %v498 = vadd.f32 %v478, %v497
        %499 = vdwg.mxu0
        %500 = vmatpush.msra.mxu0 %v439
        %501 = vmatpush.msra.mxu0 %v437
        %502 = vmatpush.msra.mxu0 %v435
        %503 = vmatpush.msra.mxu0 %v433
        %504 = vmatpush.msra.mxu0 %v431
        %505 = vmatpush.msra.mxu0 %v429
        %506 = vmatpush.msra.mxu0 %v427
        %507 = vmatpush.msra.mxu0 %v425
        %508 = vmatpush.msra.mxu0 %v423
        %509 = vmatpush.msra.mxu0 %v421
        %510 = vmatpush.msra.mxu0 %v419
        %511 = vmatpush.msra.mxu0 %v417
        %512 = vmatpush.msra.mxu0 %v415
        %513 = vmatpush.msra.mxu0 %v413
        %514 = vmatpush.msra.mxu0 %v411
        %515 = vmatpush.msra.mxu0 %v409
        %516 = vmatmul.f32.gmra.mxu0 %v450
        %v517 = vpop.f32.mrf.mxu0
        %v518 = vadd.f32 %v455, %v517
        %519 = vdwg.mxu0
        %520 = vmatpush.msra.mxu0 0.0
        %521 = vmatpush.msra.mxu0 0.0
        %522 = vmatpush.msra.mxu0 0.0
        %523 = vmatpush.msra.mxu0 0.0
        %524 = vmatpush.msra.mxu0 0.0
        %525 = vmatpush.msra.mxu0 0.0
        %526 = vmatpush.msra.mxu0 0.0
        %527 = vmatpush.msra.mxu0 0.0
        %528 = vmatpush.msra.mxu0 0.0
        %529 = vmatpush.msra.mxu0 0.0
        %530 = vmatpush.msra.mxu0 0.0
        %531 = vmatpush.msra.mxu0 0.0
        %532 = vmatpush.msra.mxu0 %v447
        %533 = vmatpush.msra.mxu0 %v445
        %534 = vmatpush.msra.mxu0 %v443
        %535 = vmatpush.msra.mxu0 %v441
        %536 = vmatmul.f32.gmra.mxu0 %v458
        %v537 = vpop.f32.mrf.mxu0
        %v538 = vadd.f32 %v518, %v537
        %539 = vdwg.mxu0
        %v540 = vld [vmem:[%s1] sm:$0xf]
        %v541 = vld [vmem:[%s1 + $0x4] sm:$0xf]
        %v542 = vld [vmem:[%s1 + $0x8] sm:$0xf]
        %v543 = vld [vmem:[%s1 + $0xc] sm:$0xf]
        %v544 = vperm.slane %v498, 0
        %v545 = vmul.f32 %v540, %v544
        %v546 = vmul.f32 %v541, %v544
        %v547 = vmul.f32 %v542, %v544
        %v548 = vmul.f32 %v543, %v544
        %s549 = scalar_lea.vmem [#allocation2], 8
        %vm550 = vcmask 257024
        %551 = vst.msk [vmem:[%s549 + $0x1] sm:$0xf] %vm550, %v545
        %552 = vst.msk [vmem:[%s549 + $0x9] sm:$0xf] %vm550, %v546
        %553 = vst.msk [vmem:[%s549 + $0x11] sm:$0xf] %vm550, %v547
        %554 = vst.msk [vmem:[%s549 + $0x19] sm:$0xf] %vm550, %v548
        %v555 = vld [vmem:[#allocation2] sm:$0xf]
        %v556 = vld [vmem:[#allocation2 + $0x8] sm:$0xf]
        %v557 = vld [vmem:[#allocation2 + $0x10] sm:$0xf]
        %v558 = vld [vmem:[#allocation2 + $0x18] sm:$0xf]
        %v559 = vld [vmem:[#allocation6] sm:$0xff]
        %v560 = vld [vmem:[#allocation6 + $0x8] sm:$0xff]
        %v561 = vld [vmem:[#allocation6 + $0x10] sm:$0xff]
        %v562 = vld [vmem:[#allocation6 + $0x18] sm:$0xff]
        %v563 = vld [vmem:[#allocation2 + $0x1] sm:$0xf]
        %v564 = vld [vmem:[#allocation2 + $0x9] sm:$0xf]
        %v565 = vld [vmem:[#allocation2 + $0x11] sm:$0xf]
        %v566 = vld [vmem:[#allocation2 + $0x19] sm:$0xf]
        %s567 = scalar_lea.vmem [#allocation6], 32
        %v568 = vld [vmem:[%s567] sm:$0xff]
        %v569 = vld [vmem:[%s567 + $0x8] sm:$0xff]
        %v570 = vld [vmem:[%s567 + $0x10] sm:$0xff]
        %v571 = vld [vmem:[%s567 + $0x18] sm:$0xff]
        %576 = vst [vmem:[#allocation1] ss:$2 sm:$0xff] %v563
        %s577 = scalar_lea.vmem [#allocation1], 1
        %578 = vst [vmem:[%s577] ss:$2 sm:$0xff] %v564
        %s579 = scalar_lea.vmem [#allocation1], 16
        %580 = vst [vmem:[%s579] ss:$2 sm:$0xff] %v565
        %s581 = scalar_lea.vmem [#allocation1], 17
        %582 = vst [vmem:[%s581] ss:$2 sm:$0xff] %v566
        %v583 = vld.sshfl [vmem:[#allocation1] sm:$0xff pattern:$0x75316420]
        %v584 = vld.sshfl [vmem:[#allocation1 + $0x10] sm:$0xff pattern:$0x75316420]
        %v585 = vsel %vm385, %v583, 0
        %v587 = vsel %vm385, %v584, 0
        %589 = vmatpush.msra.mxu0 0.0
        %590 = vmatpush.msra.mxu0 0.0
        %591 = vmatpush.msra.mxu0 0.0
        %592 = vmatpush.msra.mxu0 0.0
        %593 = vmatpush.msra.mxu0 0.0
        %594 = vmatpush.msra.mxu0 0.0
        %595 = vmatpush.msra.mxu0 0.0
        %596 = vmatpush.msra.mxu0 0.0
        %597 = vmatpush.msra.mxu0 0.0
        %598 = vmatpush.msra.mxu0 0.0
        %599 = vmatpush.msra.mxu0 0.0
        %600 = vmatpush.msra.mxu0 0.0
        %601 = vmatpush.msra.mxu0 %v571
        %602 = vmatpush.msra.mxu0 %v570
        %603 = vmatpush.msra.mxu0 %v569
        %604 = vmatpush.msra.mxu0 %v568
        %605 = vmatmul.f32.gmra.mxu0 %v585
        %v606 = vpop.f32.mrf.mxu0
        %v607 = vadd.f32 0.0, %v606
        %608 = vmatmul.f32.gmra.mxu0 %v587
        %v609 = vpop.f32.mrf.mxu0
        %v610 = vadd.f32 0.0, %v609
        %611 = vdwg.mxu0
        %616 = vst [vmem:[#allocation1] ss:$2 sm:$0xff] %v555
        %s617 = scalar_lea.vmem [#allocation1], 1
        %618 = vst [vmem:[%s617] ss:$2 sm:$0xff] %v556
        %s619 = scalar_lea.vmem [#allocation1], 16
        %620 = vst [vmem:[%s619] ss:$2 sm:$0xff] %v557
        %s621 = scalar_lea.vmem [#allocation1], 17
        %622 = vst [vmem:[%s621] ss:$2 sm:$0xff] %v558
        %v623 = vld.sshfl [vmem:[#allocation1] sm:$0xff pattern:$0x75316420]
        %v624 = vld.sshfl [vmem:[#allocation1 + $0x10] sm:$0xff pattern:$0x75316420]
        %v625 = vsel %vm385, %v623, 0
        %v627 = vsel %vm385, %v624, 0
        %629 = vmatpush.msra.mxu0 0.0
        %630 = vmatpush.msra.mxu0 0.0
        %631 = vmatpush.msra.mxu0 0.0
        %632 = vmatpush.msra.mxu0 0.0
        %633 = vmatpush.msra.mxu0 0.0
        %634 = vmatpush.msra.mxu0 0.0
        %635 = vmatpush.msra.mxu0 0.0
        %636 = vmatpush.msra.mxu0 0.0
        %637 = vmatpush.msra.mxu0 0.0
        %638 = vmatpush.msra.mxu0 0.0
        %639 = vmatpush.msra.mxu0 0.0
        %640 = vmatpush.msra.mxu0 0.0
        %641 = vmatpush.msra.mxu0 %v562
        %642 = vmatpush.msra.mxu0 %v561
        %643 = vmatpush.msra.mxu0 %v560
        %644 = vmatpush.msra.mxu0 %v559
        %645 = vmatmul.f32.gmra.mxu0 %v625
        %v646 = vpop.f32.mrf.mxu0
        %v647 = vadd.f32 %v607, %v646
        %648 = vmatmul.f32.gmra.mxu0 %v627
        %v649 = vpop.f32.mrf.mxu0
        %v650 = vadd.f32 %v610, %v649
        %651 = vdwg.mxu0
        %v652 = vld [vmem:[#allocation2 + $0x2] sm:$0xf]
        %v653 = vld [vmem:[#allocation2 + $0xa] sm:$0xf]
        %v654 = vld [vmem:[#allocation2 + $0x12] sm:$0xf]
        %v655 = vld [vmem:[#allocation2 + $0x1a] sm:$0xf]
        %s656 = scalar_lea.vmem [#allocation6], 64
        %v657 = vld [vmem:[%s656] sm:$0xff]
        %v658 = vld [vmem:[%s656 + $0x8] sm:$0xff]
        %v659 = vld [vmem:[%s656 + $0x10] sm:$0xff]
        %v660 = vld [vmem:[%s656 + $0x18] sm:$0xff]
        %665 = vst [vmem:[#allocation1] ss:$2 sm:$0xff] %v652
        %s666 = scalar_lea.vmem [#allocation1], 1
        %667 = vst [vmem:[%s666] ss:$2 sm:$0xff] %v653
        %s668 = scalar_lea.vmem [#allocation1], 16
        %669 = vst [vmem:[%s668] ss:$2 sm:$0xff] %v654
        %s670 = scalar_lea.vmem [#allocation1], 17
        %671 = vst [vmem:[%s670] ss:$2 sm:$0xff] %v655
        %v672 = vld.sshfl [vmem:[#allocation1] sm:$0xff pattern:$0x75316420]
        %v673 = vld.sshfl [vmem:[#allocation1 + $0x10] sm:$0xff pattern:$0x75316420]
        %v674 = vsel %vm385, %v672, 0
        %v676 = vsel %vm385, %v673, 0
        %678 = vmatpush.msra.mxu0 0.0
        %679 = vmatpush.msra.mxu0 0.0
        %680 = vmatpush.msra.mxu0 0.0
        %681 = vmatpush.msra.mxu0 0.0
        %682 = vmatpush.msra.mxu0 0.0
        %683 = vmatpush.msra.mxu0 0.0
        %684 = vmatpush.msra.mxu0 0.0
        %685 = vmatpush.msra.mxu0 0.0
        %686 = vmatpush.msra.mxu0 0.0
        %687 = vmatpush.msra.mxu0 0.0
        %688 = vmatpush.msra.mxu0 0.0
        %689 = vmatpush.msra.mxu0 0.0
        %690 = vmatpush.msra.mxu0 %v660
        %691 = vmatpush.msra.mxu0 %v659
        %692 = vmatpush.msra.mxu0 %v658
        %693 = vmatpush.msra.mxu0 %v657
        %694 = vmatmul.f32.gmra.mxu0 %v674
        %v695 = vpop.f32.mrf.mxu0
        %v696 = vadd.f32 0.0, %v695
        %697 = vmatmul.f32.gmra.mxu0 %v676
        %v698 = vpop.f32.mrf.mxu0
        %v699 = vadd.f32 0.0, %v698
        %700 = vdwg.mxu0
        %v701 = vadd.f32 %v647, %v696
        %v702 = vadd.f32 %v650, %v699
        %v703 = vld [vmem:[%s549] sm:$0xf]
        %v704 = vld [vmem:[%s549 + $0x8] sm:$0xf]
        %v705 = vld [vmem:[%s549 + $0x10] sm:$0xf]
        %v706 = vld [vmem:[%s549 + $0x18] sm:$0xf]
        %s707 = scalar_lea.vmem [#allocation6], 96
        %v708 = vld [vmem:[%s707] sm:$0xff]
        %v709 = vld [vmem:[%s707 + $0x8] sm:$0xff]
        %v710 = vld [vmem:[%s707 + $0x10] sm:$0xff]
        %v711 = vld [vmem:[%s707 + $0x18] sm:$0xff]
        %716 = vst [vmem:[#allocation1] ss:$2 sm:$0xff] %v703
        %s717 = scalar_lea.vmem [#allocation1], 1
        %718 = vst [vmem:[%s717] ss:$2 sm:$0xff] %v704
        %s719 = scalar_lea.vmem [#allocation1], 16
        %720 = vst [vmem:[%s719] ss:$2 sm:$0xff] %v705
        %s721 = scalar_lea.vmem [#allocation1], 17
        %722 = vst [vmem:[%s721] ss:$2 sm:$0xff] %v706
        %v723 = vld.sshfl [vmem:[#allocation1] sm:$0xff pattern:$0x75316420]
        %v724 = vld.sshfl [vmem:[#allocation1 + $0x10] sm:$0xff pattern:$0x75316420]
        %v725 = vsel %vm385, %v723, 0
        %v727 = vsel %vm385, %v724, 0
        %729 = vmatpush.msra.mxu0 0.0
        %730 = vmatpush.msra.mxu0 0.0
        %731 = vmatpush.msra.mxu0 0.0
        %732 = vmatpush.msra.mxu0 0.0
        %733 = vmatpush.msra.mxu0 0.0
        %734 = vmatpush.msra.mxu0 0.0
        %735 = vmatpush.msra.mxu0 0.0
        %736 = vmatpush.msra.mxu0 0.0
        %737 = vmatpush.msra.mxu0 0.0
        %738 = vmatpush.msra.mxu0 0.0
        %739 = vmatpush.msra.mxu0 0.0
        %740 = vmatpush.msra.mxu0 0.0
        %741 = vmatpush.msra.mxu0 %v711
        %742 = vmatpush.msra.mxu0 %v710
        %743 = vmatpush.msra.mxu0 %v709
        %744 = vmatpush.msra.mxu0 %v708
        %745 = vmatmul.f32.gmra.mxu0 %v725
        %v746 = vpop.f32.mrf.mxu0
        %v747 = vadd.f32 0.0, %v746
        %748 = vmatmul.f32.gmra.mxu0 %v727
        %v749 = vpop.f32.mrf.mxu0
        %v750 = vadd.f32 0.0, %v749
        %751 = vdwg.mxu0
        %v752 = vadd.f32 %v701, %v747
        %v753 = vadd.f32 %v702, %v750
        %v754 = vld [vmem:[%s549 + $0x1] sm:$0xf]
        %v755 = vld [vmem:[%s549 + $0x9] sm:$0xf]
        %v756 = vld [vmem:[%s549 + $0x11] sm:$0xf]
        %v757 = vld [vmem:[%s549 + $0x19] sm:$0xf]
        %s758 = scalar_lea.vmem [#allocation6], 128
        %v759 = vld [vmem:[%s758] sm:$0xff]
        %v760 = vld [vmem:[%s758 + $0x8] sm:$0xff]
        %v761 = vld [vmem:[%s758 + $0x10] sm:$0xff]
        %v762 = vld [vmem:[%s758 + $0x18] sm:$0xff]
        %767 = vst [vmem:[#allocation1] ss:$2 sm:$0xff] %v754
        %s768 = scalar_lea.vmem [#allocation1], 1
        %769 = vst [vmem:[%s768] ss:$2 sm:$0xff] %v755
        %s770 = scalar_lea.vmem [#allocation1], 16
        %771 = vst [vmem:[%s770] ss:$2 sm:$0xff] %v756
        %s772 = scalar_lea.vmem [#allocation1], 17
        %773 = vst [vmem:[%s772] ss:$2 sm:$0xff] %v757
        %v774 = vld.sshfl [vmem:[#allocation1] sm:$0xff pattern:$0x75316420]
        %v775 = vld.sshfl [vmem:[#allocation1 + $0x10] sm:$0xff pattern:$0x75316420]
        %v776 = vsel %vm385, %v774, 0
        %v778 = vsel %vm385, %v775, 0
        %780 = vmatpush.msra.mxu0 0.0
        %781 = vmatpush.msra.mxu0 0.0
        %782 = vmatpush.msra.mxu0 0.0
        %783 = vmatpush.msra.mxu0 0.0
        %784 = vmatpush.msra.mxu0 0.0
        %785 = vmatpush.msra.mxu0 0.0
        %786 = vmatpush.msra.mxu0 0.0
        %787 = vmatpush.msra.mxu0 0.0
        %788 = vmatpush.msra.mxu0 0.0
        %789 = vmatpush.msra.mxu0 0.0
        %790 = vmatpush.msra.mxu0 0.0
        %791 = vmatpush.msra.mxu0 0.0
        %792 = vmatpush.msra.mxu0 %v762
        %793 = vmatpush.msra.mxu0 %v761
        %794 = vmatpush.msra.mxu0 %v760
        %795 = vmatpush.msra.mxu0 %v759
        %796 = vmatmul.f32.gmra.mxu0 %v776
        %v797 = vpop.f32.mrf.mxu0
        %v798 = vadd.f32 0.0, %v797
        %799 = vmatmul.f32.gmra.mxu0 %v778
        %v800 = vpop.f32.mrf.mxu0
        %v801 = vadd.f32 0.0, %v800
        %802 = vdwg.mxu0
        %v803 = vadd.f32 %v752, %v798
        %v804 = vadd.f32 %v753, %v801
        %v805 = vld [vmem:[%s549 + $0x2] sm:$0xf]
        %v806 = vld [vmem:[%s549 + $0xa] sm:$0xf]
        %v807 = vld [vmem:[%s549 + $0x12] sm:$0xf]
        %v808 = vld [vmem:[%s549 + $0x1a] sm:$0xf]
        %s809 = scalar_lea.vmem [#allocation6], 160
        %v810 = vld [vmem:[%s809] sm:$0xff]
        %v811 = vld [vmem:[%s809 + $0x8] sm:$0xff]
        %v812 = vld [vmem:[%s809 + $0x10] sm:$0xff]
        %v813 = vld [vmem:[%s809 + $0x18] sm:$0xff]
        %818 = vst [vmem:[#allocation1] ss:$2 sm:$0xff] %v805
        %s819 = scalar_lea.vmem [#allocation1], 1
        %820 = vst [vmem:[%s819] ss:$2 sm:$0xff] %v806
        %s821 = scalar_lea.vmem [#allocation1], 16
        %822 = vst [vmem:[%s821] ss:$2 sm:$0xff] %v807
        %s823 = scalar_lea.vmem [#allocation1], 17
        %824 = vst [vmem:[%s823] ss:$2 sm:$0xff] %v808
        %v825 = vld.sshfl [vmem:[#allocation1] sm:$0xff pattern:$0x75316420]
        %v826 = vld.sshfl [vmem:[#allocation1 + $0x10] sm:$0xff pattern:$0x75316420]
        %v827 = vsel %vm385, %v825, 0
        %v829 = vsel %vm385, %v826, 0
        %831 = vmatpush.msra.mxu0 0.0
        %832 = vmatpush.msra.mxu0 0.0
        %833 = vmatpush.msra.mxu0 0.0
        %834 = vmatpush.msra.mxu0 0.0
        %835 = vmatpush.msra.mxu0 0.0
        %836 = vmatpush.msra.mxu0 0.0
        %837 = vmatpush.msra.mxu0 0.0
        %838 = vmatpush.msra.mxu0 0.0
        %839 = vmatpush.msra.mxu0 0.0
        %840 = vmatpush.msra.mxu0 0.0
        %841 = vmatpush.msra.mxu0 0.0
        %842 = vmatpush.msra.mxu0 0.0
        %843 = vmatpush.msra.mxu0 %v813
        %844 = vmatpush.msra.mxu0 %v812
        %845 = vmatpush.msra.mxu0 %v811
        %846 = vmatpush.msra.mxu0 %v810
        %847 = vmatmul.f32.gmra.mxu0 %v827
        %v848 = vpop.f32.mrf.mxu0
        %v849 = vadd.f32 0.0, %v848
        %850 = vmatmul.f32.gmra.mxu0 %v829
        %v851 = vpop.f32.mrf.mxu0
        %v852 = vadd.f32 0.0, %v851
        %853 = vdwg.mxu0
        %v854 = vadd.f32 %v803, %v849
        %v855 = vadd.f32 %v804, %v852
        %s856 = scalar_lea.vmem [#allocation2], 16
        %v857 = vld [vmem:[%s856] sm:$0xf]
        %v858 = vld [vmem:[%s856 + $0x8] sm:$0xf]
        %v859 = vld [vmem:[%s856 + $0x10] sm:$0xf]
        %v860 = vld [vmem:[%s856 + $0x18] sm:$0xf]
        %s861 = scalar_lea.vmem [#allocation6], 192
        %v862 = vld [vmem:[%s861] sm:$0xff]
        %v863 = vld [vmem:[%s861 + $0x8] sm:$0xff]
        %v864 = vld [vmem:[%s861 + $0x10] sm:$0xff]
        %v865 = vld [vmem:[%s861 + $0x18] sm:$0xff]
        %870 = vst [vmem:[#allocation1] ss:$2 sm:$0xff] %v857
        %s871 = scalar_lea.vmem [#allocation1], 1
        %872 = vst [vmem:[%s871] ss:$2 sm:$0xff] %v858
        %s873 = scalar_lea.vmem [#allocation1], 16
        %874 = vst [vmem:[%s873] ss:$2 sm:$0xff] %v859
        %s875 = scalar_lea.vmem [#allocation1], 17
        %876 = vst [vmem:[%s875] ss:$2 sm:$0xff] %v860
        %v877 = vld.sshfl [vmem:[#allocation1] sm:$0xff pattern:$0x75316420]
        %v878 = vld.sshfl [vmem:[#allocation1 + $0x10] sm:$0xff pattern:$0x75316420]
        %v879 = vsel %vm385, %v877, 0
        %v881 = vsel %vm385, %v878, 0
        %883 = vmatpush.msra.mxu0 0.0
        %884 = vmatpush.msra.mxu0 0.0
        %885 = vmatpush.msra.mxu0 0.0
        %886 = vmatpush.msra.mxu0 0.0
        %887 = vmatpush.msra.mxu0 0.0
        %888 = vmatpush.msra.mxu0 0.0
        %889 = vmatpush.msra.mxu0 0.0
        %890 = vmatpush.msra.mxu0 0.0
        %891 = vmatpush.msra.mxu0 0.0
        %892 = vmatpush.msra.mxu0 0.0
        %893 = vmatpush.msra.mxu0 0.0
        %894 = vmatpush.msra.mxu0 0.0
        %895 = vmatpush.msra.mxu0 %v865
        %896 = vmatpush.msra.mxu0 %v864
        %897 = vmatpush.msra.mxu0 %v863
        %898 = vmatpush.msra.mxu0 %v862
        %899 = vmatmul.f32.gmra.mxu0 %v879
        %v900 = vpop.f32.mrf.mxu0
        %v901 = vadd.f32 0.0, %v900
        %902 = vmatmul.f32.gmra.mxu0 %v881
        %v903 = vpop.f32.mrf.mxu0
        %v904 = vadd.f32 0.0, %v903
        %905 = vdwg.mxu0
        %v906 = vadd.f32 %v854, %v901
        %v907 = vadd.f32 %v855, %v904
        %v908 = vld [vmem:[%s856 + $0x1] sm:$0xf]
        %v909 = vld [vmem:[%s856 + $0x9] sm:$0xf]
        %v910 = vld [vmem:[%s856 + $0x11] sm:$0xf]
        %v911 = vld [vmem:[%s856 + $0x19] sm:$0xf]
        %s912 = scalar_lea.vmem [#allocation6], 224
        %v913 = vld [vmem:[%s912] sm:$0xff]
        %v914 = vld [vmem:[%s912 + $0x8] sm:$0xff]
        %v915 = vld [vmem:[%s912 + $0x10] sm:$0xff]
        %v916 = vld [vmem:[%s912 + $0x18] sm:$0xff]
        %921 = vst [vmem:[#allocation1] ss:$2 sm:$0xff] %v908
        %s922 = scalar_lea.vmem [#allocation1], 1
        %923 = vst [vmem:[%s922] ss:$2 sm:$0xff] %v909
        %s924 = scalar_lea.vmem [#allocation1], 16
        %925 = vst [vmem:[%s924] ss:$2 sm:$0xff] %v910
        %s926 = scalar_lea.vmem [#allocation1], 17
        %927 = vst [vmem:[%s926] ss:$2 sm:$0xff] %v911
        %v928 = vld.sshfl [vmem:[#allocation1] sm:$0xff pattern:$0x75316420]
        %v929 = vld.sshfl [vmem:[#allocation1 + $0x10] sm:$0xff pattern:$0x75316420]
        %v930 = vsel %vm385, %v928, 0
        %v932 = vsel %vm385, %v929, 0
        %934 = vmatpush.msra.mxu0 0.0
        %935 = vmatpush.msra.mxu0 0.0
        %936 = vmatpush.msra.mxu0 0.0
        %937 = vmatpush.msra.mxu0 0.0
        %938 = vmatpush.msra.mxu0 0.0
        %939 = vmatpush.msra.mxu0 0.0
        %940 = vmatpush.msra.mxu0 0.0
        %941 = vmatpush.msra.mxu0 0.0
        %942 = vmatpush.msra.mxu0 0.0
        %943 = vmatpush.msra.mxu0 0.0
        %944 = vmatpush.msra.mxu0 0.0
        %945 = vmatpush.msra.mxu0 0.0
        %946 = vmatpush.msra.mxu0 %v916
        %947 = vmatpush.msra.mxu0 %v915
        %948 = vmatpush.msra.mxu0 %v914
        %949 = vmatpush.msra.mxu0 %v913
        %950 = vmatmul.f32.gmra.mxu0 %v930
        %v951 = vpop.f32.mrf.mxu0
        %v952 = vadd.f32 0.0, %v951
        %953 = vmatmul.f32.gmra.mxu0 %v932
        %v954 = vpop.f32.mrf.mxu0
        %v955 = vadd.f32 0.0, %v954
        %956 = vdwg.mxu0
        %v957 = vadd.f32 %v906, %v952
        %v958 = vadd.f32 %v907, %v955
        %v959 = vld [vmem:[%s856 + $0x2] sm:$0xf]
        %v960 = vld [vmem:[%s856 + $0xa] sm:$0xf]
        %v961 = vld [vmem:[%s856 + $0x12] sm:$0xf]
        %v962 = vld [vmem:[%s856 + $0x1a] sm:$0xf]
        %s963 = scalar_lea.vmem [#allocation6], 256
        %v964 = vld [vmem:[%s963] sm:$0xff]
        %v965 = vld [vmem:[%s963 + $0x8] sm:$0xff]
        %v966 = vld [vmem:[%s963 + $0x10] sm:$0xff]
        %v967 = vld [vmem:[%s963 + $0x18] sm:$0xff]
        %972 = vst [vmem:[#allocation1] ss:$2 sm:$0xff] %v959
        %s973 = scalar_lea.vmem [#allocation1], 1
        %974 = vst [vmem:[%s973] ss:$2 sm:$0xff] %v960
        %s975 = scalar_lea.vmem [#allocation1], 16
        %976 = vst [vmem:[%s975] ss:$2 sm:$0xff] %v961
        %s977 = scalar_lea.vmem [#allocation1], 17
        %978 = vst [vmem:[%s977] ss:$2 sm:$0xff] %v962
        %v979 = vld.sshfl [vmem:[#allocation1] sm:$0xff pattern:$0x75316420]
        %v980 = vld.sshfl [vmem:[#allocation1 + $0x10] sm:$0xff pattern:$0x75316420]
        %v981 = vsel %vm385, %v979, 0
        %v983 = vsel %vm385, %v980, 0
        %985 = vmatpush.msra.mxu0 0.0
        %986 = vmatpush.msra.mxu0 0.0
        %987 = vmatpush.msra.mxu0 0.0
        %988 = vmatpush.msra.mxu0 0.0
        %989 = vmatpush.msra.mxu0 0.0
        %990 = vmatpush.msra.mxu0 0.0
        %991 = vmatpush.msra.mxu0 0.0
        %992 = vmatpush.msra.mxu0 0.0
        %993 = vmatpush.msra.mxu0 0.0
        %994 = vmatpush.msra.mxu0 0.0
        %995 = vmatpush.msra.mxu0 0.0
        %996 = vmatpush.msra.mxu0 0.0
        %997 = vmatpush.msra.mxu0 %v967
        %998 = vmatpush.msra.mxu0 %v966
        %999 = vmatpush.msra.mxu0 %v965
        %1000 = vmatpush.msra.mxu0 %v964
        %1001 = vmatmul.f32.gmra.mxu0 %v981
        %v1002 = vpop.f32.mrf.mxu0
        %v1003 = vadd.f32 0.0, %v1002
        %1004 = vmatmul.f32.gmra.mxu0 %v983
        %v1005 = vpop.f32.mrf.mxu0
        %v1006 = vadd.f32 0.0, %v1005
        %1007 = vdwg.mxu0
        %v1008 = vadd.f32 %v957, %v1003
        %v1009 = vadd.f32 %v958, %v1006
        %v1010 = vmul.f32 %v498, %v498
        %v1011 = vld [vmem:[#allocation8] sm:$0xff]
        %v1012 = vld [vmem:[#allocation8 + $0x8] sm:$0xff]
        %v1013 = vld [vmem:[#allocation8 + $0x10] sm:$0xff]
        %v1014 = vld [vmem:[#allocation8 + $0x18] sm:$0xff]
        %v1016 = vsel %vm385, %v1010, 0
        %1018 = vmatpush.msra.mxu0 0.0
        %1019 = vmatpush.msra.mxu0 0.0
        %1020 = vmatpush.msra.mxu0 0.0
        %1021 = vmatpush.msra.mxu0 0.0
        %1022 = vmatpush.msra.mxu0 0.0
        %1023 = vmatpush.msra.mxu0 0.0
        %1024 = vmatpush.msra.mxu0 0.0
        %1025 = vmatpush.msra.mxu0 0.0
        %1026 = vmatpush.msra.mxu0 0.0
        %1027 = vmatpush.msra.mxu0 0.0
        %1028 = vmatpush.msra.mxu0 0.0
        %1029 = vmatpush.msra.mxu0 0.0
        %1030 = vmatpush.msra.mxu0 %v1014
        %1031 = vmatpush.msra.mxu0 %v1013
        %1032 = vmatpush.msra.mxu0 %v1012
        %1033 = vmatpush.msra.mxu0 %v1011
        %1034 = vmatmul.f32.gmra.mxu0 %v1016
        %v1035 = vpop.f32.mrf.mxu0
        %v1036 = vadd.f32 1e-08, %v1035
        %1037 = vdwg.mxu0
        %v1038 = vrsqrt.pop %v1036
        %v1039 = vmul.f32 %v1038, %v1036
        %v1040 = vmul.f32 %v1039, %v1038
        %v1041 = vmul.f32 0.5, %v1040
        %v1042 = vsub.f32 1.5, %v1041
        %v1043 = vmul.f32 %v1038, %v1042
        %vm1044 = vweird.f32 %v1036
        %vm1045 = vweird.f32 %v1038
        %vm1046 = vmor %vm1044, %vm1045
        %v1047 = vsel %vm1046, %v1038, %v1043
        %v1048 = vperm.slane %v1047, 0
        %v1049 = vmul.f32 %v1008, %v1048
        %v1050 = vmul.f32 %v1009, %v1048
        %v1051 = vld [vmem:[%s5] sm:$0x1]
        %v1053 = vperm.slane %v1051, 0
        %v1055 = vadd.f32 %v1049, %v1053
        %v1056 = vadd.f32 %v1050, %v1053
        %v1057 = vmul.f32 %v1055, 0.2
        %v1058 = vmul.f32 %v1056, 0.2
        %v1059 = vmax.f32 %v1055, %v1057
        %v1060 = vmax.f32 %v1056, %v1058
        %v1061 = vmul.f32 %v1059, 1.4142135
        %v1062 = vmul.f32 %v1060, 1.4142135
        %v1065 = vrot.slane %v1061, 4
        %v1066 = vrot.slane %v1062, 4
        %v1069 = vperm.slane %v1061, 0
        %v1070 = vperm.slane %v1065, 0
        %v1071 = vperm.slane %v1062, 0
        %v1072 = vperm.slane %v1066, 0
        %v1077 = vperm.slane %v1061, 1
        %v1078 = vperm.slane %v1065, 1
        %v1079 = vperm.slane %v1062, 1
        %v1080 = vperm.slane %v1066, 1
        %v1085 = vperm.slane %v1061, 2
        %v1086 = vperm.slane %v1065, 2
        %v1087 = vperm.slane %v1062, 2
        %v1088 = vperm.slane %v1066, 2
        %v1093 = vperm.slane %v1061, 3
        %v1094 = vperm.slane %v1065, 3
        %v1095 = vperm.slane %v1062, 3
        %v1096 = vperm.slane %v1066, 3
        %vm1101 = vcmask 1040384
        %v1102 = vsel %vm1101, %v1061, %v1069
        %v1103 = vsel %vm1101, %v1065, %v1070
        %v1104 = vsel %vm1101, %v1062, %v1071
        %v1105 = vsel %vm1101, %v1066, %v1072
        %vm1106 = vcmask 1041408
        %v1107 = vsel %vm1106, %v1102, %v1077
        %v1108 = vsel %vm1106, %v1103, %v1078
        %v1109 = vsel %vm1106, %v1104, %v1079
        %v1110 = vsel %vm1106, %v1105, %v1080
        %vm1111 = vcmask 1042432
        %v1112 = vsel %vm1111, %v1107, %v1077
        %v1113 = vsel %vm1111, %v1108, %v1078
        %v1114 = vsel %vm1111, %v1109, %v1079
        %v1115 = vsel %vm1111, %v1110, %v1080
        %vm1116 = vcmask 1043456
        %v1117 = vsel %vm1116, %v1112, %v1085
        %v1118 = vsel %vm1116, %v1113, %v1086
        %v1119 = vsel %vm1116, %v1114, %v1087
        %v1120 = vsel %vm1116, %v1115, %v1088
        %vm1121 = vcmask 1044480
        %v1122 = vsel %vm1121, %v1117, %v1085
        %v1123 = vsel %vm1121, %v1118, %v1086
        %v1124 = vsel %vm1121, %v1119, %v1087
        %v1125 = vsel %vm1121, %v1120, %v1088
        %vm1126 = vcmask 1045504
        %v1127 = vsel %vm1126, %v1122, %v1093
        %v1128 = vsel %vm1126, %v1123, %v1094
        %v1129 = vsel %vm1126, %v1124, %v1095
        %v1130 = vsel %vm1126, %v1125, %v1096
        %vm1131 = vcmask 1046528
        %v1132 = vsel %vm1131, %v1127, %v1093
        %v1133 = vsel %vm1131, %v1128, %v1094
        %v1134 = vsel %vm1131, %v1129, %v1095
        %v1135 = vsel %vm1131, %v1130, %v1096
        %1137 = vrot.lane.b32.xlu0 %v544, 96
        %v1138 = vpop.permute.xlu0 %1137
        %v1140 = vmul.f32 %v1132, %v1138
        %v1141 = vmul.f32 %v1133, %v1138
        %v1142 = vmul.f32 %v1134, %v1138
        %v1143 = vmul.f32 %v1135, %v1138
        %v1144 = vld [vmem:[%s7] sm:$0x7]
        %v1145 = vld [vmem:[%s8] sm:$0x7]
        %1147 = vset.pattern.permute.xlu0 0
        %1148 = vperm.xlu0 %1147, %v1145
        %v1149 = vpop.permute.xlu0 %1148
        %v1152 = vsel %vm385, %v1144, 0
        %v1155 = vsel %vm385, %v1140, 0
        %v1158 = vsel %vm385, %v1141, 0
        %v1161 = vsel %vm385, %v1142, 0
        %v1164 = vsel %vm385, %v1143, 0
        %1166 = vmatpush.xpose.msra.mxu0 0.0
        %1167 = vmatpush.xpose.msra.mxu0 0.0
        %1168 = vmatpush.xpose.msra.mxu0 0.0
        %1169 = vmatpush.xpose.msra.mxu0 0.0
        %1170 = vmatpush.xpose.msra.mxu0 0.0
        %1171 = vmatpush.xpose.msra.mxu0 0.0
        %1172 = vmatpush.xpose.msra.mxu0 0.0
        %1173 = vmatpush.xpose.msra.mxu0 0.0
        %1174 = vmatpush.xpose.msra.mxu0 %v1164
        %1175 = vmatpush.xpose.msra.mxu0 %v1164
        %1176 = vmatpush.xpose.msra.mxu0 %v1161
        %1177 = vmatpush.xpose.msra.mxu0 %v1161
        %1178 = vmatpush.xpose.msra.mxu0 %v1158
        %1179 = vmatpush.xpose.msra.mxu0 %v1158
        %1180 = vmatpush.xpose.msra.mxu0 %v1155
        %1181 = vmatpush.xpose.msra.mxu0 %v1155
        %1182 = vmatmul.f32.gmra.mxu0 %v1152
        %v1183 = vpop.f32.mrf.mxu0
        %v1184 = vadd.f32 %v1149, %v1183
        %1185 = vdwg.mxu0
        %1186 = vrot.lane.b32.xlu0 %v544, 64
        %v1187 = vpop.permute.xlu0 %1186
        %v1189 = vmul.f32 %v1132, %v1187
        %v1190 = vmul.f32 %v1133, %v1187
        %v1191 = vmul.f32 %v1134, %v1187
        %v1192 = vmul.f32 %v1135, %v1187
        %s1193 = scalar_lea.vmem [#allocation3], 16
        %1194 = vst.msk [vmem:[%s1193 + $0x1] sm:$0xff] %vm385, %v1189
        %1195 = vst.msk [vmem:[%s1193 + $0x11] sm:$0xff] %vm385, %v1189
        %1196 = vst.msk [vmem:[%s1193 + $0x21] sm:$0xff] %vm385, %v1190
        %1197 = vst.msk [vmem:[%s1193 + $0x31] sm:$0xff] %vm385, %v1190
        %1198 = vst.msk [vmem:[%s1193 + $0x41] sm:$0xff] %vm385, %v1191
        %1199 = vst.msk [vmem:[%s1193 + $0x51] sm:$0xff] %vm385, %v1191
        %1200 = vst.msk [vmem:[%s1193 + $0x61] sm:$0xff] %vm385, %v1192
        %1201 = vst.msk [vmem:[%s1193 + $0x71] sm:$0xff] %vm385, %v1192
        %v1202 = vld [vmem:[#allocation3] sm:$0xff]
        %v1203 = vld [vmem:[#allocation3 + $0x10] sm:$0xff]
        %v1204 = vld [vmem:[#allocation3 + $0x20] sm:$0xff]
        %v1205 = vld [vmem:[#allocation3 + $0x30] sm:$0xff]
        %v1206 = vld [vmem:[#allocation3 + $0x40] sm:$0xff]
        %v1207 = vld [vmem:[#allocation3 + $0x50] sm:$0xff]
        %v1208 = vld [vmem:[#allocation3 + $0x60] sm:$0xff]
        %v1209 = vld [vmem:[#allocation3 + $0x70] sm:$0xff]
        %s1210 = scalar_lea.vmem [#allocation6], 288
        %v1211 = vld [vmem:[%s1210] sm:$0xff]
        %v1212 = vld [vmem:[%s1210 + $0x8] sm:$0xff]
        %v1213 = vld [vmem:[%s1210 + $0x10] sm:$0xff]
        %v1214 = vld [vmem:[%s1210 + $0x18] sm:$0xff]
        %v1215 = vld [vmem:[#allocation3 + $0x1] sm:$0xff]
        %v1216 = vld [vmem:[#allocation3 + $0x11] sm:$0xff]
        %v1217 = vld [vmem:[#allocation3 + $0x21] sm:$0xff]
        %v1218 = vld [vmem:[#allocation3 + $0x31] sm:$0xff]
        %v1219 = vld [vmem:[#allocation3 + $0x41] sm:$0xff]
        %v1220 = vld [vmem:[#allocation3 + $0x51] sm:$0xff]
        %v1221 = vld [vmem:[#allocation3 + $0x61] sm:$0xff]
        %v1222 = vld [vmem:[#allocation3 + $0x71] sm:$0xff]
        %s1223 = scalar_lea.vmem [#allocation6], 320
        %v1224 = vld [vmem:[%s1223] sm:$0xff]
        %v1225 = vld [vmem:[%s1223 + $0x8] sm:$0xff]
        %v1226 = vld [vmem:[%s1223 + $0x10] sm:$0xff]
        %v1227 = vld [vmem:[%s1223 + $0x18] sm:$0xff]
        %v1229 = vsel %vm385, %v1215, 0
        %v1232 = vsel %vm385, %v1216, 0
        %v1235 = vsel %vm385, %v1217, 0
        %v1238 = vsel %vm385, %v1218, 0
        %v1241 = vsel %vm385, %v1219, 0
        %v1244 = vsel %vm385, %v1220, 0
        %v1247 = vsel %vm385, %v1221, 0
        %v1250 = vsel %vm385, %v1222, 0
        %1252 = vmatpush.msra.mxu0 0.0
        %1253 = vmatpush.msra.mxu0 0.0
        %1254 = vmatpush.msra.mxu0 0.0
        %1255 = vmatpush.msra.mxu0 0.0
        %1256 = vmatpush.msra.mxu0 0.0
        %1257 = vmatpush.msra.mxu0 0.0
        %1258 = vmatpush.msra.mxu0 0.0
        %1259 = vmatpush.msra.mxu0 0.0
        %1260 = vmatpush.msra.mxu0 0.0
        %1261 = vmatpush.msra.mxu0 0.0
        %1262 = vmatpush.msra.mxu0 0.0
        %1263 = vmatpush.msra.mxu0 0.0
        %1264 = vmatpush.msra.mxu0 %v1227
        %1265 = vmatpush.msra.mxu0 %v1226
        %1266 = vmatpush.msra.mxu0 %v1225
        %1267 = vmatpush.msra.mxu0 %v1224
        %1268 = vmatmul.f32.gmra.mxu0 %v1229
        %v1269 = vpop.f32.mrf.mxu0
        %v1270 = vadd.f32 0.0, %v1269
        %1271 = vmatmul.f32.gmra.mxu0 %v1232
        %v1272 = vpop.f32.mrf.mxu0
        %v1273 = vadd.f32 0.0, %v1272
        %1274 = vmatmul.f32.gmra.mxu0 %v1235
        %v1275 = vpop.f32.mrf.mxu0
        %v1276 = vadd.f32 0.0, %v1275
        %1277 = vmatmul.f32.gmra.mxu0 %v1238
        %v1278 = vpop.f32.mrf.mxu0
        %v1279 = vadd.f32 0.0, %v1278
        %1280 = vmatmul.f32.gmra.mxu0 %v1241
        %v1281 = vpop.f32.mrf.mxu0
        %v1282 = vadd.f32 0.0, %v1281
        %1283 = vmatmul.f32.gmra.mxu0 %v1244
        %v1284 = vpop.f32.mrf.mxu0
        %v1285 = vadd.f32 0.0, %v1284
        %1286 = vmatmul.f32.gmra.mxu0 %v1247
        %v1287 = vpop.f32.mrf.mxu0
        %v1288 = vadd.f32 0.0, %v1287
        %1289 = vmatmul.f32.gmra.mxu0 %v1250
        %v1290 = vpop.f32.mrf.mxu0
        %v1291 = vadd.f32 0.0, %v1290
        %1292 = vdwg.mxu0
        %v1294 = vsel %vm385, %v1202, 0
        %v1297 = vsel %vm385, %v1203, 0
        %v1300 = vsel %vm385, %v1204, 0
        %v1303 = vsel %vm385, %v1205, 0
        %v1306 = vsel %vm385, %v1206, 0
        %v1309 = vsel %vm385, %v1207, 0
        %v1312 = vsel %vm385, %v1208, 0
        %v1315 = vsel %vm385, %v1209, 0
        %1317 = vmatpush.msra.mxu0 0.0
        %1318 = vmatpush.msra.mxu0 0.0
        %1319 = vmatpush.msra.mxu0 0.0
        %1320 = vmatpush.msra.mxu0 0.0
        %1321 = vmatpush.msra.mxu0 0.0
        %1322 = vmatpush.msra.mxu0 0.0
        %1323 = vmatpush.msra.mxu0 0.0
        %1324 = vmatpush.msra.mxu0 0.0
        %1325 = vmatpush.msra.mxu0 0.0
        %1326 = vmatpush.msra.mxu0 0.0
        %1327 = vmatpush.msra.mxu0 0.0
        %1328 = vmatpush.msra.mxu0 0.0
        %1329 = vmatpush.msra.mxu0 %v1214
        %1330 = vmatpush.msra.mxu0 %v1213
        %1331 = vmatpush.msra.mxu0 %v1212
        %1332 = vmatpush.msra.mxu0 %v1211
        %1333 = vmatmul.f32.gmra.mxu0 %v1294
        %v1334 = vpop.f32.mrf.mxu0
        %v1335 = vadd.f32 %v1270, %v1334
        %1336 = vmatmul.f32.gmra.mxu0 %v1297
        %v1337 = vpop.f32.mrf.mxu0
        %v1338 = vadd.f32 %v1273, %v1337
        %1339 = vmatmul.f32.gmra.mxu0 %v1300
        %v1340 = vpop.f32.mrf.mxu0
        %v1341 = vadd.f32 %v1276, %v1340
        %1342 = vmatmul.f32.gmra.mxu0 %v1303
        %v1343 = vpop.f32.mrf.mxu0
        %v1344 = vadd.f32 %v1279, %v1343
        %1345 = vmatmul.f32.gmra.mxu0 %v1306
        %v1346 = vpop.f32.mrf.mxu0
        %v1347 = vadd.f32 %v1282, %v1346
        %1348 = vmatmul.f32.gmra.mxu0 %v1309
        %v1349 = vpop.f32.mrf.mxu0
        %v1350 = vadd.f32 %v1285, %v1349
        %1351 = vmatmul.f32.gmra.mxu0 %v1312
        %v1352 = vpop.f32.mrf.mxu0
        %v1353 = vadd.f32 %v1288, %v1352
        %1354 = vmatmul.f32.gmra.mxu0 %v1315
        %v1355 = vpop.f32.mrf.mxu0
        %v1356 = vadd.f32 %v1291, %v1355
        %1357 = vdwg.mxu0
        %v1358 = vld [vmem:[#allocation3 + $0x2] sm:$0xff]
        %v1359 = vld [vmem:[#allocation3 + $0x12] sm:$0xff]
        %v1360 = vld [vmem:[#allocation3 + $0x22] sm:$0xff]
        %v1361 = vld [vmem:[#allocation3 + $0x32] sm:$0xff]
        %v1362 = vld [vmem:[#allocation3 + $0x42] sm:$0xff]
        %v1363 = vld [vmem:[#allocation3 + $0x52] sm:$0xff]
        %v1364 = vld [vmem:[#allocation3 + $0x62] sm:$0xff]
        %v1365 = vld [vmem:[#allocation3 + $0x72] sm:$0xff]
        %s1366 = scalar_lea.vmem [#allocation6], 352
        %v1367 = vld [vmem:[%s1366] sm:$0xff]
        %v1368 = vld [vmem:[%s1366 + $0x8] sm:$0xff]
        %v1369 = vld [vmem:[%s1366 + $0x10] sm:$0xff]
        %v1370 = vld [vmem:[%s1366 + $0x18] sm:$0xff]
        %v1372 = vsel %vm385, %v1358, 0
        %v1375 = vsel %vm385, %v1359, 0
        %v1378 = vsel %vm385, %v1360, 0
        %v1381 = vsel %vm385, %v1361, 0
        %v1384 = vsel %vm385, %v1362, 0
        %v1387 = vsel %vm385, %v1363, 0
        %v1390 = vsel %vm385, %v1364, 0
        %v1393 = vsel %vm385, %v1365, 0
        %1395 = vmatpush.msra.mxu0 0.0
        %1396 = vmatpush.msra.mxu0 0.0
        %1397 = vmatpush.msra.mxu0 0.0
        %1398 = vmatpush.msra.mxu0 0.0
        %1399 = vmatpush.msra.mxu0 0.0
        %1400 = vmatpush.msra.mxu0 0.0
        %1401 = vmatpush.msra.mxu0 0.0
        %1402 = vmatpush.msra.mxu0 0.0
        %1403 = vmatpush.msra.mxu0 0.0
        %1404 = vmatpush.msra.mxu0 0.0
        %1405 = vmatpush.msra.mxu0 0.0
        %1406 = vmatpush.msra.mxu0 0.0
        %1407 = vmatpush.msra.mxu0 %v1370
        %1408 = vmatpush.msra.mxu0 %v1369
        %1409 = vmatpush.msra.mxu0 %v1368
        %1410 = vmatpush.msra.mxu0 %v1367
        %1411 = vmatmul.f32.gmra.mxu0 %v1372
        %v1412 = vpop.f32.mrf.mxu0
        %v1413 = vadd.f32 0.0, %v1412
        %1414 = vmatmul.f32.gmra.mxu0 %v1375
        %v1415 = vpop.f32.mrf.mxu0
        %v1416 = vadd.f32 0.0, %v1415
        %1417 = vmatmul.f32.gmra.mxu0 %v1378
        %v1418 = vpop.f32.mrf.mxu0
        %v1419 = vadd.f32 0.0, %v1418
        %1420 = vmatmul.f32.gmra.mxu0 %v1381
        %v1421 = vpop.f32.mrf.mxu0
        %v1422 = vadd.f32 0.0, %v1421
        %1423 = vmatmul.f32.gmra.mxu0 %v1384
        %v1424 = vpop.f32.mrf.mxu0
        %v1425 = vadd.f32 0.0, %v1424
        %1426 = vmatmul.f32.gmra.mxu0 %v1387
        %v1427 = vpop.f32.mrf.mxu0
        %v1428 = vadd.f32 0.0, %v1427
        %1429 = vmatmul.f32.gmra.mxu0 %v1390
        %v1430 = vpop.f32.mrf.mxu0
        %v1431 = vadd.f32 0.0, %v1430
        %1432 = vmatmul.f32.gmra.mxu0 %v1393
        %v1433 = vpop.f32.mrf.mxu0
        %v1434 = vadd.f32 0.0, %v1433
        %1435 = vdwg.mxu0
        %v1436 = vadd.f32 %v1335, %v1413
        %v1437 = vadd.f32 %v1338, %v1416
        %v1438 = vadd.f32 %v1341, %v1419
        %v1439 = vadd.f32 %v1344, %v1422
        %v1440 = vadd.f32 %v1347, %v1425
        %v1441 = vadd.f32 %v1350, %v1428
        %v1442 = vadd.f32 %v1353, %v1431
        %v1443 = vadd.f32 %v1356, %v1434
        %v1444 = vld [vmem:[%s1193] sm:$0xff]
        %v1445 = vld [vmem:[%s1193 + $0x10] sm:$0xff]
        %v1446 = vld [vmem:[%s1193 + $0x20] sm:$0xff]
        %v1447 = vld [vmem:[%s1193 + $0x30] sm:$0xff]
        %v1448 = vld [vmem:[%s1193 + $0x40] sm:$0xff]
        %v1449 = vld [vmem:[%s1193 + $0x50] sm:$0xff]
        %v1450 = vld [vmem:[%s1193 + $0x60] sm:$0xff]
        %v1451 = vld [vmem:[%s1193 + $0x70] sm:$0xff]
        %s1452 = scalar_lea.vmem [#allocation6], 384
        %v1453 = vld [vmem:[%s1452] sm:$0xff]
        %v1454 = vld [vmem:[%s1452 + $0x8] sm:$0xff]
        %v1455 = vld [vmem:[%s1452 + $0x10] sm:$0xff]
        %v1456 = vld [vmem:[%s1452 + $0x18] sm:$0xff]
        %v1458 = vsel %vm385, %v1444, 0
        %v1461 = vsel %vm385, %v1445, 0
        %v1464 = vsel %vm385, %v1446, 0
        %v1467 = vsel %vm385, %v1447, 0
        %v1470 = vsel %vm385, %v1448, 0
        %v1473 = vsel %vm385, %v1449, 0
        %v1476 = vsel %vm385, %v1450, 0
        %v1479 = vsel %vm385, %v1451, 0
        %1481 = vmatpush.msra.mxu0 0.0
        %1482 = vmatpush.msra.mxu0 0.0
        %1483 = vmatpush.msra.mxu0 0.0
        %1484 = vmatpush.msra.mxu0 0.0
        %1485 = vmatpush.msra.mxu0 0.0
        %1486 = vmatpush.msra.mxu0 0.0
        %1487 = vmatpush.msra.mxu0 0.0
        %1488 = vmatpush.msra.mxu0 0.0
        %1489 = vmatpush.msra.mxu0 0.0
        %1490 = vmatpush.msra.mxu0 0.0
        %1491 = vmatpush.msra.mxu0 0.0
        %1492 = vmatpush.msra.mxu0 0.0
        %1493 = vmatpush.msra.mxu0 %v1456
        %1494 = vmatpush.msra.mxu0 %v1455
        %1495 = vmatpush.msra.mxu0 %v1454
        %1496 = vmatpush.msra.mxu0 %v1453
        %1497 = vmatmul.f32.gmra.mxu0 %v1458
        %v1498 = vpop.f32.mrf.mxu0
        %v1499 = vadd.f32 0.0, %v1498
        %1500 = vmatmul.f32.gmra.mxu0 %v1461
        %v1501 = vpop.f32.mrf.mxu0
        %v1502 = vadd.f32 0.0, %v1501
        %1503 = vmatmul.f32.gmra.mxu0 %v1464
        %v1504 = vpop.f32.mrf.mxu0
        %v1505 = vadd.f32 0.0, %v1504
        %1506 = vmatmul.f32.gmra.mxu0 %v1467
        %v1507 = vpop.f32.mrf.mxu0
        %v1508 = vadd.f32 0.0, %v1507
        %1509 = vmatmul.f32.gmra.mxu0 %v1470
        %v1510 = vpop.f32.mrf.mxu0
        %v1511 = vadd.f32 0.0, %v1510
        %1512 = vmatmul.f32.gmra.mxu0 %v1473
        %v1513 = vpop.f32.mrf.mxu0
        %v1514 = vadd.f32 0.0, %v1513
        %1515 = vmatmul.f32.gmra.mxu0 %v1476
        %v1516 = vpop.f32.mrf.mxu0
        %v1517 = vadd.f32 0.0, %v1516
        %1518 = vmatmul.f32.gmra.mxu0 %v1479
        %v1519 = vpop.f32.mrf.mxu0
        %v1520 = vadd.f32 0.0, %v1519
        %1521 = vdwg.mxu0
        %v1522 = vadd.f32 %v1436, %v1499
        %v1523 = vadd.f32 %v1437, %v1502
        %v1524 = vadd.f32 %v1438, %v1505
        %v1525 = vadd.f32 %v1439, %v1508
        %v1526 = vadd.f32 %v1440, %v1511
        %v1527 = vadd.f32 %v1441, %v1514
        %v1528 = vadd.f32 %v1442, %v1517
        %v1529 = vadd.f32 %v1443, %v1520
        %v1530 = vld [vmem:[%s1193 + $0x1] sm:$0xff]
        %v1531 = vld [vmem:[%s1193 + $0x11] sm:$0xff]
        %v1532 = vld [vmem:[%s1193 + $0x21] sm:$0xff]
        %v1533 = vld [vmem:[%s1193 + $0x31] sm:$0xff]
        %v1534 = vld [vmem:[%s1193 + $0x41] sm:$0xff]
        %v1535 = vld [vmem:[%s1193 + $0x51] sm:$0xff]
        %v1536 = vld [vmem:[%s1193 + $0x61] sm:$0xff]
        %v1537 = vld [vmem:[%s1193 + $0x71] sm:$0xff]
        %s1538 = scalar_lea.vmem [#allocation6], 416
        %v1539 = vld [vmem:[%s1538] sm:$0xff]
        %v1540 = vld [vmem:[%s1538 + $0x8] sm:$0xff]
        %v1541 = vld [vmem:[%s1538 + $0x10] sm:$0xff]
        %v1542 = vld [vmem:[%s1538 + $0x18] sm:$0xff]
        %v1544 = vsel %vm385, %v1530, 0
        %v1547 = vsel %vm385, %v1531, 0
        %v1550 = vsel %vm385, %v1532, 0
        %v1553 = vsel %vm385, %v1533, 0
        %v1556 = vsel %vm385, %v1534, 0
        %v1559 = vsel %vm385, %v1535, 0
        %v1562 = vsel %vm385, %v1536, 0
        %v1565 = vsel %vm385, %v1537, 0
        %1567 = vmatpush.msra.mxu0 0.0
        %1568 = vmatpush.msra.mxu0 0.0
        %1569 = vmatpush.msra.mxu0 0.0
        %1570 = vmatpush.msra.mxu0 0.0
        %1571 = vmatpush.msra.mxu0 0.0
        %1572 = vmatpush.msra.mxu0 0.0
        %1573 = vmatpush.msra.mxu0 0.0
        %1574 = vmatpush.msra.mxu0 0.0
        %1575 = vmatpush.msra.mxu0 0.0
        %1576 = vmatpush.msra.mxu0 0.0
        %1577 = vmatpush.msra.mxu0 0.0
        %1578 = vmatpush.msra.mxu0 0.0
        %1579 = vmatpush.msra.mxu0 %v1542
        %1580 = vmatpush.msra.mxu0 %v1541
        %1581 = vmatpush.msra.mxu0 %v1540
        %1582 = vmatpush.msra.mxu0 %v1539
        %1583 = vmatmul.f32.gmra.mxu0 %v1544
        %v1584 = vpop.f32.mrf.mxu0
        %v1585 = vadd.f32 0.0, %v1584
        %1586 = vmatmul.f32.gmra.mxu0 %v1547
        %v1587 = vpop.f32.mrf.mxu0
        %v1588 = vadd.f32 0.0, %v1587
        %1589 = vmatmul.f32.gmra.mxu0 %v1550
        %v1590 = vpop.f32.mrf.mxu0
        %v1591 = vadd.f32 0.0, %v1590
        %1592 = vmatmul.f32.gmra.mxu0 %v1553
        %v1593 = vpop.f32.mrf.mxu0
        %v1594 = vadd.f32 0.0, %v1593
        %1595 = vmatmul.f32.gmra.mxu0 %v1556
        %v1596 = vpop.f32.mrf.mxu0
        %v1597 = vadd.f32 0.0, %v1596
        %1598 = vmatmul.f32.gmra.mxu0 %v1559
        %v1599 = vpop.f32.mrf.mxu0
        %v1600 = vadd.f32 0.0, %v1599
        %1601 = vmatmul.f32.gmra.mxu0 %v1562
        %v1602 = vpop.f32.mrf.mxu0
        %v1603 = vadd.f32 0.0, %v1602
        %1604 = vmatmul.f32.gmra.mxu0 %v1565
        %v1605 = vpop.f32.mrf.mxu0
        %v1606 = vadd.f32 0.0, %v1605
        %1607 = vdwg.mxu0
        %v1608 = vadd.f32 %v1522, %v1585
        %v1609 = vadd.f32 %v1523, %v1588
        %v1610 = vadd.f32 %v1524, %v1591
        %v1611 = vadd.f32 %v1525, %v1594
        %v1612 = vadd.f32 %v1526, %v1597
        %v1613 = vadd.f32 %v1527, %v1600
        %v1614 = vadd.f32 %v1528, %v1603
        %v1615 = vadd.f32 %v1529, %v1606
        %v1616 = vld [vmem:[%s1193 + $0x2] sm:$0xff]
        %v1617 = vld [vmem:[%s1193 + $0x12] sm:$0xff]
        %v1618 = vld [vmem:[%s1193 + $0x22] sm:$0xff]
        %v1619 = vld [vmem:[%s1193 + $0x32] sm:$0xff]
        %v1620 = vld [vmem:[%s1193 + $0x42] sm:$0xff]
        %v1621 = vld [vmem:[%s1193 + $0x52] sm:$0xff]
        %v1622 = vld [vmem:[%s1193 + $0x62] sm:$0xff]
        %v1623 = vld [vmem:[%s1193 + $0x72] sm:$0xff]
        %s1624 = scalar_lea.vmem [#allocation6], 448
        %v1625 = vld [vmem:[%s1624] sm:$0xff]
        %v1626 = vld [vmem:[%s1624 + $0x8] sm:$0xff]
        %v1627 = vld [vmem:[%s1624 + $0x10] sm:$0xff]
        %v1628 = vld [vmem:[%s1624 + $0x18] sm:$0xff]
        %v1630 = vsel %vm385, %v1616, 0
        %v1633 = vsel %vm385, %v1617, 0
        %v1636 = vsel %vm385, %v1618, 0
        %v1639 = vsel %vm385, %v1619, 0
        %v1642 = vsel %vm385, %v1620, 0
        %v1645 = vsel %vm385, %v1621, 0
        %v1648 = vsel %vm385, %v1622, 0
        %v1651 = vsel %vm385, %v1623, 0
        %1653 = vmatpush.msra.mxu0 0.0
        %1654 = vmatpush.msra.mxu0 0.0
        %1655 = vmatpush.msra.mxu0 0.0
        %1656 = vmatpush.msra.mxu0 0.0
        %1657 = vmatpush.msra.mxu0 0.0
        %1658 = vmatpush.msra.mxu0 0.0
        %1659 = vmatpush.msra.mxu0 0.0
        %1660 = vmatpush.msra.mxu0 0.0
        %1661 = vmatpush.msra.mxu0 0.0
        %1662 = vmatpush.msra.mxu0 0.0
        %1663 = vmatpush.msra.mxu0 0.0
        %1664 = vmatpush.msra.mxu0 0.0
        %1665 = vmatpush.msra.mxu0 %v1628
        %1666 = vmatpush.msra.mxu0 %v1627
        %1667 = vmatpush.msra.mxu0 %v1626
        %1668 = vmatpush.msra.mxu0 %v1625
        %1669 = vmatmul.f32.gmra.mxu0 %v1630
        %v1670 = vpop.f32.mrf.mxu0
        %v1671 = vadd.f32 0.0, %v1670
        %1672 = vmatmul.f32.gmra.mxu0 %v1633
        %v1673 = vpop.f32.mrf.mxu0
        %v1674 = vadd.f32 0.0, %v1673
        %1675 = vmatmul.f32.gmra.mxu0 %v1636
        %v1676 = vpop.f32.mrf.mxu0
        %v1677 = vadd.f32 0.0, %v1676
        %1678 = vmatmul.f32.gmra.mxu0 %v1639
        %v1679 = vpop.f32.mrf.mxu0
        %v1680 = vadd.f32 0.0, %v1679
        %1681 = vmatmul.f32.gmra.mxu0 %v1642
        %v1682 = vpop.f32.mrf.mxu0
        %v1683 = vadd.f32 0.0, %v1682
        %1684 = vmatmul.f32.gmra.mxu0 %v1645
        %v1685 = vpop.f32.mrf.mxu0
        %v1686 = vadd.f32 0.0, %v1685
        %1687 = vmatmul.f32.gmra.mxu0 %v1648
        %v1688 = vpop.f32.mrf.mxu0
        %v1689 = vadd.f32 0.0, %v1688
        %1690 = vmatmul.f32.gmra.mxu0 %v1651
        %v1691 = vpop.f32.mrf.mxu0
        %v1692 = vadd.f32 0.0, %v1691
        %1693 = vdwg.mxu0
        %v1694 = vadd.f32 %v1608, %v1671
        %v1695 = vadd.f32 %v1609, %v1674
        %v1696 = vadd.f32 %v1610, %v1677
        %v1697 = vadd.f32 %v1611, %v1680
        %v1698 = vadd.f32 %v1612, %v1683
        %v1699 = vadd.f32 %v1613, %v1686
        %v1700 = vadd.f32 %v1614, %v1689
        %v1701 = vadd.f32 %v1615, %v1692
        %s1702 = scalar_lea.vmem [#allocation3], 32
        %v1703 = vld [vmem:[%s1702] sm:$0xff]
        %v1704 = vld [vmem:[%s1702 + $0x10] sm:$0xff]
        %v1705 = vld [vmem:[%s1702 + $0x20] sm:$0xff]
        %v1706 = vld [vmem:[%s1702 + $0x30] sm:$0xff]
        %v1707 = vld [vmem:[%s1702 + $0x40] sm:$0xff]
        %v1708 = vld [vmem:[%s1702 + $0x50] sm:$0xff]
        %v1709 = vld [vmem:[%s1702 + $0x60] sm:$0xff]
        %v1710 = vld [vmem:[%s1702 + $0x70] sm:$0xff]
        %s1711 = scalar_lea.vmem [#allocation6], 480
        %v1712 = vld [vmem:[%s1711] sm:$0xff]
        %v1713 = vld [vmem:[%s1711 + $0x8] sm:$0xff]
        %v1714 = vld [vmem:[%s1711 + $0x10] sm:$0xff]
        %v1715 = vld [vmem:[%s1711 + $0x18] sm:$0xff]
        %v1717 = vsel %vm385, %v1703, 0
        %v1720 = vsel %vm385, %v1704, 0
        %v1723 = vsel %vm385, %v1705, 0
        %v1726 = vsel %vm385, %v1706, 0
        %v1729 = vsel %vm385, %v1707, 0
        %v1732 = vsel %vm385, %v1708, 0
        %v1735 = vsel %vm385, %v1709, 0
        %v1738 = vsel %vm385, %v1710, 0
        %1740 = vmatpush.msra.mxu0 0.0
        %1741 = vmatpush.msra.mxu0 0.0
        %1742 = vmatpush.msra.mxu0 0.0
        %1743 = vmatpush.msra.mxu0 0.0
        %1744 = vmatpush.msra.mxu0 0.0
        %1745 = vmatpush.msra.mxu0 0.0
        %1746 = vmatpush.msra.mxu0 0.0
        %1747 = vmatpush.msra.mxu0 0.0
        %1748 = vmatpush.msra.mxu0 0.0
        %1749 = vmatpush.msra.mxu0 0.0
        %1750 = vmatpush.msra.mxu0 0.0
        %1751 = vmatpush.msra.mxu0 0.0
        %1752 = vmatpush.msra.mxu0 %v1715
        %1753 = vmatpush.msra.mxu0 %v1714
        %1754 = vmatpush.msra.mxu0 %v1713
        %1755 = vmatpush.msra.mxu0 %v1712
        %1756 = vmatmul.f32.gmra.mxu0 %v1717
        %v1757 = vpop.f32.mrf.mxu0
        %v1758 = vadd.f32 0.0, %v1757
        %1759 = vmatmul.f32.gmra.mxu0 %v1720
        %v1760 = vpop.f32.mrf.mxu0
        %v1761 = vadd.f32 0.0, %v1760
        %1762 = vmatmul.f32.gmra.mxu0 %v1723
        %v1763 = vpop.f32.mrf.mxu0
        %v1764 = vadd.f32 0.0, %v1763
        %1765 = vmatmul.f32.gmra.mxu0 %v1726
        %v1766 = vpop.f32.mrf.mxu0
        %v1767 = vadd.f32 0.0, %v1766
        %1768 = vmatmul.f32.gmra.mxu0 %v1729
        %v1769 = vpop.f32.mrf.mxu0
        %v1770 = vadd.f32 0.0, %v1769
        %1771 = vmatmul.f32.gmra.mxu0 %v1732
        %v1772 = vpop.f32.mrf.mxu0
        %v1773 = vadd.f32 0.0, %v1772
        %1774 = vmatmul.f32.gmra.mxu0 %v1735
        %v1775 = vpop.f32.mrf.mxu0
        %v1776 = vadd.f32 0.0, %v1775
        %1777 = vmatmul.f32.gmra.mxu0 %v1738
        %v1778 = vpop.f32.mrf.mxu0
        %v1779 = vadd.f32 0.0, %v1778
        %1780 = vdwg.mxu0
        %v1781 = vadd.f32 %v1694, %v1758
        %v1782 = vadd.f32 %v1695, %v1761
        %v1783 = vadd.f32 %v1696, %v1764
        %v1784 = vadd.f32 %v1697, %v1767
        %v1785 = vadd.f32 %v1698, %v1770
        %v1786 = vadd.f32 %v1699, %v1773
        %v1787 = vadd.f32 %v1700, %v1776
        %v1788 = vadd.f32 %v1701, %v1779
        %v1789 = vld [vmem:[%s1702 + $0x1] sm:$0xff]
        %v1790 = vld [vmem:[%s1702 + $0x11] sm:$0xff]
        %v1791 = vld [vmem:[%s1702 + $0x21] sm:$0xff]
        %v1792 = vld [vmem:[%s1702 + $0x31] sm:$0xff]
        %v1793 = vld [vmem:[%s1702 + $0x41] sm:$0xff]
        %v1794 = vld [vmem:[%s1702 + $0x51] sm:$0xff]
        %v1795 = vld [vmem:[%s1702 + $0x61] sm:$0xff]
        %v1796 = vld [vmem:[%s1702 + $0x71] sm:$0xff]
        %s1797 = scalar_lea.vmem [#allocation6], 512
        %v1798 = vld [vmem:[%s1797] sm:$0xff]
        %v1799 = vld [vmem:[%s1797 + $0x8] sm:$0xff]
        %v1800 = vld [vmem:[%s1797 + $0x10] sm:$0xff]
        %v1801 = vld [vmem:[%s1797 + $0x18] sm:$0xff]
        %v1803 = vsel %vm385, %v1789, 0
        %v1806 = vsel %vm385, %v1790, 0
        %v1809 = vsel %vm385, %v1791, 0
        %v1812 = vsel %vm385, %v1792, 0
        %v1815 = vsel %vm385, %v1793, 0
        %v1818 = vsel %vm385, %v1794, 0
        %v1821 = vsel %vm385, %v1795, 0
        %v1824 = vsel %vm385, %v1796, 0
        %1826 = vmatpush.msra.mxu0 0.0
        %1827 = vmatpush.msra.mxu0 0.0
        %1828 = vmatpush.msra.mxu0 0.0
        %1829 = vmatpush.msra.mxu0 0.0
        %1830 = vmatpush.msra.mxu0 0.0
        %1831 = vmatpush.msra.mxu0 0.0
        %1832 = vmatpush.msra.mxu0 0.0
        %1833 = vmatpush.msra.mxu0 0.0
        %1834 = vmatpush.msra.mxu0 0.0
        %1835 = vmatpush.msra.mxu0 0.0
        %1836 = vmatpush.msra.mxu0 0.0
        %1837 = vmatpush.msra.mxu0 0.0
        %1838 = vmatpush.msra.mxu0 %v1801
        %1839 = vmatpush.msra.mxu0 %v1800
        %1840 = vmatpush.msra.mxu0 %v1799
        %1841 = vmatpush.msra.mxu0 %v1798
        %1842 = vmatmul.f32.gmra.mxu0 %v1803
        %v1843 = vpop.f32.mrf.mxu0
        %v1844 = vadd.f32 0.0, %v1843
        %1845 = vmatmul.f32.gmra.mxu0 %v1806
        %v1846 = vpop.f32.mrf.mxu0
        %v1847 = vadd.f32 0.0, %v1846
        %1848 = vmatmul.f32.gmra.mxu0 %v1809
        %v1849 = vpop.f32.mrf.mxu0
        %v1850 = vadd.f32 0.0, %v1849
        %1851 = vmatmul.f32.gmra.mxu0 %v1812
        %v1852 = vpop.f32.mrf.mxu0
        %v1853 = vadd.f32 0.0, %v1852
        %1854 = vmatmul.f32.gmra.mxu0 %v1815
        %v1855 = vpop.f32.mrf.mxu0
        %v1856 = vadd.f32 0.0, %v1855
        %1857 = vmatmul.f32.gmra.mxu0 %v1818
        %v1858 = vpop.f32.mrf.mxu0
        %v1859 = vadd.f32 0.0, %v1858
        %1860 = vmatmul.f32.gmra.mxu0 %v1821
        %v1861 = vpop.f32.mrf.mxu0
        %v1862 = vadd.f32 0.0, %v1861
        %1863 = vmatmul.f32.gmra.mxu0 %v1824
        %v1864 = vpop.f32.mrf.mxu0
        %v1865 = vadd.f32 0.0, %v1864
        %1866 = vdwg.mxu0
        %v1867 = vadd.f32 %v1781, %v1844
        %v1868 = vadd.f32 %v1782, %v1847
        %v1869 = vadd.f32 %v1783, %v1850
        %v1870 = vadd.f32 %v1784, %v1853
        %v1871 = vadd.f32 %v1785, %v1856
        %v1872 = vadd.f32 %v1786, %v1859
        %v1873 = vadd.f32 %v1787, %v1862
        %v1874 = vadd.f32 %v1788, %v1865
        %v1875 = vld [vmem:[%s1702 + $0x2] sm:$0xff]
        %v1876 = vld [vmem:[%s1702 + $0x12] sm:$0xff]
        %v1877 = vld [vmem:[%s1702 + $0x22] sm:$0xff]
        %v1878 = vld [vmem:[%s1702 + $0x32] sm:$0xff]
        %v1879 = vld [vmem:[%s1702 + $0x42] sm:$0xff]
        %v1880 = vld [vmem:[%s1702 + $0x52] sm:$0xff]
        %v1881 = vld [vmem:[%s1702 + $0x62] sm:$0xff]
        %v1882 = vld [vmem:[%s1702 + $0x72] sm:$0xff]
        %s1883 = scalar_lea.vmem [#allocation6], 544
        %v1884 = vld [vmem:[%s1883] sm:$0xff]
        %v1885 = vld [vmem:[%s1883 + $0x8] sm:$0xff]
        %v1886 = vld [vmem:[%s1883 + $0x10] sm:$0xff]
        %v1887 = vld [vmem:[%s1883 + $0x18] sm:$0xff]
        %v1889 = vsel %vm385, %v1875, 0
        %v1892 = vsel %vm385, %v1876, 0
        %v1895 = vsel %vm385, %v1877, 0
        %v1898 = vsel %vm385, %v1878, 0
        %v1901 = vsel %vm385, %v1879, 0
        %v1904 = vsel %vm385, %v1880, 0
        %v1907 = vsel %vm385, %v1881, 0
        %v1910 = vsel %vm385, %v1882, 0
        %1912 = vmatpush.msra.mxu0 0.0
        %1913 = vmatpush.msra.mxu0 0.0
        %1914 = vmatpush.msra.mxu0 0.0
        %1915 = vmatpush.msra.mxu0 0.0
        %1916 = vmatpush.msra.mxu0 0.0
        %1917 = vmatpush.msra.mxu0 0.0
        %1918 = vmatpush.msra.mxu0 0.0
        %1919 = vmatpush.msra.mxu0 0.0
        %1920 = vmatpush.msra.mxu0 0.0
        %1921 = vmatpush.msra.mxu0 0.0
        %1922 = vmatpush.msra.mxu0 0.0
        %1923 = vmatpush.msra.mxu0 0.0
        %1924 = vmatpush.msra.mxu0 %v1887
        %1925 = vmatpush.msra.mxu0 %v1886
        %1926 = vmatpush.msra.mxu0 %v1885
        %1927 = vmatpush.msra.mxu0 %v1884
        %1928 = vmatmul.f32.gmra.mxu0 %v1889
        %v1929 = vpop.f32.mrf.mxu0
        %v1930 = vadd.f32 0.0, %v1929
        %1931 = vmatmul.f32.gmra.mxu0 %v1892
        %v1932 = vpop.f32.mrf.mxu0
        %v1933 = vadd.f32 0.0, %v1932
        %1934 = vmatmul.f32.gmra.mxu0 %v1895
        %v1935 = vpop.f32.mrf.mxu0
        %v1936 = vadd.f32 0.0, %v1935
        %1937 = vmatmul.f32.gmra.mxu0 %v1898
        %v1938 = vpop.f32.mrf.mxu0
        %v1939 = vadd.f32 0.0, %v1938
        %1940 = vmatmul.f32.gmra.mxu0 %v1901
        %v1941 = vpop.f32.mrf.mxu0
        %v1942 = vadd.f32 0.0, %v1941
        %1943 = vmatmul.f32.gmra.mxu0 %v1904
        %v1944 = vpop.f32.mrf.mxu0
        %v1945 = vadd.f32 0.0, %v1944
        %1946 = vmatmul.f32.gmra.mxu0 %v1907
        %v1947 = vpop.f32.mrf.mxu0
        %v1948 = vadd.f32 0.0, %v1947
        %1949 = vmatmul.f32.gmra.mxu0 %v1910
        %v1950 = vpop.f32.mrf.mxu0
        %v1951 = vadd.f32 0.0, %v1950
        %1952 = vdwg.mxu0
        %v1953 = vadd.f32 %v1867, %v1930
        %v1954 = vadd.f32 %v1868, %v1933
        %v1955 = vadd.f32 %v1869, %v1936
        %v1956 = vadd.f32 %v1870, %v1939
        %v1957 = vadd.f32 %v1871, %v1942
        %v1958 = vadd.f32 %v1872, %v1945
        %v1959 = vadd.f32 %v1873, %v1948
        %v1960 = vadd.f32 %v1874, %v1951
        %s1961 = scalar_lea.vmem [#allocation8], 32
        %v1962 = vld [vmem:[%s1961] sm:$0xff]
        %v1963 = vld [vmem:[%s1961 + $0x8] sm:$0xff]
        %v1964 = vld [vmem:[%s1961 + $0x10] sm:$0xff]
        %v1965 = vld [vmem:[%s1961 + $0x18] sm:$0xff]
        %1966 = vrot.lane.b32.xlu0 %v1010, 64
        %v1967 = vpop.permute.xlu0 %1966
        %v1968 = vsel %vm385, %v1967, 0
        %1970 = vmatpush.msra.mxu0 0.0
        %1971 = vmatpush.msra.mxu0 0.0
        %1972 = vmatpush.msra.mxu0 0.0
        %1973 = vmatpush.msra.mxu0 0.0
        %1974 = vmatpush.msra.mxu0 0.0
        %1975 = vmatpush.msra.mxu0 0.0
        %1976 = vmatpush.msra.mxu0 0.0
        %1977 = vmatpush.msra.mxu0 0.0
        %1978 = vmatpush.msra.mxu0 0.0
        %1979 = vmatpush.msra.mxu0 0.0
        %1980 = vmatpush.msra.mxu0 0.0
        %1981 = vmatpush.msra.mxu0 0.0
        %1982 = vmatpush.msra.mxu0 %v1965
        %1983 = vmatpush.msra.mxu0 %v1964
        %1984 = vmatpush.msra.mxu0 %v1963
        %1985 = vmatpush.msra.mxu0 %v1962
        %1986 = vmatmul.f32.gmra.mxu0 %v1968
        %v1987 = vpop.f32.mrf.mxu0
        %v1988 = vadd.f32 1e-08, %v1987
        %1989 = vdwg.mxu0
        %v1990 = vrsqrt.pop %v1988
        %v1991 = vmul.f32 %v1990, %v1988
        %v1992 = vmul.f32 %v1991, %v1990
        %v1993 = vmul.f32 0.5, %v1992
        %v1994 = vsub.f32 1.5, %v1993
        %v1995 = vmul.f32 %v1990, %v1994
        %vm1996 = vweird.f32 %v1988
        %vm1997 = vweird.f32 %v1990
        %vm1998 = vmor %vm1996, %vm1997
        %v1999 = vsel %vm1998, %v1990, %v1995
        %v2000 = vperm.slane %v1999, 0
        %v2001 = vmul.f32 %v1953, %v2000
        %v2002 = vmul.f32 %v1954, %v2000
        %v2003 = vmul.f32 %v1955, %v2000
        %v2004 = vmul.f32 %v1956, %v2000
        %v2005 = vmul.f32 %v1957, %v2000
        %v2006 = vmul.f32 %v1958, %v2000
        %v2007 = vmul.f32 %v1959, %v2000
        %v2008 = vmul.f32 %v1960, %v2000
        %s2009 = scalar_lea.vmem %s5, 1
        %v2010 = vld [vmem:[%s2009] sm:$0x1]
        %v2012 = vperm.slane %v2010, 0
        %v2014 = vadd.f32 %v2001, %v2012
        %v2015 = vadd.f32 %v2002, %v2012
        %v2016 = vadd.f32 %v2003, %v2012
        %v2017 = vadd.f32 %v2004, %v2012
        %v2018 = vadd.f32 %v2005, %v2012
        %v2019 = vadd.f32 %v2006, %v2012
        %v2020 = vadd.f32 %v2007, %v2012
        %v2021 = vadd.f32 %v2008, %v2012
        %v2022 = vmul.f32 %v2014, 0.2
        %v2023 = vmul.f32 %v2015, 0.2
        %v2024 = vmul.f32 %v2016, 0.2
        %v2025 = vmul.f32 %v2017, 0.2
        %v2026 = vmul.f32 %v2018, 0.2
        %v2027 = vmul.f32 %v2019, 0.2
        %v2028 = vmul.f32 %v2020, 0.2
        %v2029 = vmul.f32 %v2021, 0.2
        %v2030 = vmax.f32 %v2014, %v2022
        %v2031 = vmax.f32 %v2015, %v2023
        %v2032 = vmax.f32 %v2016, %v2024
        %v2033 = vmax.f32 %v2017, %v2025
        %v2034 = vmax.f32 %v2018, %v2026
        %v2035 = vmax.f32 %v2019, %v2027
        %v2036 = vmax.f32 %v2020, %v2028
        %v2037 = vmax.f32 %v2021, %v2029
        %v2038 = vmul.f32 %v2030, 1.4142135
        %v2039 = vmul.f32 %v2031, 1.4142135
        %v2040 = vmul.f32 %v2032, 1.4142135
        %v2041 = vmul.f32 %v2033, 1.4142135
        %v2042 = vmul.f32 %v2034, 1.4142135
        %v2043 = vmul.f32 %v2035, 1.4142135
        %v2044 = vmul.f32 %v2036, 1.4142135
        %v2045 = vmul.f32 %v2037, 1.4142135
        %2046 = vrot.lane.b32.xlu0 %v544, 32
        %v2047 = vpop.permute.xlu0 %2046
        %v2049 = vmul.f32 %v2038, %v2047
        %v2050 = vmul.f32 %v2039, %v2047
        %v2051 = vmul.f32 %v2040, %v2047
        %v2052 = vmul.f32 %v2041, %v2047
        %v2053 = vmul.f32 %v2042, %v2047
        %v2054 = vmul.f32 %v2043, %v2047
        %v2055 = vmul.f32 %v2044, %v2047
        %v2056 = vmul.f32 %v2045, %v2047
        %2057 = vst.msk [vmem:[%s1193 + $0x1] sm:$0xff] %vm385, %v2049
        %2058 = vst.msk [vmem:[%s1193 + $0x11] sm:$0xff] %vm385, %v2050
        %2059 = vst.msk [vmem:[%s1193 + $0x21] sm:$0xff] %vm385, %v2051
        %2060 = vst.msk [vmem:[%s1193 + $0x31] sm:$0xff] %vm385, %v2052
        %2061 = vst.msk [vmem:[%s1193 + $0x41] sm:$0xff] %vm385, %v2053
        %2062 = vst.msk [vmem:[%s1193 + $0x51] sm:$0xff] %vm385, %v2054
        %2063 = vst.msk [vmem:[%s1193 + $0x61] sm:$0xff] %vm385, %v2055
        %2064 = vst.msk [vmem:[%s1193 + $0x71] sm:$0xff] %vm385, %v2056
        %v2065 = vld [vmem:[#allocation3] sm:$0xff]
        %v2066 = vld [vmem:[#allocation3 + $0x10] sm:$0xff]
        %v2067 = vld [vmem:[#allocation3 + $0x20] sm:$0xff]
        %v2068 = vld [vmem:[#allocation3 + $0x30] sm:$0xff]
        %v2069 = vld [vmem:[#allocation3 + $0x40] sm:$0xff]
        %v2070 = vld [vmem:[#allocation3 + $0x50] sm:$0xff]
        %v2071 = vld [vmem:[#allocation3 + $0x60] sm:$0xff]
        %v2072 = vld [vmem:[#allocation3 + $0x70] sm:$0xff]
        %s2073 = scalar_lea.vmem [#allocation6], 576
        %v2074 = vld [vmem:[%s2073] sm:$0xff]
        %v2075 = vld [vmem:[%s2073 + $0x8] sm:$0xff]
        %v2076 = vld [vmem:[%s2073 + $0x10] sm:$0xff]
        %v2077 = vld [vmem:[%s2073 + $0x18] sm:$0xff]
        %v2078 = vld [vmem:[#allocation3 + $0x1] sm:$0xff]
        %v2079 = vld [vmem:[#allocation3 + $0x11] sm:$0xff]
        %v2080 = vld [vmem:[#allocation3 + $0x21] sm:$0xff]
        %v2081 = vld [vmem:[#allocation3 + $0x31] sm:$0xff]
        %v2082 = vld [vmem:[#allocation3 + $0x41] sm:$0xff]
        %v2083 = vld [vmem:[#allocation3 + $0x51] sm:$0xff]
        %v2084 = vld [vmem:[#allocation3 + $0x61] sm:$0xff]
        %v2085 = vld [vmem:[#allocation3 + $0x71] sm:$0xff]
        %s2086 = scalar_lea.vmem [#allocation6], 608
        %v2087 = vld [vmem:[%s2086] sm:$0xff]
        %v2088 = vld [vmem:[%s2086 + $0x8] sm:$0xff]
        %v2089 = vld [vmem:[%s2086 + $0x10] sm:$0xff]
        %v2090 = vld [vmem:[%s2086 + $0x18] sm:$0xff]
        %v2092 = vsel %vm385, %v2078, 0
        %v2095 = vsel %vm385, %v2079, 0
        %v2098 = vsel %vm385, %v2080, 0
        %v2101 = vsel %vm385, %v2081, 0
        %v2104 = vsel %vm385, %v2082, 0
        %v2107 = vsel %vm385, %v2083, 0
        %v2110 = vsel %vm385, %v2084, 0
        %v2113 = vsel %vm385, %v2085, 0
        %2115 = vmatpush.msra.mxu0 0.0
        %2116 = vmatpush.msra.mxu0 0.0
        %2117 = vmatpush.msra.mxu0 0.0
        %2118 = vmatpush.msra.mxu0 0.0
        %2119 = vmatpush.msra.mxu0 0.0
        %2120 = vmatpush.msra.mxu0 0.0
        %2121 = vmatpush.msra.mxu0 0.0
        %2122 = vmatpush.msra.mxu0 0.0
        %2123 = vmatpush.msra.mxu0 0.0
        %2124 = vmatpush.msra.mxu0 0.0
        %2125 = vmatpush.msra.mxu0 0.0
        %2126 = vmatpush.msra.mxu0 0.0
        %2127 = vmatpush.msra.mxu0 %v2090
        %2128 = vmatpush.msra.mxu0 %v2089
        %2129 = vmatpush.msra.mxu0 %v2088
        %2130 = vmatpush.msra.mxu0 %v2087
        %2131 = vmatmul.f32.gmra.mxu0 %v2092
        %v2132 = vpop.f32.mrf.mxu0
        %v2133 = vadd.f32 0.0, %v2132
        %2134 = vmatmul.f32.gmra.mxu0 %v2095
        %v2135 = vpop.f32.mrf.mxu0
        %v2136 = vadd.f32 0.0, %v2135
        %2137 = vmatmul.f32.gmra.mxu0 %v2098
        %v2138 = vpop.f32.mrf.mxu0
        %v2139 = vadd.f32 0.0, %v2138
        %2140 = vmatmul.f32.gmra.mxu0 %v2101
        %v2141 = vpop.f32.mrf.mxu0
        %v2142 = vadd.f32 0.0, %v2141
        %2143 = vmatmul.f32.gmra.mxu0 %v2104
        %v2144 = vpop.f32.mrf.mxu0
        %v2145 = vadd.f32 0.0, %v2144
        %2146 = vmatmul.f32.gmra.mxu0 %v2107
        %v2147 = vpop.f32.mrf.mxu0
        %v2148 = vadd.f32 0.0, %v2147
        %2149 = vmatmul.f32.gmra.mxu0 %v2110
        %v2150 = vpop.f32.mrf.mxu0
        %v2151 = vadd.f32 0.0, %v2150
        %2152 = vmatmul.f32.gmra.mxu0 %v2113
        %v2153 = vpop.f32.mrf.mxu0
        %v2154 = vadd.f32 0.0, %v2153
        %2155 = vdwg.mxu0
        %v2157 = vsel %vm385, %v2065, 0
        %v2160 = vsel %vm385, %v2066, 0
        %v2163 = vsel %vm385, %v2067, 0
        %v2166 = vsel %vm385, %v2068, 0
        %v2169 = vsel %vm385, %v2069, 0
        %v2172 = vsel %vm385, %v2070, 0
        %v2175 = vsel %vm385, %v2071, 0
        %v2178 = vsel %vm385, %v2072, 0
        %2180 = vmatpush.msra.mxu0 0.0
        %2181 = vmatpush.msra.mxu0 0.0
        %2182 = vmatpush.msra.mxu0 0.0
        %2183 = vmatpush.msra.mxu0 0.0
        %2184 = vmatpush.msra.mxu0 0.0
        %2185 = vmatpush.msra.mxu0 0.0
        %2186 = vmatpush.msra.mxu0 0.0
        %2187 = vmatpush.msra.mxu0 0.0
        %2188 = vmatpush.msra.mxu0 0.0
        %2189 = vmatpush.msra.mxu0 0.0
        %2190 = vmatpush.msra.mxu0 0.0
        %2191 = vmatpush.msra.mxu0 0.0
        %2192 = vmatpush.msra.mxu0 %v2077
        %2193 = vmatpush.msra.mxu0 %v2076
        %2194 = vmatpush.msra.mxu0 %v2075
        %2195 = vmatpush.msra.mxu0 %v2074
        %2196 = vmatmul.f32.gmra.mxu0 %v2157
        %v2197 = vpop.f32.mrf.mxu0
        %v2198 = vadd.f32 %v2133, %v2197
        %2199 = vmatmul.f32.gmra.mxu0 %v2160
        %v2200 = vpop.f32.mrf.mxu0
        %v2201 = vadd.f32 %v2136, %v2200
        %2202 = vmatmul.f32.gmra.mxu0 %v2163
        %v2203 = vpop.f32.mrf.mxu0
        %v2204 = vadd.f32 %v2139, %v2203
        %2205 = vmatmul.f32.gmra.mxu0 %v2166
        %v2206 = vpop.f32.mrf.mxu0
        %v2207 = vadd.f32 %v2142, %v2206
        %2208 = vmatmul.f32.gmra.mxu0 %v2169
        %v2209 = vpop.f32.mrf.mxu0
        %v2210 = vadd.f32 %v2145, %v2209
        %2211 = vmatmul.f32.gmra.mxu0 %v2172
        %v2212 = vpop.f32.mrf.mxu0
        %v2213 = vadd.f32 %v2148, %v2212
        %2214 = vmatmul.f32.gmra.mxu0 %v2175
        %v2215 = vpop.f32.mrf.mxu0
        %v2216 = vadd.f32 %v2151, %v2215
        %2217 = vmatmul.f32.gmra.mxu0 %v2178
        %v2218 = vpop.f32.mrf.mxu0
        %v2219 = vadd.f32 %v2154, %v2218
        %2220 = vdwg.mxu0
        %v2221 = vld [vmem:[#allocation3 + $0x2] sm:$0xff]
        %v2222 = vld [vmem:[#allocation3 + $0x12] sm:$0xff]
        %v2223 = vld [vmem:[#allocation3 + $0x22] sm:$0xff]
        %v2224 = vld [vmem:[#allocation3 + $0x32] sm:$0xff]
        %v2225 = vld [vmem:[#allocation3 + $0x42] sm:$0xff]
        %v2226 = vld [vmem:[#allocation3 + $0x52] sm:$0xff]
        %v2227 = vld [vmem:[#allocation3 + $0x62] sm:$0xff]
        %v2228 = vld [vmem:[#allocation3 + $0x72] sm:$0xff]
        %s2229 = scalar_lea.vmem [#allocation6], 640
        %v2230 = vld [vmem:[%s2229] sm:$0xff]
        %v2231 = vld [vmem:[%s2229 + $0x8] sm:$0xff]
        %v2232 = vld [vmem:[%s2229 + $0x10] sm:$0xff]
        %v2233 = vld [vmem:[%s2229 + $0x18] sm:$0xff]
        %v2235 = vsel %vm385, %v2221, 0
        %v2238 = vsel %vm385, %v2222, 0
        %v2241 = vsel %vm385, %v2223, 0
        %v2244 = vsel %vm385, %v2224, 0
        %v2247 = vsel %vm385, %v2225, 0
        %v2250 = vsel %vm385, %v2226, 0
        %v2253 = vsel %vm385, %v2227, 0
        %v2256 = vsel %vm385, %v2228, 0
        %2258 = vmatpush.msra.mxu0 0.0
        %2259 = vmatpush.msra.mxu0 0.0
        %2260 = vmatpush.msra.mxu0 0.0
        %2261 = vmatpush.msra.mxu0 0.0
        %2262 = vmatpush.msra.mxu0 0.0
        %2263 = vmatpush.msra.mxu0 0.0
        %2264 = vmatpush.msra.mxu0 0.0
        %2265 = vmatpush.msra.mxu0 0.0
        %2266 = vmatpush.msra.mxu0 0.0
        %2267 = vmatpush.msra.mxu0 0.0
        %2268 = vmatpush.msra.mxu0 0.0
        %2269 = vmatpush.msra.mxu0 0.0
        %2270 = vmatpush.msra.mxu0 %v2233
        %2271 = vmatpush.msra.mxu0 %v2232
        %2272 = vmatpush.msra.mxu0 %v2231
        %2273 = vmatpush.msra.mxu0 %v2230
        %2274 = vmatmul.f32.gmra.mxu0 %v2235
        %v2275 = vpop.f32.mrf.mxu0
        %v2276 = vadd.f32 0.0, %v2275
        %2277 = vmatmul.f32.gmra.mxu0 %v2238
        %v2278 = vpop.f32.mrf.mxu0
        %v2279 = vadd.f32 0.0, %v2278
        %2280 = vmatmul.f32.gmra.mxu0 %v2241
        %v2281 = vpop.f32.mrf.mxu0
        %v2282 = vadd.f32 0.0, %v2281
        %2283 = vmatmul.f32.gmra.mxu0 %v2244
        %v2284 = vpop.f32.mrf.mxu0
        %v2285 = vadd.f32 0.0, %v2284
        %2286 = vmatmul.f32.gmra.mxu0 %v2247
        %v2287 = vpop.f32.mrf.mxu0
        %v2288 = vadd.f32 0.0, %v2287
        %2289 = vmatmul.f32.gmra.mxu0 %v2250
        %v2290 = vpop.f32.mrf.mxu0
        %v2291 = vadd.f32 0.0, %v2290
        %2292 = vmatmul.f32.gmra.mxu0 %v2253
        %v2293 = vpop.f32.mrf.mxu0
        %v2294 = vadd.f32 0.0, %v2293
        %2295 = vmatmul.f32.gmra.mxu0 %v2256
        %v2296 = vpop.f32.mrf.mxu0
        %v2297 = vadd.f32 0.0, %v2296
        %2298 = vdwg.mxu0
        %v2299 = vadd.f32 %v2198, %v2276
        %v2300 = vadd.f32 %v2201, %v2279
        %v2301 = vadd.f32 %v2204, %v2282
        %v2302 = vadd.f32 %v2207, %v2285
        %v2303 = vadd.f32 %v2210, %v2288
        %v2304 = vadd.f32 %v2213, %v2291
        %v2305 = vadd.f32 %v2216, %v2294
        %v2306 = vadd.f32 %v2219, %v2297
        %v2307 = vld [vmem:[%s1193] sm:$0xff]
        %v2308 = vld [vmem:[%s1193 + $0x10] sm:$0xff]
        %v2309 = vld [vmem:[%s1193 + $0x20] sm:$0xff]
        %v2310 = vld [vmem:[%s1193 + $0x30] sm:$0xff]
        %v2311 = vld [vmem:[%s1193 + $0x40] sm:$0xff]
        %v2312 = vld [vmem:[%s1193 + $0x50] sm:$0xff]
        %v2313 = vld [vmem:[%s1193 + $0x60] sm:$0xff]
        %v2314 = vld [vmem:[%s1193 + $0x70] sm:$0xff]
        %s2315 = scalar_lea.vmem [#allocation6], 672
        %v2316 = vld [vmem:[%s2315] sm:$0xff]
        %v2317 = vld [vmem:[%s2315 + $0x8] sm:$0xff]
        %v2318 = vld [vmem:[%s2315 + $0x10] sm:$0xff]
        %v2319 = vld [vmem:[%s2315 + $0x18] sm:$0xff]
        %v2321 = vsel %vm385, %v2307, 0
        %v2324 = vsel %vm385, %v2308, 0
        %v2327 = vsel %vm385, %v2309, 0
        %v2330 = vsel %vm385, %v2310, 0
        %v2333 = vsel %vm385, %v2311, 0
        %v2336 = vsel %vm385, %v2312, 0
        %v2339 = vsel %vm385, %v2313, 0
        %v2342 = vsel %vm385, %v2314, 0
        %2344 = vmatpush.msra.mxu0 0.0
        %2345 = vmatpush.msra.mxu0 0.0
        %2346 = vmatpush.msra.mxu0 0.0
        %2347 = vmatpush.msra.mxu0 0.0
        %2348 = vmatpush.msra.mxu0 0.0
        %2349 = vmatpush.msra.mxu0 0.0
        %2350 = vmatpush.msra.mxu0 0.0
        %2351 = vmatpush.msra.mxu0 0.0
        %2352 = vmatpush.msra.mxu0 0.0
        %2353 = vmatpush.msra.mxu0 0.0
        %2354 = vmatpush.msra.mxu0 0.0
        %2355 = vmatpush.msra.mxu0 0.0
        %2356 = vmatpush.msra.mxu0 %v2319
        %2357 = vmatpush.msra.mxu0 %v2318
        %2358 = vmatpush.msra.mxu0 %v2317
        %2359 = vmatpush.msra.mxu0 %v2316
        %2360 = vmatmul.f32.gmra.mxu0 %v2321
        %v2361 = vpop.f32.mrf.mxu0
        %v2362 = vadd.f32 0.0, %v2361
        %2363 = vmatmul.f32.gmra.mxu0 %v2324
        %v2364 = vpop.f32.mrf.mxu0
        %v2365 = vadd.f32 0.0, %v2364
        %2366 = vmatmul.f32.gmra.mxu0 %v2327
        %v2367 = vpop.f32.mrf.mxu0
        %v2368 = vadd.f32 0.0, %v2367
        %2369 = vmatmul.f32.gmra.mxu0 %v2330
        %v2370 = vpop.f32.mrf.mxu0
        %v2371 = vadd.f32 0.0, %v2370
        %2372 = vmatmul.f32.gmra.mxu0 %v2333
        %v2373 = vpop.f32.mrf.mxu0
        %v2374 = vadd.f32 0.0, %v2373
        %2375 = vmatmul.f32.gmra.mxu0 %v2336
        %v2376 = vpop.f32.mrf.mxu0
        %v2377 = vadd.f32 0.0, %v2376
        %2378 = vmatmul.f32.gmra.mxu0 %v2339
        %v2379 = vpop.f32.mrf.mxu0
        %v2380 = vadd.f32 0.0, %v2379
        %2381 = vmatmul.f32.gmra.mxu0 %v2342
        %v2382 = vpop.f32.mrf.mxu0
        %v2383 = vadd.f32 0.0, %v2382
        %2384 = vdwg.mxu0
        %v2385 = vadd.f32 %v2299, %v2362
        %v2386 = vadd.f32 %v2300, %v2365
        %v2387 = vadd.f32 %v2301, %v2368
        %v2388 = vadd.f32 %v2302, %v2371
        %v2389 = vadd.f32 %v2303, %v2374
        %v2390 = vadd.f32 %v2304, %v2377
        %v2391 = vadd.f32 %v2305, %v2380
        %v2392 = vadd.f32 %v2306, %v2383
        %v2393 = vld [vmem:[%s1193 + $0x1] sm:$0xff]
        %v2394 = vld [vmem:[%s1193 + $0x11] sm:$0xff]
        %v2395 = vld [vmem:[%s1193 + $0x21] sm:$0xff]
        %v2396 = vld [vmem:[%s1193 + $0x31] sm:$0xff]
        %v2397 = vld [vmem:[%s1193 + $0x41] sm:$0xff]
        %v2398 = vld [vmem:[%s1193 + $0x51] sm:$0xff]
        %v2399 = vld [vmem:[%s1193 + $0x61] sm:$0xff]
        %v2400 = vld [vmem:[%s1193 + $0x71] sm:$0xff]
        %s2401 = scalar_lea.vmem [#allocation6], 704
        %v2402 = vld [vmem:[%s2401] sm:$0xff]
        %v2403 = vld [vmem:[%s2401 + $0x8] sm:$0xff]
        %v2404 = vld [vmem:[%s2401 + $0x10] sm:$0xff]
        %v2405 = vld [vmem:[%s2401 + $0x18] sm:$0xff]
        %v2407 = vsel %vm385, %v2393, 0
        %v2410 = vsel %vm385, %v2394, 0
        %v2413 = vsel %vm385, %v2395, 0
        %v2416 = vsel %vm385, %v2396, 0
        %v2419 = vsel %vm385, %v2397, 0
        %v2422 = vsel %vm385, %v2398, 0
        %v2425 = vsel %vm385, %v2399, 0
        %v2428 = vsel %vm385, %v2400, 0
        %2430 = vmatpush.msra.mxu0 0.0
        %2431 = vmatpush.msra.mxu0 0.0
        %2432 = vmatpush.msra.mxu0 0.0
        %2433 = vmatpush.msra.mxu0 0.0
        %2434 = vmatpush.msra.mxu0 0.0
        %2435 = vmatpush.msra.mxu0 0.0
        %2436 = vmatpush.msra.mxu0 0.0
        %2437 = vmatpush.msra.mxu0 0.0
        %2438 = vmatpush.msra.mxu0 0.0
        %2439 = vmatpush.msra.mxu0 0.0
        %2440 = vmatpush.msra.mxu0 0.0
        %2441 = vmatpush.msra.mxu0 0.0
        %2442 = vmatpush.msra.mxu0 %v2405
        %2443 = vmatpush.msra.mxu0 %v2404
        %2444 = vmatpush.msra.mxu0 %v2403
        %2445 = vmatpush.msra.mxu0 %v2402
        %2446 = vmatmul.f32.gmra.mxu0 %v2407
        %v2447 = vpop.f32.mrf.mxu0
        %v2448 = vadd.f32 0.0, %v2447
        %2449 = vmatmul.f32.gmra.mxu0 %v2410
        %v2450 = vpop.f32.mrf.mxu0
        %v2451 = vadd.f32 0.0, %v2450
        %2452 = vmatmul.f32.gmra.mxu0 %v2413
        %v2453 = vpop.f32.mrf.mxu0
        %v2454 = vadd.f32 0.0, %v2453
        %2455 = vmatmul.f32.gmra.mxu0 %v2416
        %v2456 = vpop.f32.mrf.mxu0
        %v2457 = vadd.f32 0.0, %v2456
        %2458 = vmatmul.f32.gmra.mxu0 %v2419
        %v2459 = vpop.f32.mrf.mxu0
        %v2460 = vadd.f32 0.0, %v2459
        %2461 = vmatmul.f32.gmra.mxu0 %v2422
        %v2462 = vpop.f32.mrf.mxu0
        %v2463 = vadd.f32 0.0, %v2462
        %2464 = vmatmul.f32.gmra.mxu0 %v2425
        %v2465 = vpop.f32.mrf.mxu0
        %v2466 = vadd.f32 0.0, %v2465
        %2467 = vmatmul.f32.gmra.mxu0 %v2428
        %v2468 = vpop.f32.mrf.mxu0
        %v2469 = vadd.f32 0.0, %v2468
        %2470 = vdwg.mxu0
        %v2471 = vadd.f32 %v2385, %v2448
        %v2472 = vadd.f32 %v2386, %v2451
        %v2473 = vadd.f32 %v2387, %v2454
        %v2474 = vadd.f32 %v2388, %v2457
        %v2475 = vadd.f32 %v2389, %v2460
        %v2476 = vadd.f32 %v2390, %v2463
        %v2477 = vadd.f32 %v2391, %v2466
        %v2478 = vadd.f32 %v2392, %v2469
        %v2479 = vld [vmem:[%s1193 + $0x2] sm:$0xff]
        %v2480 = vld [vmem:[%s1193 + $0x12] sm:$0xff]
        %v2481 = vld [vmem:[%s1193 + $0x22] sm:$0xff]
        %v2482 = vld [vmem:[%s1193 + $0x32] sm:$0xff]
        %v2483 = vld [vmem:[%s1193 + $0x42] sm:$0xff]
        %v2484 = vld [vmem:[%s1193 + $0x52] sm:$0xff]
        %v2485 = vld [vmem:[%s1193 + $0x62] sm:$0xff]
        %v2486 = vld [vmem:[%s1193 + $0x72] sm:$0xff]
        %s2487 = scalar_lea.vmem [#allocation6], 736
        %v2488 = vld [vmem:[%s2487] sm:$0xff]
        %v2489 = vld [vmem:[%s2487 + $0x8] sm:$0xff]
        %v2490 = vld [vmem:[%s2487 + $0x10] sm:$0xff]
        %v2491 = vld [vmem:[%s2487 + $0x18] sm:$0xff]
        %v2493 = vsel %vm385, %v2479, 0
        %v2496 = vsel %vm385, %v2480, 0
        %v2499 = vsel %vm385, %v2481, 0
        %v2502 = vsel %vm385, %v2482, 0
        %v2505 = vsel %vm385, %v2483, 0
        %v2508 = vsel %vm385, %v2484, 0
        %v2511 = vsel %vm385, %v2485, 0
        %v2514 = vsel %vm385, %v2486, 0
        %2516 = vmatpush.msra.mxu0 0.0
        %2517 = vmatpush.msra.mxu0 0.0
        %2518 = vmatpush.msra.mxu0 0.0
        %2519 = vmatpush.msra.mxu0 0.0
        %2520 = vmatpush.msra.mxu0 0.0
        %2521 = vmatpush.msra.mxu0 0.0
        %2522 = vmatpush.msra.mxu0 0.0
        %2523 = vmatpush.msra.mxu0 0.0
        %2524 = vmatpush.msra.mxu0 0.0
        %2525 = vmatpush.msra.mxu0 0.0
        %2526 = vmatpush.msra.mxu0 0.0
        %2527 = vmatpush.msra.mxu0 0.0
        %2528 = vmatpush.msra.mxu0 %v2491
        %2529 = vmatpush.msra.mxu0 %v2490
        %2530 = vmatpush.msra.mxu0 %v2489
        %2531 = vmatpush.msra.mxu0 %v2488
        %2532 = vmatmul.f32.gmra.mxu0 %v2493
        %v2533 = vpop.f32.mrf.mxu0
        %v2534 = vadd.f32 0.0, %v2533
        %2535 = vmatmul.f32.gmra.mxu0 %v2496
        %v2536 = vpop.f32.mrf.mxu0
        %v2537 = vadd.f32 0.0, %v2536
        %2538 = vmatmul.f32.gmra.mxu0 %v2499
        %v2539 = vpop.f32.mrf.mxu0
        %v2540 = vadd.f32 0.0, %v2539
        %2541 = vmatmul.f32.gmra.mxu0 %v2502
        %v2542 = vpop.f32.mrf.mxu0
        %v2543 = vadd.f32 0.0, %v2542
        %2544 = vmatmul.f32.gmra.mxu0 %v2505
        %v2545 = vpop.f32.mrf.mxu0
        %v2546 = vadd.f32 0.0, %v2545
        %2547 = vmatmul.f32.gmra.mxu0 %v2508
        %v2548 = vpop.f32.mrf.mxu0
        %v2549 = vadd.f32 0.0, %v2548
        %2550 = vmatmul.f32.gmra.mxu0 %v2511
        %v2551 = vpop.f32.mrf.mxu0
        %v2552 = vadd.f32 0.0, %v2551
        %2553 = vmatmul.f32.gmra.mxu0 %v2514
        %v2554 = vpop.f32.mrf.mxu0
        %v2555 = vadd.f32 0.0, %v2554
        %2556 = vdwg.mxu0
        %v2557 = vadd.f32 %v2471, %v2534
        %v2558 = vadd.f32 %v2472, %v2537
        %v2559 = vadd.f32 %v2473, %v2540
        %v2560 = vadd.f32 %v2474, %v2543
        %v2561 = vadd.f32 %v2475, %v2546
        %v2562 = vadd.f32 %v2476, %v2549
        %v2563 = vadd.f32 %v2477, %v2552
        %v2564 = vadd.f32 %v2478, %v2555
        %v2565 = vld [vmem:[%s1702] sm:$0xff]
        %v2566 = vld [vmem:[%s1702 + $0x10] sm:$0xff]
        %v2567 = vld [vmem:[%s1702 + $0x20] sm:$0xff]
        %v2568 = vld [vmem:[%s1702 + $0x30] sm:$0xff]
        %v2569 = vld [vmem:[%s1702 + $0x40] sm:$0xff]
        %v2570 = vld [vmem:[%s1702 + $0x50] sm:$0xff]
        %v2571 = vld [vmem:[%s1702 + $0x60] sm:$0xff]
        %v2572 = vld [vmem:[%s1702 + $0x70] sm:$0xff]
        %s2573 = scalar_lea.vmem [#allocation6], 768
        %v2574 = vld [vmem:[%s2573] sm:$0xff]
        %v2575 = vld [vmem:[%s2573 + $0x8] sm:$0xff]
        %v2576 = vld [vmem:[%s2573 + $0x10] sm:$0xff]
        %v2577 = vld [vmem:[%s2573 + $0x18] sm:$0xff]
        %v2579 = vsel %vm385, %v2565, 0
        %v2582 = vsel %vm385, %v2566, 0
        %v2585 = vsel %vm385, %v2567, 0
        %v2588 = vsel %vm385, %v2568, 0
        %v2591 = vsel %vm385, %v2569, 0
        %v2594 = vsel %vm385, %v2570, 0
        %v2597 = vsel %vm385, %v2571, 0
        %v2600 = vsel %vm385, %v2572, 0
        %2602 = vmatpush.msra.mxu0 0.0
        %2603 = vmatpush.msra.mxu0 0.0
        %2604 = vmatpush.msra.mxu0 0.0
        %2605 = vmatpush.msra.mxu0 0.0
        %2606 = vmatpush.msra.mxu0 0.0
        %2607 = vmatpush.msra.mxu0 0.0
        %2608 = vmatpush.msra.mxu0 0.0
        %2609 = vmatpush.msra.mxu0 0.0
        %2610 = vmatpush.msra.mxu0 0.0
        %2611 = vmatpush.msra.mxu0 0.0
        %2612 = vmatpush.msra.mxu0 0.0
        %2613 = vmatpush.msra.mxu0 0.0
        %2614 = vmatpush.msra.mxu0 %v2577
        %2615 = vmatpush.msra.mxu0 %v2576
        %2616 = vmatpush.msra.mxu0 %v2575
        %2617 = vmatpush.msra.mxu0 %v2574
        %2618 = vmatmul.f32.gmra.mxu0 %v2579
        %v2619 = vpop.f32.mrf.mxu0
        %v2620 = vadd.f32 0.0, %v2619
        %2621 = vmatmul.f32.gmra.mxu0 %v2582
        %v2622 = vpop.f32.mrf.mxu0
        %v2623 = vadd.f32 0.0, %v2622
        %2624 = vmatmul.f32.gmra.mxu0 %v2585
        %v2625 = vpop.f32.mrf.mxu0
        %v2626 = vadd.f32 0.0, %v2625
        %2627 = vmatmul.f32.gmra.mxu0 %v2588
        %v2628 = vpop.f32.mrf.mxu0
        %v2629 = vadd.f32 0.0, %v2628
        %2630 = vmatmul.f32.gmra.mxu0 %v2591
        %v2631 = vpop.f32.mrf.mxu0
        %v2632 = vadd.f32 0.0, %v2631
        %2633 = vmatmul.f32.gmra.mxu0 %v2594
        %v2634 = vpop.f32.mrf.mxu0
        %v2635 = vadd.f32 0.0, %v2634
        %2636 = vmatmul.f32.gmra.mxu0 %v2597
        %v2637 = vpop.f32.mrf.mxu0
        %v2638 = vadd.f32 0.0, %v2637
        %2639 = vmatmul.f32.gmra.mxu0 %v2600
        %v2640 = vpop.f32.mrf.mxu0
        %v2641 = vadd.f32 0.0, %v2640
        %2642 = vdwg.mxu0
        %v2643 = vadd.f32 %v2557, %v2620
        %v2644 = vadd.f32 %v2558, %v2623
        %v2645 = vadd.f32 %v2559, %v2626
        %v2646 = vadd.f32 %v2560, %v2629
        %v2647 = vadd.f32 %v2561, %v2632
        %v2648 = vadd.f32 %v2562, %v2635
        %v2649 = vadd.f32 %v2563, %v2638
        %v2650 = vadd.f32 %v2564, %v2641
        %v2651 = vld [vmem:[%s1702 + $0x1] sm:$0xff]
        %v2652 = vld [vmem:[%s1702 + $0x11] sm:$0xff]
        %v2653 = vld [vmem:[%s1702 + $0x21] sm:$0xff]
        %v2654 = vld [vmem:[%s1702 + $0x31] sm:$0xff]
        %v2655 = vld [vmem:[%s1702 + $0x41] sm:$0xff]
        %v2656 = vld [vmem:[%s1702 + $0x51] sm:$0xff]
        %v2657 = vld [vmem:[%s1702 + $0x61] sm:$0xff]
        %v2658 = vld [vmem:[%s1702 + $0x71] sm:$0xff]
        %s2659 = scalar_lea.vmem [#allocation6], 800
        %v2660 = vld [vmem:[%s2659] sm:$0xff]
        %v2661 = vld [vmem:[%s2659 + $0x8] sm:$0xff]
        %v2662 = vld [vmem:[%s2659 + $0x10] sm:$0xff]
        %v2663 = vld [vmem:[%s2659 + $0x18] sm:$0xff]
        %v2665 = vsel %vm385, %v2651, 0
        %v2668 = vsel %vm385, %v2652, 0
        %v2671 = vsel %vm385, %v2653, 0
        %v2674 = vsel %vm385, %v2654, 0
        %v2677 = vsel %vm385, %v2655, 0
        %v2680 = vsel %vm385, %v2656, 0
        %v2683 = vsel %vm385, %v2657, 0
        %v2686 = vsel %vm385, %v2658, 0
        %2688 = vmatpush.msra.mxu0 0.0
        %2689 = vmatpush.msra.mxu0 0.0
        %2690 = vmatpush.msra.mxu0 0.0
        %2691 = vmatpush.msra.mxu0 0.0
        %2692 = vmatpush.msra.mxu0 0.0
        %2693 = vmatpush.msra.mxu0 0.0
        %2694 = vmatpush.msra.mxu0 0.0
        %2695 = vmatpush.msra.mxu0 0.0
        %2696 = vmatpush.msra.mxu0 0.0
        %2697 = vmatpush.msra.mxu0 0.0
        %2698 = vmatpush.msra.mxu0 0.0
        %2699 = vmatpush.msra.mxu0 0.0
        %2700 = vmatpush.msra.mxu0 %v2663
        %2701 = vmatpush.msra.mxu0 %v2662
        %2702 = vmatpush.msra.mxu0 %v2661
        %2703 = vmatpush.msra.mxu0 %v2660
        %2704 = vmatmul.f32.gmra.mxu0 %v2665
        %v2705 = vpop.f32.mrf.mxu0
        %v2706 = vadd.f32 0.0, %v2705
        %2707 = vmatmul.f32.gmra.mxu0 %v2668
        %v2708 = vpop.f32.mrf.mxu0
        %v2709 = vadd.f32 0.0, %v2708
        %2710 = vmatmul.f32.gmra.mxu0 %v2671
        %v2711 = vpop.f32.mrf.mxu0
        %v2712 = vadd.f32 0.0, %v2711
        %2713 = vmatmul.f32.gmra.mxu0 %v2674
        %v2714 = vpop.f32.mrf.mxu0
        %v2715 = vadd.f32 0.0, %v2714
        %2716 = vmatmul.f32.gmra.mxu0 %v2677
        %v2717 = vpop.f32.mrf.mxu0
        %v2718 = vadd.f32 0.0, %v2717
        %2719 = vmatmul.f32.gmra.mxu0 %v2680
        %v2720 = vpop.f32.mrf.mxu0
        %v2721 = vadd.f32 0.0, %v2720
        %2722 = vmatmul.f32.gmra.mxu0 %v2683
        %v2723 = vpop.f32.mrf.mxu0
        %v2724 = vadd.f32 0.0, %v2723
        %2725 = vmatmul.f32.gmra.mxu0 %v2686
        %v2726 = vpop.f32.mrf.mxu0
        %v2727 = vadd.f32 0.0, %v2726
        %2728 = vdwg.mxu0
        %v2729 = vadd.f32 %v2643, %v2706
        %v2730 = vadd.f32 %v2644, %v2709
        %v2731 = vadd.f32 %v2645, %v2712
        %v2732 = vadd.f32 %v2646, %v2715
        %v2733 = vadd.f32 %v2647, %v2718
        %v2734 = vadd.f32 %v2648, %v2721
        %v2735 = vadd.f32 %v2649, %v2724
        %v2736 = vadd.f32 %v2650, %v2727
        %v2737 = vld [vmem:[%s1702 + $0x2] sm:$0xff]
        %v2738 = vld [vmem:[%s1702 + $0x12] sm:$0xff]
        %v2739 = vld [vmem:[%s1702 + $0x22] sm:$0xff]
        %v2740 = vld [vmem:[%s1702 + $0x32] sm:$0xff]
        %v2741 = vld [vmem:[%s1702 + $0x42] sm:$0xff]
        %v2742 = vld [vmem:[%s1702 + $0x52] sm:$0xff]
        %v2743 = vld [vmem:[%s1702 + $0x62] sm:$0xff]
        %v2744 = vld [vmem:[%s1702 + $0x72] sm:$0xff]
        %s2745 = scalar_lea.vmem [#allocation6], 832
        %v2746 = vld [vmem:[%s2745] sm:$0xff]
        %v2747 = vld [vmem:[%s2745 + $0x8] sm:$0xff]
        %v2748 = vld [vmem:[%s2745 + $0x10] sm:$0xff]
        %v2749 = vld [vmem:[%s2745 + $0x18] sm:$0xff]
        %v2751 = vsel %vm385, %v2737, 0
        %v2754 = vsel %vm385, %v2738, 0
        %v2757 = vsel %vm385, %v2739, 0
        %v2760 = vsel %vm385, %v2740, 0
        %v2763 = vsel %vm385, %v2741, 0
        %v2766 = vsel %vm385, %v2742, 0
        %v2769 = vsel %vm385, %v2743, 0
        %v2772 = vsel %vm385, %v2744, 0
        %2774 = vmatpush.msra.mxu0 0.0
        %2775 = vmatpush.msra.mxu0 0.0
        %2776 = vmatpush.msra.mxu0 0.0
        %2777 = vmatpush.msra.mxu0 0.0
        %2778 = vmatpush.msra.mxu0 0.0
        %2779 = vmatpush.msra.mxu0 0.0
        %2780 = vmatpush.msra.mxu0 0.0
        %2781 = vmatpush.msra.mxu0 0.0
        %2782 = vmatpush.msra.mxu0 0.0
        %2783 = vmatpush.msra.mxu0 0.0
        %2784 = vmatpush.msra.mxu0 0.0
        %2785 = vmatpush.msra.mxu0 0.0
        %2786 = vmatpush.msra.mxu0 %v2749
        %2787 = vmatpush.msra.mxu0 %v2748
        %2788 = vmatpush.msra.mxu0 %v2747
        %2789 = vmatpush.msra.mxu0 %v2746
        %2790 = vmatmul.f32.gmra.mxu0 %v2751
        %v2791 = vpop.f32.mrf.mxu0
        %v2792 = vadd.f32 0.0, %v2791
        %2793 = vmatmul.f32.gmra.mxu0 %v2754
        %v2794 = vpop.f32.mrf.mxu0
        %v2795 = vadd.f32 0.0, %v2794
        %2796 = vmatmul.f32.gmra.mxu0 %v2757
        %v2797 = vpop.f32.mrf.mxu0
        %v2798 = vadd.f32 0.0, %v2797
        %2799 = vmatmul.f32.gmra.mxu0 %v2760
        %v2800 = vpop.f32.mrf.mxu0
        %v2801 = vadd.f32 0.0, %v2800
        %2802 = vmatmul.f32.gmra.mxu0 %v2763
        %v2803 = vpop.f32.mrf.mxu0
        %v2804 = vadd.f32 0.0, %v2803
        %2805 = vmatmul.f32.gmra.mxu0 %v2766
        %v2806 = vpop.f32.mrf.mxu0
        %v2807 = vadd.f32 0.0, %v2806
        %2808 = vmatmul.f32.gmra.mxu0 %v2769
        %v2809 = vpop.f32.mrf.mxu0
        %v2810 = vadd.f32 0.0, %v2809
        %2811 = vmatmul.f32.gmra.mxu0 %v2772
        %v2812 = vpop.f32.mrf.mxu0
        %v2813 = vadd.f32 0.0, %v2812
        %2814 = vdwg.mxu0
        %v2815 = vadd.f32 %v2729, %v2792
        %v2816 = vadd.f32 %v2730, %v2795
        %v2817 = vadd.f32 %v2731, %v2798
        %v2818 = vadd.f32 %v2732, %v2801
        %v2819 = vadd.f32 %v2733, %v2804
        %v2820 = vadd.f32 %v2734, %v2807
        %v2821 = vadd.f32 %v2735, %v2810
        %v2822 = vadd.f32 %v2736, %v2813
        %s2823 = scalar_lea.vmem [#allocation8], 64
        %v2824 = vld [vmem:[%s2823] sm:$0xff]
        %v2825 = vld [vmem:[%s2823 + $0x8] sm:$0xff]
        %v2826 = vld [vmem:[%s2823 + $0x10] sm:$0xff]
        %v2827 = vld [vmem:[%s2823 + $0x18] sm:$0xff]
        %2828 = vrot.lane.b32.xlu0 %v1010, 32
        %v2829 = vpop.permute.xlu0 %2828
        %v2830 = vsel %vm385, %v2829, 0
        %2832 = vmatpush.msra.mxu0 0.0
        %2833 = vmatpush.msra.mxu0 0.0
        %2834 = vmatpush.msra.mxu0 0.0
        %2835 = vmatpush.msra.mxu0 0.0
        %2836 = vmatpush.msra.mxu0 0.0
        %2837 = vmatpush.msra.mxu0 0.0
        %2838 = vmatpush.msra.mxu0 0.0
        %2839 = vmatpush.msra.mxu0 0.0
        %2840 = vmatpush.msra.mxu0 0.0
        %2841 = vmatpush.msra.mxu0 0.0
        %2842 = vmatpush.msra.mxu0 0.0
        %2843 = vmatpush.msra.mxu0 0.0
        %2844 = vmatpush.msra.mxu0 %v2827
        %2845 = vmatpush.msra.mxu0 %v2826
        %2846 = vmatpush.msra.mxu0 %v2825
        %2847 = vmatpush.msra.mxu0 %v2824
        %2848 = vmatmul.f32.gmra.mxu0 %v2830
        %v2849 = vpop.f32.mrf.mxu0
        %v2850 = vadd.f32 1e-08, %v2849
        %2851 = vdwg.mxu0
        %v2852 = vrsqrt.pop %v2850
        %v2853 = vmul.f32 %v2852, %v2850
        %v2854 = vmul.f32 %v2853, %v2852
        %v2855 = vmul.f32 0.5, %v2854
        %v2856 = vsub.f32 1.5, %v2855
        %v2857 = vmul.f32 %v2852, %v2856
        %vm2858 = vweird.f32 %v2850
        %vm2859 = vweird.f32 %v2852
        %vm2860 = vmor %vm2858, %vm2859
        %v2861 = vsel %vm2860, %v2852, %v2857
        %v2862 = vperm.slane %v2861, 0
        %v2863 = vmul.f32 %v2815, %v2862
        %v2864 = vmul.f32 %v2816, %v2862
        %v2865 = vmul.f32 %v2817, %v2862
        %v2866 = vmul.f32 %v2818, %v2862
        %v2867 = vmul.f32 %v2819, %v2862
        %v2868 = vmul.f32 %v2820, %v2862
        %v2869 = vmul.f32 %v2821, %v2862
        %v2870 = vmul.f32 %v2822, %v2862
        %s2871 = scalar_lea.vmem %s5, 2
        %v2872 = vld [vmem:[%s2871] sm:$0x1]
        %v2874 = vperm.slane %v2872, 0
        %v2876 = vadd.f32 %v2863, %v2874
        %v2877 = vadd.f32 %v2864, %v2874
        %v2878 = vadd.f32 %v2865, %v2874
        %v2879 = vadd.f32 %v2866, %v2874
        %v2880 = vadd.f32 %v2867, %v2874
        %v2881 = vadd.f32 %v2868, %v2874
        %v2882 = vadd.f32 %v2869, %v2874
        %v2883 = vadd.f32 %v2870, %v2874
        %v2884 = vmul.f32 %v2876, 0.2
        %v2885 = vmul.f32 %v2877, 0.2
        %v2886 = vmul.f32 %v2878, 0.2
        %v2887 = vmul.f32 %v2879, 0.2
        %v2888 = vmul.f32 %v2880, 0.2
        %v2889 = vmul.f32 %v2881, 0.2
        %v2890 = vmul.f32 %v2882, 0.2
        %v2891 = vmul.f32 %v2883, 0.2
        %v2892 = vmax.f32 %v2876, %v2884
        %v2893 = vmax.f32 %v2877, %v2885
        %v2894 = vmax.f32 %v2878, %v2886
        %v2895 = vmax.f32 %v2879, %v2887
        %v2896 = vmax.f32 %v2880, %v2888
        %v2897 = vmax.f32 %v2881, %v2889
        %v2898 = vmax.f32 %v2882, %v2890
        %v2899 = vmax.f32 %v2883, %v2891
        %v2900 = vmul.f32 %v2892, 1.4142135
        %v2901 = vmul.f32 %v2893, 1.4142135
        %v2902 = vmul.f32 %v2894, 1.4142135
        %v2903 = vmul.f32 %v2895, 1.4142135
        %v2904 = vmul.f32 %v2896, 1.4142135
        %v2905 = vmul.f32 %v2897, 1.4142135
        %v2906 = vmul.f32 %v2898, 1.4142135
        %v2907 = vmul.f32 %v2899, 1.4142135
        %v2908 = vperm.slane %v538, 0
        %v2909 = vmul.f32 %v2900, %v2908
        %v2910 = vmul.f32 %v2901, %v2908
        %v2911 = vmul.f32 %v2902, %v2908
        %v2912 = vmul.f32 %v2903, %v2908
        %v2913 = vmul.f32 %v2904, %v2908
        %v2914 = vmul.f32 %v2905, %v2908
        %v2915 = vmul.f32 %v2906, %v2908
        %v2916 = vmul.f32 %v2907, %v2908
        %s2917 = scalar_lea.vmem %s7, 4
        %v2918 = vld [vmem:[%s2917] sm:$0x7]
        %s2919 = scalar_lea.vmem %s8, 4
        %v2920 = vld [vmem:[%s2919] sm:$0x7]
        %2922 = vset.pattern.permute.xlu0 0
        %2923 = vperm.xlu0 %2922, %v2920
        %v2924 = vpop.permute.xlu0 %2923
        %v2927 = vsel %vm385, %v2918, 0
        %v2930 = vsel %vm385, %v2909, 0
        %v2933 = vsel %vm385, %v2910, 0
        %v2936 = vsel %vm385, %v2911, 0
        %v2939 = vsel %vm385, %v2912, 0
        %v2942 = vsel %vm385, %v2913, 0
        %v2945 = vsel %vm385, %v2914, 0
        %v2948 = vsel %vm385, %v2915, 0
        %v2951 = vsel %vm385, %v2916, 0
        %2953 = vmatpush.xpose.msra.mxu0 0.0
        %2954 = vmatpush.xpose.msra.mxu0 0.0
        %2955 = vmatpush.xpose.msra.mxu0 0.0
        %2956 = vmatpush.xpose.msra.mxu0 0.0
        %2957 = vmatpush.xpose.msra.mxu0 0.0
        %2958 = vmatpush.xpose.msra.mxu0 0.0
        %2959 = vmatpush.xpose.msra.mxu0 0.0
        %2960 = vmatpush.xpose.msra.mxu0 0.0
        %2961 = vmatpush.xpose.msra.mxu0 %v2951
        %2962 = vmatpush.xpose.msra.mxu0 %v2948
        %2963 = vmatpush.xpose.msra.mxu0 %v2945
        %2964 = vmatpush.xpose.msra.mxu0 %v2942
        %2965 = vmatpush.xpose.msra.mxu0 %v2939
        %2966 = vmatpush.xpose.msra.mxu0 %v2936
        %2967 = vmatpush.xpose.msra.mxu0 %v2933
        %2968 = vmatpush.xpose.msra.mxu0 %v2930
        %2969 = vmatmul.f32.gmra.mxu0 %v2927
        %v2970 = vpop.f32.mrf.mxu0
        %v2971 = vadd.f32 %v2924, %v2970
        %2972 = vdwg.mxu0
        %v2973 = vadd.f32 %v1184, %v2971
        %vm2974 = vcmask 518144
        %2975 = vst.msk [vmem:[%s377] sm:$0x7] %vm2974, %v2973
        %p2976 = scmp.lt.s32.totalorder %s22, 1
        %s2977 = scalar_select %p2976, %s22, 1
        %s2978 = smul.addr %s2977, 4
        %s2979 = scalar_lea.vmem %s9, %s2978
        // Predicated region
        $region69: #{rewrite_model_forward.1} parent=55 // pred_check
          %p2980 = pneg %p234
        $region70: #{rewrite_model_forward.1} parent=55 // pred_check_branch
          %2982 = sbr.rel (%p2980) target = $region72
        $region71: #{rewrite_model_forward.1} parent=55 // pred_region
          _
        $region72: #{rewrite_model_forward.1} parent=55 // pred_fallthru
          _
      $region56: #{rewrite_model_forward.1} parent=5 // pred_fallthru
        _
      %p2983 = scmp.le.s32.totalorder 2, %s17
      // Predicated region
      $region73: #{rewrite_model_forward.1} parent=5 // pred_check
        %p2984 = pneg %p2983
      $region74: #{rewrite_model_forward.1} parent=5 // pred_check_branch
        %2986 = sbr.rel (%p2984) target = $region76
      $region75: #{rewrite_model_forward.1} parent=5 // pred_region
        %s2987 = ssub.s32 %s17, 2
        // Predicated region
        $region77: #{rewrite_model_forward.1} parent=75 // pred_check
          %p2988 = pneg %p240
        $region78: #{rewrite_model_forward.1} parent=75 // pred_check_branch
          %2990 = sbr.rel (%p2988) target = $region80
        $region79: #{rewrite_model_forward.1} parent=75 // pred_region
          %p2991 = scmp.lt.s32.totalorder %s23, 1
          %s2992 = scalar_select %p2991, %s23, 1
          %s2993 = smul.addr %s2992, 4
          %s2994 = scalar_lea.vmem %s9, %s2993
        $region80: #{rewrite_model_forward.1} parent=75 // pred_fallthru
          _
      $region76: #{rewrite_model_forward.1} parent=5 // pred_fallthru
        _
    $region6: #{rewrite_model_forward.1} parent=1 // loop_footer
      %s21 = sadd.s32 1, %s17
    $region7: #{rewrite_model_forward.1} parent=1 // loop_footer_branch
      %16 = sbr.rel target = $region3
    $region8: #{rewrite_model_forward.1} parent=1 // loop_exit
      _
    %2995 = vsyncpa [#allocation5], 1
    %s2996 = scalar_lea.sflag [#allocation5], 1
    %2997 = vsyncpa %s2996, 1
    %2998 = vsyncpa [#allocation7], 1

</llo_original>
